<compile_context>
chip_gen: v6e
topology: v6e:2x2x1
jax: 0.10.0
libtpu: 0.0.40
codegen_flags: <defaults>
</compile_context>

<pallas_src>
import numpy as np
import jax
import jax.numpy as jnp
from jax import lax
from jax.experimental import pallas as pl
from jax.experimental.pallas import tpu as pltpu


# -----------------------------------------------------------------------------
# Fused kernel: GRU over T steps + actor/critic heads, single invocation.
# -----------------------------------------------------------------------------
def make_actor_critic_kernel(T, B_pad, H, unrolled):
    def kernel(x_ref, h0_ref, wih_ref, whh_r_ref, whh_z_ref, whh_n_ref,
               bgi_ref, bhn_ref, w1_ref, b1_ref, w2_ref, b2_ref, w3_ref, b3_ref,
               head_ref, hlast_ref, gi_scr):
        # Prologue: hoisted input projection for every timestep (ONE (T*B_pad, D)@(D, 3H)
        # matmul), materialized into VMEM scratch to bound vreg live ranges.
        gi_scr[...] = (jnp.dot(x_ref[...], wih_ref[...],
                               preferred_element_type=jnp.float32) + bgi_ref[...])

        # Loop-invariant per-gate recurrent weights (128 x 128 each) and n-gate bias.
        whh_r = whh_r_ref[...]
        whh_z = whh_z_ref[...]
        whh_n = whh_n_ref[...]
        bhn = bhn_ref[...]

        def step(row0, h):
            gi = gi_scr[pl.ds(row0, B_pad), :]                      # (B_pad, 3H), sublane-aligned
            gh_r = jnp.dot(h, whh_r, preferred_element_type=jnp.float32)
            gh_z = jnp.dot(h, whh_z, preferred_element_type=jnp.float32)
            gh_n = jnp.dot(h, whh_n, preferred_element_type=jnp.float32) + bhn
            r = jax.nn.sigmoid(gi[:, :H] + gh_r)
            z = jax.nn.sigmoid(gi[:, H:2 * H] + gh_z)
            n = jnp.tanh(gi[:, 2 * H:] + r * gh_n)
            return n + z * (h - n)                                  # == (1-z)*n + z*h

        h = h0_ref[...]                                             # (B_pad, H)
        if unrolled:
            for t in range(T):
                h = step(t * B_pad, h)
        else:
            def body(t, carry):
                return step(pl.multiple_of(t * B_pad, 8), carry)
            h = lax.fori_loop(0, T, body, h)

        hlast_ref[...] = h

        # Fused actor/critic heads: lane-dense 128-wide matmuls, packed output slab.
        hc = jnp.maximum(jnp.dot(h, w1_ref[...], preferred_element_type=jnp.float32)
                         + b1_ref[...], 0.0)                        # (B_pad, 2*hd)
        hc = jnp.maximum(jnp.dot(hc, w2_ref[...], preferred_element_type=jnp.float32)
                         + b2_ref[...], 0.0)                        # block-diagonal W2
        head_ref[...] = (jnp.dot(hc, w3_ref[...], preferred_element_type=jnp.float32)
                         + b3_ref[...])                             # (B_pad, 128): [mean|value|pad]

    return kernel


# -----------------------------------------------------------------------------
# Parameter construction (deterministic, PyTorch-style uniform(-1/sqrt(fan), +))
# -----------------------------------------------------------------------------
def init_params(key, state_dim, action_dim, hidden_dim=64, gru_hidden_dim=128):
    ks = list(jax.random.split(key, 20))

    def uni(k, shape, fan_in):
        bound = 1.0 / np.sqrt(fan_in)
        return jax.random.uniform(k, shape, jnp.float32, -bound, bound)

    H, D, hd, A = gru_hidden_dim, state_dim, hidden_dim, action_dim
    p = {}
    # GRU weights stored transposed: (in, 3H). Gate order r, z, n.
    p["w_ih"] = uni(ks[0], (D, 3 * H), H)
    p["w_hh"] = uni(ks[1], (H, 3 * H), H)
    p["b_ih"] = uni(ks[2], (1, 3 * H), H)
    p["b_hh"] = uni(ks[3], (1, 3 * H), H)
    # actor_mean
    p["aw1"] = uni(ks[4], (H, hd), H);    p["ab1"] = uni(ks[5], (1, hd), H)
    p["aw2"] = uni(ks[6], (hd, hd), hd);  p["ab2"] = uni(ks[7], (1, hd), hd)
    p["aw3"] = uni(ks[8], (hd, A), hd);   p["ab3"] = uni(ks[9], (1, A), hd)
    # critic
    p["cw1"] = uni(ks[10], (H, hd), H);   p["cb1"] = uni(ks[11], (1, hd), H)
    p["cw2"] = uni(ks[12], (hd, hd), hd); p["cb2"] = uni(ks[13], (1, hd), hd)
    p["cw3"] = uni(ks[14], (hd, 1), hd);  p["cb3"] = uni(ks[15], (1, 1), hd)
    # actor_logstd = zeros(action_dim)
    p["logstd"] = jnp.zeros((1, A), jnp.float32)
    return p


def fuse_params(p):
    """Pack weights into kernel-friendly fused matrices (done once, off the hot path)."""
    H = p["w_hh"].shape[0]
    hd = p["aw1"].shape[1]
    A = p["aw3"].shape[1]
    assert H % 128 == 0, "gru_hidden_dim must be a multiple of 128 for lane-aligned gates"
    head_w = max(128, ((A + 1 + 127) // 128) * 128)   # packed output width (mean|value|pad)

    # GRU: per-gate recurrent weights; fold the r/z halves of b_hh into the hoisted
    # input-projection bias (associative); keep n-gate b_hh separate (applied inside
    # r * (W_hn h + b_hn), matching PyTorch).
    whh_r = p["w_hh"][:, :H]
    whh_z = p["w_hh"][:, H:2 * H]
    whh_n = p["w_hh"][:, 2 * H:]
    b_gi = p["b_ih"].at[:, :2 * H].add(p["b_hh"][:, :2 * H])
    b_hn = p["b_hh"][:, 2 * H:]

    # Head layer 1: [actor | critic] side-by-side -> (H, 2*hd).
    w1 = jnp.concatenate([p["aw1"], p["cw1"]], axis=1)
    b1 = jnp.concatenate([p["ab1"], p["cb1"]], axis=1)
    # Head layer 2: block-diagonal so actor/critic paths stay independent.
    w2 = jnp.zeros((2 * hd, 2 * hd), jnp.float32)
    w2 = w2.at[:hd, :hd].set(p["aw2"]).at[hd:, hd:].set(p["cw2"])
    b2 = jnp.concatenate([p["ab2"], p["cb2"]], axis=1)
    # Head layer 3: packed (2*hd, head_w): cols [:A] = actor mean, col [A] = value.
    w3 = jnp.zeros((2 * hd, head_w), jnp.float32)
    w3 = w3.at[:hd, :A].set(p["aw3"]).at[hd:, A:A + 1].set(p["cw3"])
    b3 = jnp.zeros((1, head_w), jnp.float32)
    b3 = b3.at[:, :A].set(p["ab3"]).at[:, A:A + 1].set(p["cb3"])

    std = jnp.maximum(jnp.exp(p["logstd"][0]), 0.001)   # parameter-only -> precompute

    return {"w_ih": p["w_ih"], "whh_r": whh_r, "whh_z": whh_z, "whh_n": whh_n,
            "b_gi": b_gi, "b_hn": b_hn,
            "w1": w1, "b1": b1, "w2": w2, "b2": b2, "w3": w3, "b3": b3, "std": std}


# -----------------------------------------------------------------------------
# Wrapper: equivalent of ActorCritic.forward(state, hidden)
# -----------------------------------------------------------------------------
@jax.jit
def actor_critic_forward(fp, state, hidden):
    if state.ndim == 2:                      # state.unsqueeze(1)
        state = state[:, None, :]
    B, T, D = state.shape
    H = fp["whh_r"].shape[0]
    A = fp["std"].shape[0]
    head_w = fp["w3"].shape[1]
    assert H % 128 == 0
    assert A + 1 <= head_w

    B_pad = ((B + 7) // 8) * 8               # f32 sublane alignment (8 rows/vreg)

    # Time-major, batch padded to whole sublane groups; flattened so the input
    # projection is one matmul.  (Transpose is noise at these sizes; keep rollout
    # buffers time-major upstream if T*B ever gets large.)
    x_tm = jnp.transpose(state, (1, 0, 2))                    # (T, B, D)
    x_tm = jnp.pad(x_tm, ((0, 0), (0, B_pad - B), (0, 0)))
    x2d = x_tm.reshape(T * B_pad, D)

    h0 = jnp.pad(hidden[0], ((0, B_pad - B), (0, 0)))         # (B_pad, H)

    vmem = pltpu.MemorySpace.VMEM
    kernel = make_actor_critic_kernel(T, B_pad, H, unrolled=(T <= 16))

    head, h_last = pl.pallas_call(
        kernel,
        out_shape=(
            jax.ShapeDtypeStruct((B_pad, head_w), jnp.float32),   # packed [mean | value | pad]
            jax.ShapeDtypeStruct((B_pad, H), jnp.float32),        # final hidden state
        ),
        in_specs=[pl.BlockSpec(memory_space=vmem)] * 14,
        out_specs=(pl.BlockSpec(memory_space=vmem),
                   pl.BlockSpec(memory_space=vmem)),
        scratch_shapes=[pltpu.VMEM((T * B_pad, 3 * H), jnp.float32)],
        input_output_aliases={1: 1},         # h0 buffer reused for the final hidden state
    )(x2d, h0,
      fp["w_ih"], fp["whh_r"], fp["whh_z"], fp["whh_n"],
      fp["b_gi"], fp["b_hn"],
      fp["w1"], fp["b1"], fp["w2"], fp["b2"], fp["w3"], fp["b3"])

    action_mean = head[:B, :A]
    value = head[:B, A:A + 1]
    hidden_out = h_last[:B][None]            # (1, B, H), single-layer GRU
    return action_mean, fp["std"], value, hidden_out


# -----------------------------------------------------------------------------
# Pure-JAX reference (for correctness check), uses the raw (unfused) params.
# -----------------------------------------------------------------------------
def reference_forward(params, state, hidden):
    if state.ndim == 2:
        state = state[:, None, :]
    H = params["w_hh"].shape[0]
    h = hidden[0]
    for t in range(state.shape[1]):
        x_t = state[:, t, :]
        gi = x_t @ params["w_ih"] + params["b_ih"]
        gh = h @ params["w_hh"] + params["b_hh"]
        r = jax.nn.sigmoid(gi[:, :H] + gh[:, :H])
        z = jax.nn.sigmoid(gi[:, H:2 * H] + gh[:, H:2 * H])
        n = jnp.tanh(gi[:, 2 * H:] + r * gh[:, 2 * H:])
        h = (1.0 - z) * n + z * h
    a = jnp.maximum(h @ params["aw1"] + params["ab1"], 0.0)
    a = jnp.maximum(a @ params["aw2"] + params["ab2"], 0.0)
    mean = a @ params["aw3"] + params["ab3"]
    c = jnp.maximum(h @ params["cw1"] + params["cb1"], 0.0)
    c = jnp.maximum(c @ params["cw2"] + params["cb2"], 0.0)
    value = c @ params["cw3"] + params["cb3"]
    std = jnp.maximum(jnp.exp(params["logstd"][0]), 0.001)
    return mean, std, value, h[None]


if __name__ == "__main__":
    B, T = 2, 8
    state_dim, action_dim = 8, 4
    hidden_dim, gru_hidden_dim = 64, 128

    key = jax.random.PRNGKey(0)
    k_p, k_s = jax.random.split(key)
    params = init_params(k_p, state_dim, action_dim, hidden_dim, gru_hidden_dim)
    fused = fuse_params(params)

    state = jax.random.normal(k_s, (B, T, state_dim), jnp.float32)
    hidden = jnp.zeros((1, B, gru_hidden_dim), jnp.float32)   # init_hidden(B)

    mean, std, value, hid = actor_critic_forward(fused, state, hidden)
    jax.block_until_ready((mean, std, value, hid))

    r_mean, r_std, r_value, r_hid = reference_forward(params, state, hidden)
    np.testing.assert_allclose(np.asarray(mean), np.asarray(r_mean), rtol=1e-5, atol=1e-5)
    np.testing.assert_allclose(np.asarray(std), np.asarray(r_std), rtol=1e-5, atol=1e-5)
    np.testing.assert_allclose(np.asarray(value), np.asarray(r_value), rtol=1e-5, atol=1e-5)
    np.testing.assert_allclose(np.asarray(hid), np.asarray(r_hid), rtol=1e-5, atol=1e-5)

    print("KERNEL_OK")
</pallas_src>

<mosaic_0001>
module attributes {stable_mosaic.version = 11 : i64} {
  func.func @kernel(%arg0: memref<64x8xf32, #tpu.memory_space<vmem>>, %arg1: memref<8x128xf32, #tpu.memory_space<vmem>>, %arg2: memref<8x384xf32, #tpu.memory_space<vmem>>, %arg3: memref<128x128xf32, #tpu.memory_space<vmem>>, %arg4: memref<128x128xf32, #tpu.memory_space<vmem>>, %arg5: memref<128x128xf32, #tpu.memory_space<vmem>>, %arg6: memref<1x384xf32, #tpu.memory_space<vmem>>, %arg7: memref<1x128xf32, #tpu.memory_space<vmem>>, %arg8: memref<128x128xf32, #tpu.memory_space<vmem>>, %arg9: memref<1x128xf32, #tpu.memory_space<vmem>>, %arg10: memref<128x128xf32, #tpu.memory_space<vmem>>, %arg11: memref<1x128xf32, #tpu.memory_space<vmem>>, %arg12: memref<128x128xf32, #tpu.memory_space<vmem>>, %arg13: memref<1x128xf32, #tpu.memory_space<vmem>>, %arg14: memref<8x128xf32, #tpu.memory_space<vmem>>, %arg15: memref<8x128xf32, #tpu.memory_space<vmem>>, %arg16: memref<64x384xf32, #tpu.memory_space<vmem>>) attributes {dimension_semantics = [], scalar_prefetch = 0 : i64, scratch_operands = 1 : i64, tpu.core_type = #tpu.core_type<tc>} {
    %c0 = arith.constant 0 : index
    %c0_0 = arith.constant 0 : index
    %0 = vector.load %arg0[%c0, %c0_0] : memref<64x8xf32, #tpu.memory_space<vmem>>, vector<64x8xf32>
    %c0_1 = arith.constant 0 : index
    %c0_2 = arith.constant 0 : index
    %1 = vector.load %arg2[%c0_1, %c0_2] : memref<8x384xf32, #tpu.memory_space<vmem>>, vector<8x384xf32>
    %cst = arith.constant dense<0.000000e+00> : vector<64x384xf32>
    %2 = tpu.matmul %0, %1, %cst {dimension_numbers = #tpu.dot_dimension_numbers<[1], [0], [0], [1], [0, 0, 1, 1], [], []>} : vector<64x8xf32>, vector<8x384xf32>, vector<64x384xf32> -> vector<64x384xf32>
    %c0_3 = arith.constant 0 : index
    %c0_4 = arith.constant 0 : index
    %3 = vector.load %arg6[%c0_3, %c0_4] : memref<1x384xf32, #tpu.memory_space<vmem>>, vector<1x384xf32>
    %4 = vector.broadcast %3 : vector<1x384xf32> to vector<64x384xf32>
    %5 = arith.addf %2, %4 : vector<64x384xf32>
    %c0_5 = arith.constant 0 : index
    %c0_6 = arith.constant 0 : index
    %6 = vector.load %arg16[%c0_5, %c0_6] : memref<64x384xf32, #tpu.memory_space<vmem>>, vector<64x384xf32>
    tpu.vector_store %arg16[%c0_5, %c0_6], %5 {strides = array<i32>} : memref<64x384xf32, #tpu.memory_space<vmem>>, vector<64x384xf32>,
    %c0_7 = arith.constant 0 : index
    %c0_8 = arith.constant 0 : index
    %7 = vector.load %arg3[%c0_7, %c0_8] : memref<128x128xf32, #tpu.memory_space<vmem>>, vector<128x128xf32>
    %c0_9 = arith.constant 0 : index
    %c0_10 = arith.constant 0 : index
    %8 = vector.load %arg4[%c0_9, %c0_10] : memref<128x128xf32, #tpu.memory_space<vmem>>, vector<128x128xf32>
    %c0_11 = arith.constant 0 : index
    %c0_12 = arith.constant 0 : index
    %9 = vector.load %arg5[%c0_11, %c0_12] : memref<128x128xf32, #tpu.memory_space<vmem>>, vector<128x128xf32>
    %c0_13 = arith.constant 0 : index
    %c0_14 = arith.constant 0 : index
    %10 = vector.load %arg7[%c0_13, %c0_14] : memref<1x128xf32, #tpu.memory_space<vmem>>, vector<1x128xf32>
    %c0_15 = arith.constant 0 : index
    %c0_16 = arith.constant 0 : index
    %11 = vector.load %arg1[%c0_15, %c0_16] : memref<8x128xf32, #tpu.memory_space<vmem>>, vector<8x128xf32>
    %c0_17 = arith.constant 0 : index
    %c0_18 = arith.constant 0 : index
    %12 = vector.load %arg16[%c0_17, %c0_18] : memref<64x384xf32, #tpu.memory_space<vmem>>, vector<8x384xf32>
    %cst_19 = arith.constant dense<0.000000e+00> : vector<8x128xf32>
    %13 = tpu.matmul %11, %7, %cst_19 {dimension_numbers = #tpu.dot_dimension_numbers<[1], [0], [0], [1], [0, 0, 1, 1], [], []>} : vector<8x128xf32>, vector<128x128xf32>, vector<8x128xf32> -> vector<8x128xf32>
    %cst_20 = arith.constant dense<0.000000e+00> : vector<8x128xf32>
    %14 = tpu.matmul %11, %8, %cst_20 {dimension_numbers = #tpu.dot_dimension_numbers<[1], [0], [0], [1], [0, 0, 1, 1], [], []>} : vector<8x128xf32>, vector<128x128xf32>, vector<8x128xf32> -> vector<8x128xf32>
    %cst_21 = arith.constant dense<0.000000e+00> : vector<8x128xf32>
    %15 = tpu.matmul %11, %9, %cst_21 {dimension_numbers = #tpu.dot_dimension_numbers<[1], [0], [0], [1], [0, 0, 1, 1], [], []>} : vector<8x128xf32>, vector<128x128xf32>, vector<8x128xf32> -> vector<8x128xf32>
    %16 = vector.broadcast %10 : vector<1x128xf32> to vector<8x128xf32>
    %17 = arith.addf %15, %16 : vector<8x128xf32>
    %18 = vector.extract_strided_slice %12 {offsets = [0, 0], sizes = [8, 128], strides = [1, 1]} : vector<8x384xf32> to vector<8x128xf32>
    %19 = arith.addf %18, %13 : vector<8x128xf32>
    %20 = arith.negf %19 : vector<8x128xf32>
    %21 = math.exp %20 : vector<8x128xf32>
    %cst_22 = arith.constant 1.000000e+00 : f32
    %22 = vector.broadcast %cst_22 : f32 to vector<8x128xf32>
    %23 = arith.addf %22, %21 : vector<8x128xf32>
    %24 = arith.divf %22, %23 : vector<8x128xf32>
    %25 = vector.extract_strided_slice %12 {offsets = [0, 128], sizes = [8, 128], strides = [1, 1]} : vector<8x384xf32> to vector<8x128xf32>
    %26 = arith.addf %25, %14 : vector<8x128xf32>
    %27 = arith.negf %26 : vector<8x128xf32>
    %28 = math.exp %27 : vector<8x128xf32>
    %cst_23 = arith.constant 1.000000e+00 : f32
    %29 = vector.broadcast %cst_23 : f32 to vector<8x128xf32>
    %30 = arith.addf %29, %28 : vector<8x128xf32>
    %31 = arith.divf %29, %30 : vector<8x128xf32>
    %32 = vector.extract_strided_slice %12 {offsets = [0, 256], sizes = [8, 128], strides = [1, 1]} : vector<8x384xf32> to vector<8x128xf32>
    %33 = arith.mulf %24, %17 : vector<8x128xf32>
    %34 = arith.addf %32, %33 : vector<8x128xf32>
    %35 = math.tanh %34 : vector<8x128xf32>
    %36 = arith.subf %11, %35 : vector<8x128xf32>
    %37 = arith.mulf %31, %36 : vector<8x128xf32>
    %38 = arith.addf %35, %37 : vector<8x128xf32>
    %c8 = arith.constant 8 : index
    %c0_24 = arith.constant 0 : index
    %39 = vector.load %arg16[%c8, %c0_24] : memref<64x384xf32, #tpu.memory_space<vmem>>, vector<8x384xf32>
    %cst_25 = arith.constant dense<0.000000e+00> : vector<8x128xf32>
    %40 = tpu.matmul %38, %7, %cst_25 {dimension_numbers = #tpu.dot_dimension_numbers<[1], [0], [0], [1], [0, 0, 1, 1], [], []>} : vector<8x128xf32>, vector<128x128xf32>, vector<8x128xf32> -> vector<8x128xf32>
    %cst_26 = arith.constant dense<0.000000e+00> : vector<8x128xf32>
    %41 = tpu.matmul %38, %8, %cst_26 {dimension_numbers = #tpu.dot_dimension_numbers<[1], [0], [0], [1], [0, 0, 1, 1], [], []>} : vector<8x128xf32>, vector<128x128xf32>, vector<8x128xf32> -> vector<8x128xf32>
    %cst_27 = arith.constant dense<0.000000e+00> : vector<8x128xf32>
    %42 = tpu.matmul %38, %9, %cst_27 {dimension_numbers = #tpu.dot_dimension_numbers<[1], [0], [0], [1], [0, 0, 1, 1], [], []>} : vector<8x128xf32>, vector<128x128xf32>, vector<8x128xf32> -> vector<8x128xf32>
    %43 = vector.broadcast %10 : vector<1x128xf32> to vector<8x128xf32>
    %44 = arith.addf %42, %43 : vector<8x128xf32>
    %45 = vector.extract_strided_slice %39 {offsets = [0, 0], sizes = [8, 128], strides = [1, 1]} : vector<8x384xf32> to vector<8x128xf32>
    %46 = arith.addf %45, %40 : vector<8x128xf32>
    %47 = arith.negf %46 : vector<8x128xf32>
    %48 = math.exp %47 : vector<8x128xf32>
    %cst_28 = arith.constant 1.000000e+00 : f32
    %49 = vector.broadcast %cst_28 : f32 to vector<8x128xf32>
    %50 = arith.addf %49, %48 : vector<8x128xf32>
    %51 = arith.divf %49, %50 : vector<8x128xf32>
    %52 = vector.extract_strided_slice %39 {offsets = [0, 128], sizes = [8, 128], strides = [1, 1]} : vector<8x384xf32> to vector<8x128xf32>
    %53 = arith.addf %52, %41 : vector<8x128xf32>
    %54 = arith.negf %53 : vector<8x128xf32>
    %55 = math.exp %54 : vector<8x128xf32>
    %cst_29 = arith.constant 1.000000e+00 : f32
    %56 = vector.broadcast %cst_29 : f32 to vector<8x128xf32>
    %57 = arith.addf %56, %55 : vector<8x128xf32>
    %58 = arith.divf %56, %57 : vector<8x128xf32>
    %59 = vector.extract_strided_slice %39 {offsets = [0, 256], sizes = [8, 128], strides = [1, 1]} : vector<8x384xf32> to vector<8x128xf32>
    %60 = arith.mulf %51, %44 : vector<8x128xf32>
    %61 = arith.addf %59, %60 : vector<8x128xf32>
    %62 = math.tanh %61 : vector<8x128xf32>
    %63 = arith.subf %38, %62 : vector<8x128xf32>
    %64 = arith.mulf %58, %63 : vector<8x128xf32>
    %65 = arith.addf %62, %64 : vector<8x128xf32>
    %c16 = arith.constant 16 : index
    %c0_30 = arith.constant 0 : index
    %66 = vector.load %arg16[%c16, %c0_30] : memref<64x384xf32, #tpu.memory_space<vmem>>, vector<8x384xf32>
    %cst_31 = arith.constant dense<0.000000e+00> : vector<8x128xf32>
    %67 = tpu.matmul %65, %7, %cst_31 {dimension_numbers = #tpu.dot_dimension_numbers<[1], [0], [0], [1], [0, 0, 1, 1], [], []>} : vector<8x128xf32>, vector<128x128xf32>, vector<8x128xf32> -> vector<8x128xf32>
    %cst_32 = arith.constant dense<0.000000e+00> : vector<8x128xf32>
    %68 = tpu.matmul %65, %8, %cst_32 {dimension_numbers = #tpu.dot_dimension_numbers<[1], [0], [0], [1], [0, 0, 1, 1], [], []>} : vector<8x128xf32>, vector<128x128xf32>, vector<8x128xf32> -> vector<8x128xf32>
    %cst_33 = arith.constant dense<0.000000e+00> : vector<8x128xf32>
    %69 = tpu.matmul %65, %9, %cst_33 {dimension_numbers = #tpu.dot_dimension_numbers<[1], [0], [0], [1], [0, 0, 1, 1], [], []>} : vector<8x128xf32>, vector<128x128xf32>, vector<8x128xf32> -> vector<8x128xf32>
    %70 = vector.broadcast %10 : vector<1x128xf32> to vector<8x128xf32>
    %71 = arith.addf %69, %70 : vector<8x128xf32>
    %72 = vector.extract_strided_slice %66 {offsets = [0, 0], sizes = [8, 128], strides = [1, 1]} : vector<8x384xf32> to vector<8x128xf32>
    %73 = arith.addf %72, %67 : vector<8x128xf32>
    %74 = arith.negf %73 : vector<8x128xf32>
    %75 = math.exp %74 : vector<8x128xf32>
    %cst_34 = arith.constant 1.000000e+00 : f32
    %76 = vector.broadcast %cst_34 : f32 to vector<8x128xf32>
    %77 = arith.addf %76, %75 : vector<8x128xf32>
    %78 = arith.divf %76, %77 : vector<8x128xf32>
    %79 = vector.extract_strided_slice %66 {offsets = [0, 128], sizes = [8, 128], strides = [1, 1]} : vector<8x384xf32> to vector<8x128xf32>
    %80 = arith.addf %79, %68 : vector<8x128xf32>
    %81 = arith.negf %80 : vector<8x128xf32>
    %82 = math.exp %81 : vector<8x128xf32>
    %cst_35 = arith.constant 1.000000e+00 : f32
    %83 = vector.broadcast %cst_35 : f32 to vector<8x128xf32>
    %84 = arith.addf %83, %82 : vector<8x128xf32>
    %85 = arith.divf %83, %84 : vector<8x128xf32>
    %86 = vector.extract_strided_slice %66 {offsets = [0, 256], sizes = [8, 128], strides = [1, 1]} : vector<8x384xf32> to vector<8x128xf32>
    %87 = arith.mulf %78, %71 : vector<8x128xf32>
    %88 = arith.addf %86, %87 : vector<8x128xf32>
    %89 = math.tanh %88 : vector<8x128xf32>
    %90 = arith.subf %65, %89 : vector<8x128xf32>
    %91 = arith.mulf %85, %90 : vector<8x128xf32>
    %92 = arith.addf %89, %91 : vector<8x128xf32>
    %c24 = arith.constant 24 : index
    %c0_36 = arith.constant 0 : index
    %93 = vector.load %arg16[%c24, %c0_36] : memref<64x384xf32, #tpu.memory_space<vmem>>, vector<8x384xf32>
    %cst_37 = arith.constant dense<0.000000e+00> : vector<8x128xf32>
    %94 = tpu.matmul %92, %7, %cst_37 {dimension_numbers = #tpu.dot_dimension_numbers<[1], [0], [0], [1], [0, 0, 1, 1], [], []>} : vector<8x128xf32>, vector<128x128xf32>, vector<8x128xf32> -> vector<8x128xf32>
    %cst_38 = arith.constant dense<0.000000e+00> : vector<8x128xf32>
    %95 = tpu.matmul %92, %8, %cst_38 {dimension_numbers = #tpu.dot_dimension_numbers<[1], [0], [0], [1], [0, 0, 1, 1], [], []>} : vector<8x128xf32>, vector<128x128xf32>, vector<8x128xf32> -> vector<8x128xf32>
    %cst_39 = arith.constant dense<0.000000e+00> : vector<8x128xf32>
    %96 = tpu.matmul %92, %9, %cst_39 {dimension_numbers = #tpu.dot_dimension_numbers<[1], [0], [0], [1], [0, 0, 1, 1], [], []>} : vector<8x128xf32>, vector<128x128xf32>, vector<8x128xf32> -> vector<8x128xf32>
    %97 = vector.broadcast %10 : vector<1x128xf32> to vector<8x128xf32>
    %98 = arith.addf %96, %97 : vector<8x128xf32>
    %99 = vector.extract_strided_slice %93 {offsets = [0, 0], sizes = [8, 128], strides = [1, 1]} : vector<8x384xf32> to vector<8x128xf32>
    %100 = arith.addf %99, %94 : vector<8x128xf32>
    %101 = arith.negf %100 : vector<8x128xf32>
    %102 = math.exp %101 : vector<8x128xf32>
    %cst_40 = arith.constant 1.000000e+00 : f32
    %103 = vector.broadcast %cst_40 : f32 to vector<8x128xf32>
    %104 = arith.addf %103, %102 : vector<8x128xf32>
    %105 = arith.divf %103, %104 : vector<8x128xf32>
    %106 = vector.extract_strided_slice %93 {offsets = [0, 128], sizes = [8, 128], strides = [1, 1]} : vector<8x384xf32> to vector<8x128xf32>
    %107 = arith.addf %106, %95 : vector<8x128xf32>
    %108 = arith.negf %107 : vector<8x128xf32>
    %109 = math.exp %108 : vector<8x128xf32>
    %cst_41 = arith.constant 1.000000e+00 : f32
    %110 = vector.broadcast %cst_41 : f32 to vector<8x128xf32>
    %111 = arith.addf %110, %109 : vector<8x128xf32>
    %112 = arith.divf %110, %111 : vector<8x128xf32>
    %113 = vector.extract_strided_slice %93 {offsets = [0, 256], sizes = [8, 128], strides = [1, 1]} : vector<8x384xf32> to vector<8x128xf32>
    %114 = arith.mulf %105, %98 : vector<8x128xf32>
    %115 = arith.addf %113, %114 : vector<8x128xf32>
    %116 = math.tanh %115 : vector<8x128xf32>
    %117 = arith.subf %92, %116 : vector<8x128xf32>
    %118 = arith.mulf %112, %117 : vector<8x128xf32>
    %119 = arith.addf %116, %118 : vector<8x128xf32>
    %c32 = arith.constant 32 : index
    %c0_42 = arith.constant 0 : index
    %120 = vector.load %arg16[%c32, %c0_42] : memref<64x384xf32, #tpu.memory_space<vmem>>, vector<8x384xf32>
    %cst_43 = arith.constant dense<0.000000e+00> : vector<8x128xf32>
    %121 = tpu.matmul %119, %7, %cst_43 {dimension_numbers = #tpu.dot_dimension_numbers<[1], [0], [0], [1], [0, 0, 1, 1], [], []>} : vector<8x128xf32>, vector<128x128xf32>, vector<8x128xf32> -> vector<8x128xf32>
    %cst_44 = arith.constant dense<0.000000e+00> : vector<8x128xf32>
    %122 = tpu.matmul %119, %8, %cst_44 {dimension_numbers = #tpu.dot_dimension_numbers<[1], [0], [0], [1], [0, 0, 1, 1], [], []>} : vector<8x128xf32>, vector<128x128xf32>, vector<8x128xf32> -> vector<8x128xf32>
    %cst_45 = arith.constant dense<0.000000e+00> : vector<8x128xf32>
    %123 = tpu.matmul %119, %9, %cst_45 {dimension_numbers = #tpu.dot_dimension_numbers<[1], [0], [0], [1], [0, 0, 1, 1], [], []>} : vector<8x128xf32>, vector<128x128xf32>, vector<8x128xf32> -> vector<8x128xf32>
    %124 = vector.broadcast %10 : vector<1x128xf32> to vector<8x128xf32>
    %125 = arith.addf %123, %124 : vector<8x128xf32>
    %126 = vector.extract_strided_slice %120 {offsets = [0, 0], sizes = [8, 128], strides = [1, 1]} : vector<8x384xf32> to vector<8x128xf32>
    %127 = arith.addf %126, %121 : vector<8x128xf32>
    %128 = arith.negf %127 : vector<8x128xf32>
    %129 = math.exp %128 : vector<8x128xf32>
    %cst_46 = arith.constant 1.000000e+00 : f32
    %130 = vector.broadcast %cst_46 : f32 to vector<8x128xf32>
    %131 = arith.addf %130, %129 : vector<8x128xf32>
    %132 = arith.divf %130, %131 : vector<8x128xf32>
    %133 = vector.extract_strided_slice %120 {offsets = [0, 128], sizes = [8, 128], strides = [1, 1]} : vector<8x384xf32> to vector<8x128xf32>
    %134 = arith.addf %133, %122 : vector<8x128xf32>
    %135 = arith.negf %134 : vector<8x128xf32>
    %136 = math.exp %135 : vector<8x128xf32>
    %cst_47 = arith.constant 1.000000e+00 : f32
    %137 = vector.broadcast %cst_47 : f32 to vector<8x128xf32>
    %138 = arith.addf %137, %136 : vector<8x128xf32>
    %139 = arith.divf %137, %138 : vector<8x128xf32>
    %140 = vector.extract_strided_slice %120 {offsets = [0, 256], sizes = [8, 128], strides = [1, 1]} : vector<8x384xf32> to vector<8x128xf32>
    %141 = arith.mulf %132, %125 : vector<8x128xf32>
    %142 = arith.addf %140, %141 : vector<8x128xf32>
    %143 = math.tanh %142 : vector<8x128xf32>
    %144 = arith.subf %119, %143 : vector<8x128xf32>
    %145 = arith.mulf %139, %144 : vector<8x128xf32>
    %146 = arith.addf %143, %145 : vector<8x128xf32>
    %c40 = arith.constant 40 : index
    %c0_48 = arith.constant 0 : index
    %147 = vector.load %arg16[%c40, %c0_48] : memref<64x384xf32, #tpu.memory_space<vmem>>, vector<8x384xf32>
    %cst_49 = arith.constant dense<0.000000e+00> : vector<8x128xf32>
    %148 = tpu.matmul %146, %7, %cst_49 {dimension_numbers = #tpu.dot_dimension_numbers<[1], [0], [0], [1], [0, 0, 1, 1], [], []>} : vector<8x128xf32>, vector<128x128xf32>, vector<8x128xf32> -> vector<8x128xf32>
    %cst_50 = arith.constant dense<0.000000e+00> : vector<8x128xf32>
    %149 = tpu.matmul %146, %8, %cst_50 {dimension_numbers = #tpu.dot_dimension_numbers<[1], [0], [0], [1], [0, 0, 1, 1], [], []>} : vector<8x128xf32>, vector<128x128xf32>, vector<8x128xf32> -> vector<8x128xf32>
    %cst_51 = arith.constant dense<0.000000e+00> : vector<8x128xf32>
    %150 = tpu.matmul %146, %9, %cst_51 {dimension_numbers = #tpu.dot_dimension_numbers<[1], [0], [0], [1], [0, 0, 1, 1], [], []>} : vector<8x128xf32>, vector<128x128xf32>, vector<8x128xf32> -> vector<8x128xf32>
    %151 = vector.broadcast %10 : vector<1x128xf32> to vector<8x128xf32>
    %152 = arith.addf %150, %151 : vector<8x128xf32>
    %153 = vector.extract_strided_slice %147 {offsets = [0, 0], sizes = [8, 128], strides = [1, 1]} : vector<8x384xf32> to vector<8x128xf32>
    %154 = arith.addf %153, %148 : vector<8x128xf32>
    %155 = arith.negf %154 : vector<8x128xf32>
    %156 = math.exp %155 : vector<8x128xf32>
    %cst_52 = arith.constant 1.000000e+00 : f32
    %157 = vector.broadcast %cst_52 : f32 to vector<8x128xf32>
    %158 = arith.addf %157, %156 : vector<8x128xf32>
    %159 = arith.divf %157, %158 : vector<8x128xf32>
    %160 = vector.extract_strided_slice %147 {offsets = [0, 128], sizes = [8, 128], strides = [1, 1]} : vector<8x384xf32> to vector<8x128xf32>
    %161 = arith.addf %160, %149 : vector<8x128xf32>
    %162 = arith.negf %161 : vector<8x128xf32>
    %163 = math.exp %162 : vector<8x128xf32>
    %cst_53 = arith.constant 1.000000e+00 : f32
    %164 = vector.broadcast %cst_53 : f32 to vector<8x128xf32>
    %165 = arith.addf %164, %163 : vector<8x128xf32>
    %166 = arith.divf %164, %165 : vector<8x128xf32>
    %167 = vector.extract_strided_slice %147 {offsets = [0, 256], sizes = [8, 128], strides = [1, 1]} : vector<8x384xf32> to vector<8x128xf32>
    %168 = arith.mulf %159, %152 : vector<8x128xf32>
    %169 = arith.addf %167, %168 : vector<8x128xf32>
    %170 = math.tanh %169 : vector<8x128xf32>
    %171 = arith.subf %146, %170 : vector<8x128xf32>
    %172 = arith.mulf %166, %171 : vector<8x128xf32>
    %173 = arith.addf %170, %172 : vector<8x128xf32>
    %c48 = arith.constant 48 : index
    %c0_54 = arith.constant 0 : index
    %174 = vector.load %arg16[%c48, %c0_54] : memref<64x384xf32, #tpu.memory_space<vmem>>, vector<8x384xf32>
    %cst_55 = arith.constant dense<0.000000e+00> : vector<8x128xf32>
    %175 = tpu.matmul %173, %7, %cst_55 {dimension_numbers = #tpu.dot_dimension_numbers<[1], [0], [0], [1], [0, 0, 1, 1], [], []>} : vector<8x128xf32>, vector<128x128xf32>, vector<8x128xf32> -> vector<8x128xf32>
    %cst_56 = arith.constant dense<0.000000e+00> : vector<8x128xf32>
    %176 = tpu.matmul %173, %8, %cst_56 {dimension_numbers = #tpu.dot_dimension_numbers<[1], [0], [0], [1], [0, 0, 1, 1], [], []>} : vector<8x128xf32>, vector<128x128xf32>, vector<8x128xf32> -> vector<8x128xf32>
    %cst_57 = arith.constant dense<0.000000e+00> : vector<8x128xf32>
    %177 = tpu.matmul %173, %9, %cst_57 {dimension_numbers = #tpu.dot_dimension_numbers<[1], [0], [0], [1], [0, 0, 1, 1], [], []>} : vector<8x128xf32>, vector<128x128xf32>, vector<8x128xf32> -> vector<8x128xf32>
    %178 = vector.broadcast %10 : vector<1x128xf32> to vector<8x128xf32>
    %179 = arith.addf %177, %178 : vector<8x128xf32>
    %180 = vector.extract_strided_slice %174 {offsets = [0, 0], sizes = [8, 128], strides = [1, 1]} : vector<8x384xf32> to vector<8x128xf32>
    %181 = arith.addf %180, %175 : vector<8x128xf32>
    %182 = arith.negf %181 : vector<8x128xf32>
    %183 = math.exp %182 : vector<8x128xf32>
    %cst_58 = arith.constant 1.000000e+00 : f32
    %184 = vector.broadcast %cst_58 : f32 to vector<8x128xf32>
    %185 = arith.addf %184, %183 : vector<8x128xf32>
    %186 = arith.divf %184, %185 : vector<8x128xf32>
    %187 = vector.extract_strided_slice %174 {offsets = [0, 128], sizes = [8, 128], strides = [1, 1]} : vector<8x384xf32> to vector<8x128xf32>
    %188 = arith.addf %187, %176 : vector<8x128xf32>
    %189 = arith.negf %188 : vector<8x128xf32>
    %190 = math.exp %189 : vector<8x128xf32>
    %cst_59 = arith.constant 1.000000e+00 : f32
    %191 = vector.broadcast %cst_59 : f32 to vector<8x128xf32>
    %192 = arith.addf %191, %190 : vector<8x128xf32>
    %193 = arith.divf %191, %192 : vector<8x128xf32>
    %194 = vector.extract_strided_slice %174 {offsets = [0, 256], sizes = [8, 128], strides = [1, 1]} : vector<8x384xf32> to vector<8x128xf32>
    %195 = arith.mulf %186, %179 : vector<8x128xf32>
    %196 = arith.addf %194, %195 : vector<8x128xf32>
    %197 = math.tanh %196 : vector<8x128xf32>
    %198 = arith.subf %173, %197 : vector<8x128xf32>
    %199 = arith.mulf %193, %198 : vector<8x128xf32>
    %200 = arith.addf %197, %199 : vector<8x128xf32>
    %c56 = arith.constant 56 : index
    %c0_60 = arith.constant 0 : index
    %201 = vector.load %arg16[%c56, %c0_60] : memref<64x384xf32, #tpu.memory_space<vmem>>, vector<8x384xf32>
    %cst_61 = arith.constant dense<0.000000e+00> : vector<8x128xf32>
    %202 = tpu.matmul %200, %7, %cst_61 {dimension_numbers = #tpu.dot_dimension_numbers<[1], [0], [0], [1], [0, 0, 1, 1], [], []>} : vector<8x128xf32>, vector<128x128xf32>, vector<8x128xf32> -> vector<8x128xf32>
    %cst_62 = arith.constant dense<0.000000e+00> : vector<8x128xf32>
    %203 = tpu.matmul %200, %8, %cst_62 {dimension_numbers = #tpu.dot_dimension_numbers<[1], [0], [0], [1], [0, 0, 1, 1], [], []>} : vector<8x128xf32>, vector<128x128xf32>, vector<8x128xf32> -> vector<8x128xf32>
    %cst_63 = arith.constant dense<0.000000e+00> : vector<8x128xf32>
    %204 = tpu.matmul %200, %9, %cst_63 {dimension_numbers = #tpu.dot_dimension_numbers<[1], [0], [0], [1], [0, 0, 1, 1], [], []>} : vector<8x128xf32>, vector<128x128xf32>, vector<8x128xf32> -> vector<8x128xf32>
    %205 = vector.broadcast %10 : vector<1x128xf32> to vector<8x128xf32>
    %206 = arith.addf %204, %205 : vector<8x128xf32>
    %207 = vector.extract_strided_slice %201 {offsets = [0, 0], sizes = [8, 128], strides = [1, 1]} : vector<8x384xf32> to vector<8x128xf32>
    %208 = arith.addf %207, %202 : vector<8x128xf32>
    %209 = arith.negf %208 : vector<8x128xf32>
    %210 = math.exp %209 : vector<8x128xf32>
    %cst_64 = arith.constant 1.000000e+00 : f32
    %211 = vector.broadcast %cst_64 : f32 to vector<8x128xf32>
    %212 = arith.addf %211, %210 : vector<8x128xf32>
    %213 = arith.divf %211, %212 : vector<8x128xf32>
    %214 = vector.extract_strided_slice %201 {offsets = [0, 128], sizes = [8, 128], strides = [1, 1]} : vector<8x384xf32> to vector<8x128xf32>
    %215 = arith.addf %214, %203 : vector<8x128xf32>
    %216 = arith.negf %215 : vector<8x128xf32>
    %217 = math.exp %216 : vector<8x128xf32>
    %cst_65 = arith.constant 1.000000e+00 : f32
    %218 = vector.broadcast %cst_65 : f32 to vector<8x128xf32>
    %219 = arith.addf %218, %217 : vector<8x128xf32>
    %220 = arith.divf %218, %219 : vector<8x128xf32>
    %221 = vector.extract_strided_slice %201 {offsets = [0, 256], sizes = [8, 128], strides = [1, 1]} : vector<8x384xf32> to vector<8x128xf32>
    %222 = arith.mulf %213, %206 : vector<8x128xf32>
    %223 = arith.addf %221, %222 : vector<8x128xf32>
    %224 = math.tanh %223 : vector<8x128xf32>
    %225 = arith.subf %200, %224 : vector<8x128xf32>
    %226 = arith.mulf %220, %225 : vector<8x128xf32>
    %227 = arith.addf %224, %226 : vector<8x128xf32>
    %c0_66 = arith.constant 0 : index
    %c0_67 = arith.constant 0 : index
    %228 = vector.load %arg15[%c0_66, %c0_67] : memref<8x128xf32, #tpu.memory_space<vmem>>, vector<8x128xf32>
    tpu.vector_store %arg15[%c0_66, %c0_67], %227 {strides = array<i32>} : memref<8x128xf32, #tpu.memory_space<vmem>>, vector<8x128xf32>,
    %c0_68 = arith.constant 0 : index
    %c0_69 = arith.constant 0 : index
    %229 = vector.load %arg8[%c0_68, %c0_69] : memref<128x128xf32, #tpu.memory_space<vmem>>, vector<128x128xf32>
    %cst_70 = arith.constant dense<0.000000e+00> : vector<8x128xf32>
    %230 = tpu.matmul %227, %229, %cst_70 {dimension_numbers = #tpu.dot_dimension_numbers<[1], [0], [0], [1], [0, 0, 1, 1], [], []>} : vector<8x128xf32>, vector<128x128xf32>, vector<8x128xf32> -> vector<8x128xf32>
    %c0_71 = arith.constant 0 : index
    %c0_72 = arith.constant 0 : index
    %231 = vector.load %arg9[%c0_71, %c0_72] : memref<1x128xf32, #tpu.memory_space<vmem>>, vector<1x128xf32>
    %232 = vector.broadcast %231 : vector<1x128xf32> to vector<8x128xf32>
    %233 = arith.addf %230, %232 : vector<8x128xf32>
    %cst_73 = arith.constant 0.000000e+00 : f32
    %234 = vector.broadcast %cst_73 : f32 to vector<8x128xf32>
    %235 = arith.maximumf %233, %234 : vector<8x128xf32>
    %c0_74 = arith.constant 0 : index
    %c0_75 = arith.constant 0 : index
    %236 = vector.load %arg10[%c0_74, %c0_75] : memref<128x128xf32, #tpu.memory_space<vmem>>, vector<128x128xf32>
    %cst_76 = arith.constant dense<0.000000e+00> : vector<8x128xf32>
    %237 = tpu.matmul %235, %236, %cst_76 {dimension_numbers = #tpu.dot_dimension_numbers<[1], [0], [0], [1], [0, 0, 1, 1], [], []>} : vector<8x128xf32>, vector<128x128xf32>, vector<8x128xf32> -> vector<8x128xf32>
    %c0_77 = arith.constant 0 : index
    %c0_78 = arith.constant 0 : index
    %238 = vector.load %arg11[%c0_77, %c0_78] : memref<1x128xf32, #tpu.memory_space<vmem>>, vector<1x128xf32>
    %239 = vector.broadcast %238 : vector<1x128xf32> to vector<8x128xf32>
    %240 = arith.addf %237, %239 : vector<8x128xf32>
    %cst_79 = arith.constant 0.000000e+00 : f32
    %241 = vector.broadcast %cst_79 : f32 to vector<8x128xf32>
    %242 = arith.maximumf %240, %241 : vector<8x128xf32>
    %c0_80 = arith.constant 0 : index
    %c0_81 = arith.constant 0 : index
    %243 = vector.load %arg12[%c0_80, %c0_81] : memref<128x128xf32, #tpu.memory_space<vmem>>, vector<128x128xf32>
    %cst_82 = arith.constant dense<0.000000e+00> : vector<8x128xf32>
    %244 = tpu.matmul %242, %243, %cst_82 {dimension_numbers = #tpu.dot_dimension_numbers<[1], [0], [0], [1], [0, 0, 1, 1], [], []>} : vector<8x128xf32>, vector<128x128xf32>, vector<8x128xf32> -> vector<8x128xf32>
    %c0_83 = arith.constant 0 : index
    %c0_84 = arith.constant 0 : index
    %245 = vector.load %arg13[%c0_83, %c0_84] : memref<1x128xf32, #tpu.memory_space<vmem>>, vector<1x128xf32>
    %246 = vector.broadcast %245 : vector<1x128xf32> to vector<8x128xf32>
    %247 = arith.addf %244, %246 : vector<8x128xf32>
    %c0_85 = arith.constant 0 : index
    %c0_86 = arith.constant 0 : index
    %248 = vector.load %arg14[%c0_85, %c0_86] : memref<8x128xf32, #tpu.memory_space<vmem>>, vector<8x128xf32>
    tpu.vector_store %arg14[%c0_85, %c0_86], %247 {strides = array<i32>} : memref<8x128xf32, #tpu.memory_space<vmem>>, vector<8x128xf32>,
    return
  }
}

</mosaic_0001>

<llo_original>
// kernel: actor_critic_forward.1
$region0: #{actor_critic_forward.1}
  #allocation0 [shape = 'u32[]', space=smem, size = 0x4, offset = 0x4, fixed_abs, tag = 'smem constant byte address 0x4 - core index']
  #allocation1 [shape = 'u32[144,128]{1,0:T(1,128)}', space=vmem, size = 0x12000, scoped, tag = 'internal scratch']
  #allocation2 [shape = 'f32[64,384]{1,0:T(8,128)}', space=vmem, size = 0x18000, scoped, tag = 'scratch operand']
  %s0 = inlined_call_operand.vmem [shape: f32[64,8], index: 0, kind: input, shape index: {}]
  %s1 = inlined_call_operand.vmem [shape: f32[8,128], index: 1, kind: input, shape index: {}, may-alias: {1,15}]
  %s2 = inlined_call_operand.hbm [shape: f32[8,384], index: 2, kind: input, shape index: {}]
  %s3 = inlined_call_operand.vmem [shape: f32[128,128], index: 3, kind: input, shape index: {}]
  %s4 = inlined_call_operand.hbm [shape: f32[128,128], index: 4, kind: input, shape index: {}]
  %s5 = inlined_call_operand.hbm [shape: f32[128,128], index: 5, kind: input, shape index: {}]
  %s6 = inlined_call_operand.vmem [shape: f32[1,384], index: 6, kind: input, shape index: {}]
  %s7 = inlined_call_operand.vmem [shape: f32[1,128], index: 7, kind: input, shape index: {}]
  %s8 = inlined_call_operand.hbm [shape: f32[128,128], index: 8, kind: input, shape index: {}]
  %s9 = inlined_call_operand.vmem [shape: f32[1,128], index: 9, kind: input, shape index: {}]
  %s10 = inlined_call_operand.hbm [shape: f32[128,128], index: 10, kind: input, shape index: {}]
  %s11 = inlined_call_operand.vmem [shape: f32[1,128], index: 11, kind: input, shape index: {}]
  %s12 = inlined_call_operand.hbm [shape: f32[128,128], index: 12, kind: input, shape index: {}]
  %s13 = inlined_call_operand.hbm [shape: f32[1,128], index: 13, kind: input, shape index: {}]
  %s14 = inlined_call_operand.vmem [shape: f32[8,128], index: 14, kind: output, shape index: {0}]
  %s15 = inlined_call_operand.vmem [shape: f32[8,128], index: 15, kind: output, shape index: {1}, may-alias: {1,15}]
  %16 = xla_tuple %s14, %s15
  %s17 = sld [smem:[#allocation0]]
  $region102: #{actor_critic_forward.1} parent=0
    _
  %s19 = ssub.s32 1, %s17
  %s20 = scalar_select 0, %s19, %s17
  $region1: #{actor_critic_forward.1} parent=0
    #allocation3 [shape = 'u8[12288]{0}', space=vmem, size = 0x3000, scoped, tag = 'input window, operand 2, single buffered']
    #allocation4 [shape = 's32[1]{0}', space=sflag, size = 0x4, scoped, tag = 'scoped memory for actor_critic_forward.1']
    #allocation5 [shape = 'u8[65536]{0}', space=vmem, size = 0x10000, scoped, tag = 'input window, operand 4, single buffered']
    #allocation6 [shape = 's32[1]{0}', space=sflag, size = 0x4, scoped, tag = 'scoped memory for actor_critic_forward.1']
    #allocation7 [shape = 'u8[65536]{0}', space=vmem, size = 0x10000, scoped, tag = 'input window, operand 5, single buffered']
    #allocation8 [shape = 'u8[65536]{0}', space=vmem, size = 0x10000, scoped, tag = 'input window, operand 8, single buffered']
    #allocation9 [shape = 's32[1]{0}', space=sflag, size = 0x4, scoped, tag = 'scoped memory for actor_critic_forward.1']
    #allocation10 [shape = 'u8[65536]{0}', space=vmem, size = 0x10000, scoped, tag = 'input window, operand 10, single buffered']
    #allocation11 [shape = 'u8[65536]{0}', space=vmem, size = 0x10000, scoped, tag = 'input window, operand 12, single buffered']
    #allocation12 [shape = 's32[1]{0}', space=sflag, size = 0x4, scoped, tag = 'scoped memory for actor_critic_forward.1']
    #allocation13 [shape = 'u8[512]{0}', space=vmem, size = 0x400, scoped, tag = 'input window, operand 13, single buffered']
    %21 = vsyncpa [#allocation4], 0
    %22 = vsyncpa [#allocation6], 0
    %23 = vsyncpa [#allocation9], 0
    %24 = vsyncpa [#allocation12], 0
    // Predicated region
    $region2: #{actor_critic_forward.1} parent=1 // pred_check
      _
    $region3: #{actor_critic_forward.1} parent=1 // pred_check_branch
      %26 = sbr.rel (0) target = $region5
    $region4: #{actor_critic_forward.1} parent=1 // pred_region
      _
    $region5: #{actor_critic_forward.1} parent=1 // pred_fallthru
      _
    // Predicated region
    $region6: #{actor_critic_forward.1} parent=1 // pred_check
      _
    $region7: #{actor_critic_forward.1} parent=1 // pred_check_branch
      %28 = sbr.rel (0) target = $region9
    $region8: #{actor_critic_forward.1} parent=1 // pred_region
      _
    $region9: #{actor_critic_forward.1} parent=1 // pred_fallthru
      _
    // Predicated region
    $region10: #{actor_critic_forward.1} parent=1 // pred_check
      _
    $region11: #{actor_critic_forward.1} parent=1 // pred_check_branch
      %30 = sbr.rel (0) target = $region13
    $region12: #{actor_critic_forward.1} parent=1 // pred_region
      %s32 = ssub.s32 384, 384
      %33 = vsyncadd [#allocation4], %s32
      %s35 = sshll.u32 [#allocation3], 4
      %s36 = int_to_ptr.vmem [resolvable:$true] %s35
      %38 = dma.hbm_to_vmem [thread:$0]  %s2, 384, %s36, [#allocation4]
    $region13: #{actor_critic_forward.1} parent=1 // pred_fallthru
      _
    // Predicated region
    $region14: #{actor_critic_forward.1} parent=1 // pred_check
      _
    $region15: #{actor_critic_forward.1} parent=1 // pred_check_branch
      %40 = sbr.rel (0) target = $region17
    $region16: #{actor_critic_forward.1} parent=1 // pred_region
      _
    $region17: #{actor_critic_forward.1} parent=1 // pred_fallthru
      _
    // Predicated region
    $region18: #{actor_critic_forward.1} parent=1 // pred_check
      _
    $region19: #{actor_critic_forward.1} parent=1 // pred_check_branch
      %42 = sbr.rel (0) target = $region21
    $region20: #{actor_critic_forward.1} parent=1 // pred_region
      %s44 = ssub.s32 2048, 2048
      %45 = vsyncadd [#allocation6], %s44
      %s46 = sshll.u32 [#allocation5], 4
      %s47 = int_to_ptr.vmem [resolvable:$true] %s46
      %52 = dma.hbm_to_vmem [thread:$0]  %s4, 2048, %s47, [#allocation6], 128, 128, 8
    $region21: #{actor_critic_forward.1} parent=1 // pred_fallthru
      _
    // Predicated region
    $region22: #{actor_critic_forward.1} parent=1 // pred_check
      _
    $region23: #{actor_critic_forward.1} parent=1 // pred_check_branch
      %54 = sbr.rel (0) target = $region25
    $region24: #{actor_critic_forward.1} parent=1 // pred_region
      %s56 = ssub.s32 2048, 2048
      %57 = vsyncadd [#allocation6], %s56
      %s58 = sshll.u32 [#allocation7], 4
      %s59 = int_to_ptr.vmem [resolvable:$true] %s58
      %64 = dma.hbm_to_vmem [thread:$0]  %s5, 2048, %s59, [#allocation6], 128, 128, 8
    $region25: #{actor_critic_forward.1} parent=1 // pred_fallthru
      _
    // Predicated region
    $region26: #{actor_critic_forward.1} parent=1 // pred_check
      _
    $region27: #{actor_critic_forward.1} parent=1 // pred_check_branch
      %66 = sbr.rel (0) target = $region29
    $region28: #{actor_critic_forward.1} parent=1 // pred_region
      _
    $region29: #{actor_critic_forward.1} parent=1 // pred_fallthru
      _
    // Predicated region
    $region30: #{actor_critic_forward.1} parent=1 // pred_check
      _
    $region31: #{actor_critic_forward.1} parent=1 // pred_check_branch
      %68 = sbr.rel (0) target = $region33
    $region32: #{actor_critic_forward.1} parent=1 // pred_region
      _
    $region33: #{actor_critic_forward.1} parent=1 // pred_fallthru
      _
    // Predicated region
    $region34: #{actor_critic_forward.1} parent=1 // pred_check
      _
    $region35: #{actor_critic_forward.1} parent=1 // pred_check_branch
      %70 = sbr.rel (0) target = $region37
    $region36: #{actor_critic_forward.1} parent=1 // pred_region
      %s72 = ssub.s32 2048, 2048
      %73 = vsyncadd [#allocation9], %s72
      %s74 = sshll.u32 [#allocation8], 4
      %s75 = int_to_ptr.vmem [resolvable:$true] %s74
      %80 = dma.hbm_to_vmem [thread:$0]  %s8, 2048, %s75, [#allocation9], 128, 128, 8
    $region37: #{actor_critic_forward.1} parent=1 // pred_fallthru
      _
    // Predicated region
    $region38: #{actor_critic_forward.1} parent=1 // pred_check
      _
    $region39: #{actor_critic_forward.1} parent=1 // pred_check_branch
      %82 = sbr.rel (0) target = $region41
    $region40: #{actor_critic_forward.1} parent=1 // pred_region
      _
    $region41: #{actor_critic_forward.1} parent=1 // pred_fallthru
      _
    // Predicated region
    $region42: #{actor_critic_forward.1} parent=1 // pred_check
      _
    $region43: #{actor_critic_forward.1} parent=1 // pred_check_branch
      %84 = sbr.rel (0) target = $region45
    $region44: #{actor_critic_forward.1} parent=1 // pred_region
      %s86 = ssub.s32 2048, 2048
      %87 = vsyncadd [#allocation9], %s86
      %s88 = sshll.u32 [#allocation10], 4
      %s89 = int_to_ptr.vmem [resolvable:$true] %s88
      %94 = dma.hbm_to_vmem [thread:$0]  %s10, 2048, %s89, [#allocation9], 128, 128, 8
    $region45: #{actor_critic_forward.1} parent=1 // pred_fallthru
      _
    // Predicated region
    $region46: #{actor_critic_forward.1} parent=1 // pred_check
      _
    $region47: #{actor_critic_forward.1} parent=1 // pred_check_branch
      %96 = sbr.rel (0) target = $region49
    $region48: #{actor_critic_forward.1} parent=1 // pred_region
      _
    $region49: #{actor_critic_forward.1} parent=1 // pred_fallthru
      _
    // Predicated region
    $region50: #{actor_critic_forward.1} parent=1 // pred_check
      _
    $region51: #{actor_critic_forward.1} parent=1 // pred_check_branch
      %98 = sbr.rel (0) target = $region53
    $region52: #{actor_critic_forward.1} parent=1 // pred_region
      %s100 = ssub.s32 2048, 2048
      %101 = vsyncadd [#allocation12], %s100
      %s102 = sshll.u32 [#allocation11], 4
      %s103 = int_to_ptr.vmem [resolvable:$true] %s102
      %108 = dma.hbm_to_vmem [thread:$0]  %s12, 2048, %s103, [#allocation12], 128, 128, 8
    $region53: #{actor_critic_forward.1} parent=1 // pred_fallthru
      _
    // Predicated region
    $region54: #{actor_critic_forward.1} parent=1 // pred_check
      _
    $region55: #{actor_critic_forward.1} parent=1 // pred_check_branch
      %110 = sbr.rel (0) target = $region57
    $region56: #{actor_critic_forward.1} parent=1 // pred_region
      %s112 = ssub.s32 16, 16
      %113 = vsyncadd [#allocation12], %s112
      %s115 = sshll.u32 [#allocation13], 4
      %s116 = int_to_ptr.vmem [resolvable:$true] %s115
      %118 = dma.hbm_to_vmem [thread:$0]  %s13, 16, %s116, [#allocation12]
    $region57: #{actor_critic_forward.1} parent=1 // pred_fallthru
      _
    // Predicated region
    $region58: #{actor_critic_forward.1} parent=1 // pred_check
      _
    $region59: #{actor_critic_forward.1} parent=1 // pred_check_branch
      %120 = sbr.rel (0) target = $region61
    $region60: #{actor_critic_forward.1} parent=1 // pred_region
      %121 = dma.done [#allocation4], 384
    $region61: #{actor_critic_forward.1} parent=1 // pred_fallthru
      _
    // Predicated region
    $region62: #{actor_critic_forward.1} parent=1 // pred_check
      _
    $region63: #{actor_critic_forward.1} parent=1 // pred_check_branch
      %123 = sbr.rel (0) target = $region65
    $region64: #{actor_critic_forward.1} parent=1 // pred_region
      %124 = dma.done [#allocation6], 2048
    $region65: #{actor_critic_forward.1} parent=1 // pred_fallthru
      _
    // Predicated region
    $region66: #{actor_critic_forward.1} parent=1 // pred_check
      _
    $region67: #{actor_critic_forward.1} parent=1 // pred_check_branch
      %126 = sbr.rel (0) target = $region69
    $region68: #{actor_critic_forward.1} parent=1 // pred_region
      %127 = dma.done [#allocation6], 2048
    $region69: #{actor_critic_forward.1} parent=1 // pred_fallthru
      _
    // Predicated region
    $region70: #{actor_critic_forward.1} parent=1 // pred_check
      _
    $region71: #{actor_critic_forward.1} parent=1 // pred_check_branch
      %129 = sbr.rel (0) target = $region73
    $region72: #{actor_critic_forward.1} parent=1 // pred_region
      %130 = dma.done [#allocation9], 2048
    $region73: #{actor_critic_forward.1} parent=1 // pred_fallthru
      _
    // Predicated region
    $region74: #{actor_critic_forward.1} parent=1 // pred_check
      _
    $region75: #{actor_critic_forward.1} parent=1 // pred_check_branch
      %132 = sbr.rel (0) target = $region77
    $region76: #{actor_critic_forward.1} parent=1 // pred_region
      %133 = dma.done [#allocation9], 2048
    $region77: #{actor_critic_forward.1} parent=1 // pred_fallthru
      _
    // Predicated region
    $region78: #{actor_critic_forward.1} parent=1 // pred_check
      _
    $region79: #{actor_critic_forward.1} parent=1 // pred_check_branch
      %135 = sbr.rel (0) target = $region81
    $region80: #{actor_critic_forward.1} parent=1 // pred_region
      %136 = dma.done [#allocation12], 2048
    $region81: #{actor_critic_forward.1} parent=1 // pred_fallthru
      _
    // Predicated region
    $region82: #{actor_critic_forward.1} parent=1 // pred_check
      _
    $region83: #{actor_critic_forward.1} parent=1 // pred_check_branch
      %138 = sbr.rel (0) target = $region85
    $region84: #{actor_critic_forward.1} parent=1 // pred_region
      %139 = dma.done [#allocation12], 16
    $region85: #{actor_critic_forward.1} parent=1 // pred_fallthru
      _
    %v140 = vld [vmem:[%s0] sm:$0xff]
    %v141 = vld [vmem:[%s0 + $0x8] sm:$0xff]
    %v142 = vld [vmem:[%s0 + $0x10] sm:$0xff]
    %v143 = vld [vmem:[%s0 + $0x18] sm:$0xff]
    %v144 = vld [vmem:[%s0 + $0x20] sm:$0xff]
    %v145 = vld [vmem:[%s0 + $0x28] sm:$0xff]
    %v146 = vld [vmem:[%s0 + $0x30] sm:$0xff]
    %v147 = vld [vmem:[%s0 + $0x38] sm:$0xff]
    %v148 = vld [vmem:[#allocation3] sm:$0xff]
    %v149 = vld [vmem:[#allocation3 + $0x8] sm:$0xff]
    %v150 = vld [vmem:[#allocation3 + $0x10] sm:$0xff]
    %v151 = vld [vmem:[%s6] sm:$0x7]
    %v153 = vlaneseq
    %v154 = vshrl.u32 %v153, 7
    %v155 = vsub.s32 0, %v154
    %v156 = vrot.slane %v151, %v155
    %v157 = vlaneseq
    %v158 = vshrl.u32 %v157, 7
    %v159 = vsub.s32 1, %v158
    %v160 = vrot.slane %v151, %v159
    %v161 = vlaneseq
    %v162 = vshrl.u32 %v161, 7
    %v163 = vsub.s32 2, %v162
    %v164 = vrot.slane %v151, %v163
    %vm168 = vcmask 64512
    %v170 = vsel %vm168, %v140, 0
    %v173 = vsel %vm168, %v141, 0
    %v176 = vsel %vm168, %v142, 0
    %v179 = vsel %vm168, %v143, 0
    %v182 = vsel %vm168, %v144, 0
    %v185 = vsel %vm168, %v145, 0
    %v188 = vsel %vm168, %v146, 0
    %v191 = vsel %vm168, %v147, 0
    %193 = vmatprep.subr.mxu0 0.0
    %194 = vmatpush1.msra.mxu0 0.0
    %195 = vmatprep.subr.mxu0 0.0
    %196 = vmatpush1.msra.mxu0 0.0
    %197 = vmatprep.subr.mxu0 0.0
    %198 = vmatpush1.msra.mxu0 0.0
    %199 = vmatprep.subr.mxu0 0.0
    %200 = vmatpush1.msra.mxu0 0.0
    %201 = vmatprep.subr.mxu0 0.0
    %202 = vmatpush1.msra.mxu0 0.0
    %203 = vmatprep.subr.mxu0 0.0
    %204 = vmatpush1.msra.mxu0 0.0
    %205 = vmatprep.subr.mxu0 0.0
    %206 = vmatpush1.msra.mxu0 0.0
    %207 = vmatprep.subr.mxu0 0.0
    %208 = vmatpush1.msra.mxu0 0.0
    %209 = vmatprep.subr.mxu0 0.0
    %210 = vmatpush1.msra.mxu0 0.0
    %211 = vmatprep.subr.mxu0 0.0
    %212 = vmatpush1.msra.mxu0 0.0
    %213 = vmatprep.subr.mxu0 0.0
    %214 = vmatpush1.msra.mxu0 0.0
    %215 = vmatprep.subr.mxu0 0.0
    %216 = vmatpush1.msra.mxu0 0.0
    %217 = vmatprep.subr.mxu0 0.0
    %218 = vmatpush1.msra.mxu0 0.0
    %219 = vmatprep.subr.mxu0 0.0
    %220 = vmatpush1.msra.mxu0 0.0
    %221 = vmatprep.subr.mxu0 0.0
    %222 = vmatpush1.msra.mxu0 0.0
    %223 = vmatprep.subr.mxu0 %v149
    %224 = vmatpush1.msra.mxu0 %v148
    %225 = vmatprep.subr.mxu0 0.0
    %226 = vmatpush2.msra.mxu0 0.0
    %227 = vmatprep.subr.mxu0 0.0
    %228 = vmatpush2.msra.mxu0 0.0
    %229 = vmatprep.subr.mxu0 0.0
    %230 = vmatpush2.msra.mxu0 0.0
    %231 = vmatprep.subr.mxu0 0.0
    %232 = vmatpush2.msra.mxu0 0.0
    %233 = vmatprep.subr.mxu0 0.0
    %234 = vmatpush2.msra.mxu0 0.0
    %235 = vmatprep.subr.mxu0 0.0
    %236 = vmatpush2.msra.mxu0 0.0
    %237 = vmatprep.subr.mxu0 0.0
    %238 = vmatpush2.msra.mxu0 0.0
    %239 = vmatprep.subr.mxu0 0.0
    %240 = vmatpush2.msra.mxu0 0.0
    %241 = vmatprep.subr.mxu0 0.0
    %242 = vmatpush2.msra.mxu0 0.0
    %243 = vmatprep.subr.mxu0 0.0
    %244 = vmatpush2.msra.mxu0 0.0
    %245 = vmatprep.subr.mxu0 0.0
    %246 = vmatpush2.msra.mxu0 0.0
    %247 = vmatprep.subr.mxu0 0.0
    %248 = vmatpush2.msra.mxu0 0.0
    %249 = vmatprep.subr.mxu0 0.0
    %250 = vmatpush2.msra.mxu0 0.0
    %251 = vmatprep.subr.mxu0 0.0
    %252 = vmatpush2.msra.mxu0 0.0
    %253 = vmatprep.subr.mxu0 0.0
    %254 = vmatpush2.msra.mxu0 0.0
    %255 = vmatprep.subr.mxu0 0.0
    %256 = vmatpush2.msra.mxu0 0.0
    %257 = vmatprep.mubr.f32.mxu0 0.0
    %258 = vmatmul.mubr.f32.gmra.mxu0 %v170
    %v259 = vpop.f32.mrf.mxu0
    %v260 = vadd.f32 %v156, %v259
    %v261 = vpop.f32.mrf.mxu0
    %v262 = vadd.f32 %v160, %v261
    %263 = vmatprep.mubr.f32.mxu0 0.0
    %264 = vmatmul.mubr.f32.gmra.mxu0 %v173
    %v265 = vpop.f32.mrf.mxu0
    %v266 = vadd.f32 %v156, %v265
    %v267 = vpop.f32.mrf.mxu0
    %v268 = vadd.f32 %v160, %v267
    %269 = vmatprep.mubr.f32.mxu0 0.0
    %270 = vmatmul.mubr.f32.gmra.mxu0 %v176
    %v271 = vpop.f32.mrf.mxu0
    %v272 = vadd.f32 %v156, %v271
    %v273 = vpop.f32.mrf.mxu0
    %v274 = vadd.f32 %v160, %v273
    %275 = vmatprep.mubr.f32.mxu0 0.0
    %276 = vmatmul.mubr.f32.gmra.mxu0 %v179
    %v277 = vpop.f32.mrf.mxu0
    %v278 = vadd.f32 %v156, %v277
    %v279 = vpop.f32.mrf.mxu0
    %v280 = vadd.f32 %v160, %v279
    %281 = vmatprep.mubr.f32.mxu0 0.0
    %282 = vmatmul.mubr.f32.gmra.mxu0 %v182
    %v283 = vpop.f32.mrf.mxu0
    %v284 = vadd.f32 %v156, %v283
    %v285 = vpop.f32.mrf.mxu0
    %v286 = vadd.f32 %v160, %v285
    %287 = vmatprep.mubr.f32.mxu0 0.0
    %288 = vmatmul.mubr.f32.gmra.mxu0 %v185
    %v289 = vpop.f32.mrf.mxu0
    %v290 = vadd.f32 %v156, %v289
    %v291 = vpop.f32.mrf.mxu0
    %v292 = vadd.f32 %v160, %v291
    %293 = vmatprep.mubr.f32.mxu0 0.0
    %294 = vmatmul.mubr.f32.gmra.mxu0 %v188
    %v295 = vpop.f32.mrf.mxu0
    %v296 = vadd.f32 %v156, %v295
    %v297 = vpop.f32.mrf.mxu0
    %v298 = vadd.f32 %v160, %v297
    %299 = vmatprep.mubr.f32.mxu0 0.0
    %300 = vmatmul.mubr.f32.gmra.mxu0 %v191
    %v301 = vpop.f32.mrf.mxu0
    %v302 = vadd.f32 %v156, %v301
    %v303 = vpop.f32.mrf.mxu0
    %v304 = vadd.f32 %v160, %v303
    %305 = vdwg.mxu0
    %306 = vmatprep.subr.mxu0 0.0
    %307 = vmatpush1.msra.mxu0 0.0
    %308 = vmatprep.subr.mxu0 0.0
    %309 = vmatpush1.msra.mxu0 0.0
    %310 = vmatprep.subr.mxu0 0.0
    %311 = vmatpush1.msra.mxu0 0.0
    %312 = vmatprep.subr.mxu0 0.0
    %313 = vmatpush1.msra.mxu0 0.0
    %314 = vmatprep.subr.mxu0 0.0
    %315 = vmatpush1.msra.mxu0 0.0
    %316 = vmatprep.subr.mxu0 0.0
    %317 = vmatpush1.msra.mxu0 0.0
    %318 = vmatprep.subr.mxu0 0.0
    %319 = vmatpush1.msra.mxu0 0.0
    %320 = vmatprep.subr.mxu0 0.0
    %321 = vmatpush1.msra.mxu0 0.0
    %322 = vmatprep.subr.mxu0 0.0
    %323 = vmatpush1.msra.mxu0 0.0
    %324 = vmatprep.subr.mxu0 0.0
    %325 = vmatpush1.msra.mxu0 0.0
    %326 = vmatprep.subr.mxu0 0.0
    %327 = vmatpush1.msra.mxu0 0.0
    %328 = vmatprep.subr.mxu0 0.0
    %329 = vmatpush1.msra.mxu0 0.0
    %330 = vmatprep.subr.mxu0 0.0
    %331 = vmatpush1.msra.mxu0 0.0
    %332 = vmatprep.subr.mxu0 0.0
    %333 = vmatpush1.msra.mxu0 0.0
    %334 = vmatprep.subr.mxu0 0.0
    %335 = vmatpush1.msra.mxu0 0.0
    %336 = vmatprep.subr.mxu0 0.0
    %337 = vmatpush1.msra.mxu0 %v150
    %338 = vmatprep.subr.mxu0 0.0
    %339 = vmatpush2.msra.mxu0 0.0
    %340 = vmatprep.subr.mxu0 0.0
    %341 = vmatpush2.msra.mxu0 0.0
    %342 = vmatprep.subr.mxu0 0.0
    %343 = vmatpush2.msra.mxu0 0.0
    %344 = vmatprep.subr.mxu0 0.0
    %345 = vmatpush2.msra.mxu0 0.0
    %346 = vmatprep.subr.mxu0 0.0
    %347 = vmatpush2.msra.mxu0 0.0
    %348 = vmatprep.subr.mxu0 0.0
    %349 = vmatpush2.msra.mxu0 0.0
    %350 = vmatprep.subr.mxu0 0.0
    %351 = vmatpush2.msra.mxu0 0.0
    %352 = vmatprep.subr.mxu0 0.0
    %353 = vmatpush2.msra.mxu0 0.0
    %354 = vmatprep.subr.mxu0 0.0
    %355 = vmatpush2.msra.mxu0 0.0
    %356 = vmatprep.subr.mxu0 0.0
    %357 = vmatpush2.msra.mxu0 0.0
    %358 = vmatprep.subr.mxu0 0.0
    %359 = vmatpush2.msra.mxu0 0.0
    %360 = vmatprep.subr.mxu0 0.0
    %361 = vmatpush2.msra.mxu0 0.0
    %362 = vmatprep.subr.mxu0 0.0
    %363 = vmatpush2.msra.mxu0 0.0
    %364 = vmatprep.subr.mxu0 0.0
    %365 = vmatpush2.msra.mxu0 0.0
    %366 = vmatprep.subr.mxu0 0.0
    %367 = vmatpush2.msra.mxu0 0.0
    %368 = vmatprep.subr.mxu0 0.0
    %369 = vmatpush2.msra.mxu0 0.0
    %370 = vmatprep.mubr.f32.mxu0 0.0
    %371 = vmatmul.mubr.f32.gmra.mxu0 %v170
    %v372 = vpop.f32.mrf.mxu0
    %v373 = vadd.f32 %v164, %v372
    %v374 = vpop.f32.mrf.mxu0
    %375 = vmatprep.mubr.f32.mxu0 0.0
    %376 = vmatmul.mubr.f32.gmra.mxu0 %v173
    %v377 = vpop.f32.mrf.mxu0
    %v378 = vadd.f32 %v164, %v377
    %v379 = vpop.f32.mrf.mxu0
    %380 = vmatprep.mubr.f32.mxu0 0.0
    %381 = vmatmul.mubr.f32.gmra.mxu0 %v176
    %v382 = vpop.f32.mrf.mxu0
    %v383 = vadd.f32 %v164, %v382
    %v384 = vpop.f32.mrf.mxu0
    %385 = vmatprep.mubr.f32.mxu0 0.0
    %386 = vmatmul.mubr.f32.gmra.mxu0 %v179
    %v387 = vpop.f32.mrf.mxu0
    %v388 = vadd.f32 %v164, %v387
    %v389 = vpop.f32.mrf.mxu0
    %390 = vmatprep.mubr.f32.mxu0 0.0
    %391 = vmatmul.mubr.f32.gmra.mxu0 %v182
    %v392 = vpop.f32.mrf.mxu0
    %v393 = vadd.f32 %v164, %v392
    %v394 = vpop.f32.mrf.mxu0
    %395 = vmatprep.mubr.f32.mxu0 0.0
    %396 = vmatmul.mubr.f32.gmra.mxu0 %v185
    %v397 = vpop.f32.mrf.mxu0
    %v398 = vadd.f32 %v164, %v397
    %v399 = vpop.f32.mrf.mxu0
    %400 = vmatprep.mubr.f32.mxu0 0.0
    %401 = vmatmul.mubr.f32.gmra.mxu0 %v188
    %v402 = vpop.f32.mrf.mxu0
    %v403 = vadd.f32 %v164, %v402
    %v404 = vpop.f32.mrf.mxu0
    %405 = vmatprep.mubr.f32.mxu0 0.0
    %406 = vmatmul.mubr.f32.gmra.mxu0 %v191
    %v407 = vpop.f32.mrf.mxu0
    %v408 = vadd.f32 %v164, %v407
    %v409 = vpop.f32.mrf.mxu0
    %410 = vdwg.mxu0
    %411 = vst [vmem:[#allocation2] sm:$0xff] %v260
    %412 = vst [vmem:[#allocation2 + $0x8] sm:$0xff] %v262
    %413 = vst [vmem:[#allocation2 + $0x10] sm:$0xff] %v373
    %414 = vst [vmem:[#allocation2 + $0x18] sm:$0xff] %v266
    %415 = vst [vmem:[#allocation2 + $0x20] sm:$0xff] %v268
    %416 = vst [vmem:[#allocation2 + $0x28] sm:$0xff] %v378
    %417 = vst [vmem:[#allocation2 + $0x30] sm:$0xff] %v272
    %418 = vst [vmem:[#allocation2 + $0x38] sm:$0xff] %v274
    %419 = vst [vmem:[#allocation2 + $0x40] sm:$0xff] %v383
    %420 = vst [vmem:[#allocation2 + $0x48] sm:$0xff] %v278
    %421 = vst [vmem:[#allocation2 + $0x50] sm:$0xff] %v280
    %422 = vst [vmem:[#allocation2 + $0x58] sm:$0xff] %v388
    %423 = vst [vmem:[#allocation2 + $0x60] sm:$0xff] %v284
    %424 = vst [vmem:[#allocation2 + $0x68] sm:$0xff] %v286
    %425 = vst [vmem:[#allocation2 + $0x70] sm:$0xff] %v393
    %426 = vst [vmem:[#allocation2 + $0x78] sm:$0xff] %v290
    %427 = vst [vmem:[#allocation2 + $0x80] sm:$0xff] %v292
    %428 = vst [vmem:[#allocation2 + $0x88] sm:$0xff] %v398
    %429 = vst [vmem:[#allocation2 + $0x90] sm:$0xff] %v296
    %430 = vst [vmem:[#allocation2 + $0x98] sm:$0xff] %v298
    %431 = vst [vmem:[#allocation2 + $0xa0] sm:$0xff] %v403
    %432 = vst [vmem:[#allocation2 + $0xa8] sm:$0xff] %v302
    %433 = vst [vmem:[#allocation2 + $0xb0] sm:$0xff] %v304
    %434 = vst [vmem:[#allocation2 + $0xb8] sm:$0xff] %v408
    %v435 = vld [vmem:[%s3] sm:$0xff]
    %v436 = vld [vmem:[%s3 + $0x8] sm:$0xff]
    %v437 = vld [vmem:[%s3 + $0x10] sm:$0xff]
    %v438 = vld [vmem:[%s3 + $0x18] sm:$0xff]
    %v439 = vld [vmem:[%s3 + $0x20] sm:$0xff]
    %v440 = vld [vmem:[%s3 + $0x28] sm:$0xff]
    %v441 = vld [vmem:[%s3 + $0x30] sm:$0xff]
    %v442 = vld [vmem:[%s3 + $0x38] sm:$0xff]
    %v443 = vld [vmem:[%s3 + $0x40] sm:$0xff]
    %v444 = vld [vmem:[%s3 + $0x48] sm:$0xff]
    %v445 = vld [vmem:[%s3 + $0x50] sm:$0xff]
    %v446 = vld [vmem:[%s3 + $0x58] sm:$0xff]
    %v447 = vld [vmem:[%s3 + $0x60] sm:$0xff]
    %v448 = vld [vmem:[%s3 + $0x68] sm:$0xff]
    %v449 = vld [vmem:[%s3 + $0x70] sm:$0xff]
    %v450 = vld [vmem:[%s3 + $0x78] sm:$0xff]
    %v451 = vld [vmem:[#allocation5] sm:$0xff]
    %v452 = vld [vmem:[#allocation5 + $0x8] sm:$0xff]
    %v453 = vld [vmem:[#allocation5 + $0x10] sm:$0xff]
    %v454 = vld [vmem:[#allocation5 + $0x18] sm:$0xff]
    %v455 = vld [vmem:[#allocation5 + $0x20] sm:$0xff]
    %v456 = vld [vmem:[#allocation5 + $0x28] sm:$0xff]
    %v457 = vld [vmem:[#allocation5 + $0x30] sm:$0xff]
    %v458 = vld [vmem:[#allocation5 + $0x38] sm:$0xff]
    %v459 = vld [vmem:[#allocation5 + $0x40] sm:$0xff]
    %v460 = vld [vmem:[#allocation5 + $0x48] sm:$0xff]
    %v461 = vld [vmem:[#allocation5 + $0x50] sm:$0xff]
    %v462 = vld [vmem:[#allocation5 + $0x58] sm:$0xff]
    %v463 = vld [vmem:[#allocation5 + $0x60] sm:$0xff]
    %v464 = vld [vmem:[#allocation5 + $0x68] sm:$0xff]
    %v465 = vld [vmem:[#allocation5 + $0x70] sm:$0xff]
    %v466 = vld [vmem:[#allocation5 + $0x78] sm:$0xff]
    %v467 = vld [vmem:[#allocation7] sm:$0xff]
    %v468 = vld [vmem:[#allocation7 + $0x8] sm:$0xff]
    %v469 = vld [vmem:[#allocation7 + $0x10] sm:$0xff]
    %v470 = vld [vmem:[#allocation7 + $0x18] sm:$0xff]
    %v471 = vld [vmem:[#allocation7 + $0x20] sm:$0xff]
    %v472 = vld [vmem:[#allocation7 + $0x28] sm:$0xff]
    %v473 = vld [vmem:[#allocation7 + $0x30] sm:$0xff]
    %v474 = vld [vmem:[#allocation7 + $0x38] sm:$0xff]
    %v475 = vld [vmem:[#allocation7 + $0x40] sm:$0xff]
    %v476 = vld [vmem:[#allocation7 + $0x48] sm:$0xff]
    %v477 = vld [vmem:[#allocation7 + $0x50] sm:$0xff]
    %v478 = vld [vmem:[#allocation7 + $0x58] sm:$0xff]
    %v479 = vld [vmem:[#allocation7 + $0x60] sm:$0xff]
    %v480 = vld [vmem:[#allocation7 + $0x68] sm:$0xff]
    %v481 = vld [vmem:[#allocation7 + $0x70] sm:$0xff]
    %v482 = vld [vmem:[#allocation7 + $0x78] sm:$0xff]
    %v483 = vld [vmem:[%s7] sm:$0x1]
    %v484 = vld [vmem:[%s1] sm:$0xff]
    %v485 = vld [vmem:[#allocation2] sm:$0xff]
    %v486 = vld [vmem:[#allocation2 + $0x8] sm:$0xff]
    %v487 = vld [vmem:[#allocation2 + $0x10] sm:$0xff]
    %488 = vmatprep.subr.mxu0 0.0
    %489 = vmatpush1.msra.mxu0 %v450
    %490 = vmatprep.subr.mxu0 0.0
    %491 = vmatpush1.msra.mxu0 %v449
    %492 = vmatprep.subr.mxu0 0.0
    %493 = vmatpush1.msra.mxu0 %v448
    %494 = vmatprep.subr.mxu0 0.0
    %495 = vmatpush1.msra.mxu0 %v447
    %496 = vmatprep.subr.mxu0 0.0
    %497 = vmatpush1.msra.mxu0 %v446
    %498 = vmatprep.subr.mxu0 0.0
    %499 = vmatpush1.msra.mxu0 %v445
    %500 = vmatprep.subr.mxu0 0.0
    %501 = vmatpush1.msra.mxu0 %v444
    %502 = vmatprep.subr.mxu0 0.0
    %503 = vmatpush1.msra.mxu0 %v443
    %504 = vmatprep.subr.mxu0 0.0
    %505 = vmatpush1.msra.mxu0 %v442
    %506 = vmatprep.subr.mxu0 0.0
    %507 = vmatpush1.msra.mxu0 %v441
    %508 = vmatprep.subr.mxu0 0.0
    %509 = vmatpush1.msra.mxu0 %v440
    %510 = vmatprep.subr.mxu0 0.0
    %511 = vmatpush1.msra.mxu0 %v439
    %512 = vmatprep.subr.mxu0 0.0
    %513 = vmatpush1.msra.mxu0 %v438
    %514 = vmatprep.subr.mxu0 0.0
    %515 = vmatpush1.msra.mxu0 %v437
    %516 = vmatprep.subr.mxu0 0.0
    %517 = vmatpush1.msra.mxu0 %v436
    %518 = vmatprep.subr.mxu0 0.0
    %519 = vmatpush1.msra.mxu0 %v435
    %520 = vmatprep.subr.mxu0 0.0
    %521 = vmatpush2.msra.mxu0 0.0
    %522 = vmatprep.subr.mxu0 0.0
    %523 = vmatpush2.msra.mxu0 0.0
    %524 = vmatprep.subr.mxu0 0.0
    %525 = vmatpush2.msra.mxu0 0.0
    %526 = vmatprep.subr.mxu0 0.0
    %527 = vmatpush2.msra.mxu0 0.0
    %528 = vmatprep.subr.mxu0 0.0
    %529 = vmatpush2.msra.mxu0 0.0
    %530 = vmatprep.subr.mxu0 0.0
    %531 = vmatpush2.msra.mxu0 0.0
    %532 = vmatprep.subr.mxu0 0.0
    %533 = vmatpush2.msra.mxu0 0.0
    %534 = vmatprep.subr.mxu0 0.0
    %535 = vmatpush2.msra.mxu0 0.0
    %536 = vmatprep.subr.mxu0 0.0
    %537 = vmatpush2.msra.mxu0 0.0
    %538 = vmatprep.subr.mxu0 0.0
    %539 = vmatpush2.msra.mxu0 0.0
    %540 = vmatprep.subr.mxu0 0.0
    %541 = vmatpush2.msra.mxu0 0.0
    %542 = vmatprep.subr.mxu0 0.0
    %543 = vmatpush2.msra.mxu0 0.0
    %544 = vmatprep.subr.mxu0 0.0
    %545 = vmatpush2.msra.mxu0 0.0
    %546 = vmatprep.subr.mxu0 0.0
    %547 = vmatpush2.msra.mxu0 0.0
    %548 = vmatprep.subr.mxu0 0.0
    %549 = vmatpush2.msra.mxu0 0.0
    %550 = vmatprep.subr.mxu0 0.0
    %551 = vmatpush2.msra.mxu0 0.0
    %552 = vmatprep.mubr.f32.mxu0 0.0
    %553 = vmatmul.mubr.f32.gmra.mxu0 %v484
    %v554 = vpop.f32.mrf.mxu0
    %v555 = vadd.f32 0.0, %v554
    %v556 = vpop.f32.mrf.mxu0
    %557 = vdwg.mxu0
    %558 = vmatprep.subr.mxu0 0.0
    %559 = vmatpush1.msra.mxu0 %v466
    %560 = vmatprep.subr.mxu0 0.0
    %561 = vmatpush1.msra.mxu0 %v465
    %562 = vmatprep.subr.mxu0 0.0
    %563 = vmatpush1.msra.mxu0 %v464
    %564 = vmatprep.subr.mxu0 0.0
    %565 = vmatpush1.msra.mxu0 %v463
    %566 = vmatprep.subr.mxu0 0.0
    %567 = vmatpush1.msra.mxu0 %v462
    %568 = vmatprep.subr.mxu0 0.0
    %569 = vmatpush1.msra.mxu0 %v461
    %570 = vmatprep.subr.mxu0 0.0
    %571 = vmatpush1.msra.mxu0 %v460
    %572 = vmatprep.subr.mxu0 0.0
    %573 = vmatpush1.msra.mxu0 %v459
    %574 = vmatprep.subr.mxu0 0.0
    %575 = vmatpush1.msra.mxu0 %v458
    %576 = vmatprep.subr.mxu0 0.0
    %577 = vmatpush1.msra.mxu0 %v457
    %578 = vmatprep.subr.mxu0 0.0
    %579 = vmatpush1.msra.mxu0 %v456
    %580 = vmatprep.subr.mxu0 0.0
    %581 = vmatpush1.msra.mxu0 %v455
    %582 = vmatprep.subr.mxu0 0.0
    %583 = vmatpush1.msra.mxu0 %v454
    %584 = vmatprep.subr.mxu0 0.0
    %585 = vmatpush1.msra.mxu0 %v453
    %586 = vmatprep.subr.mxu0 0.0
    %587 = vmatpush1.msra.mxu0 %v452
    %588 = vmatprep.subr.mxu0 0.0
    %589 = vmatpush1.msra.mxu0 %v451
    %590 = vmatprep.subr.mxu0 0.0
    %591 = vmatpush2.msra.mxu0 0.0
    %592 = vmatprep.subr.mxu0 0.0
    %593 = vmatpush2.msra.mxu0 0.0
    %594 = vmatprep.subr.mxu0 0.0
    %595 = vmatpush2.msra.mxu0 0.0
    %596 = vmatprep.subr.mxu0 0.0
    %597 = vmatpush2.msra.mxu0 0.0
    %598 = vmatprep.subr.mxu0 0.0
    %599 = vmatpush2.msra.mxu0 0.0
    %600 = vmatprep.subr.mxu0 0.0
    %601 = vmatpush2.msra.mxu0 0.0
    %602 = vmatprep.subr.mxu0 0.0
    %603 = vmatpush2.msra.mxu0 0.0
    %604 = vmatprep.subr.mxu0 0.0
    %605 = vmatpush2.msra.mxu0 0.0
    %606 = vmatprep.subr.mxu0 0.0
    %607 = vmatpush2.msra.mxu0 0.0
    %608 = vmatprep.subr.mxu0 0.0
    %609 = vmatpush2.msra.mxu0 0.0
    %610 = vmatprep.subr.mxu0 0.0
    %611 = vmatpush2.msra.mxu0 0.0
    %612 = vmatprep.subr.mxu0 0.0
    %613 = vmatpush2.msra.mxu0 0.0
    %614 = vmatprep.subr.mxu0 0.0
    %615 = vmatpush2.msra.mxu0 0.0
    %616 = vmatprep.subr.mxu0 0.0
    %617 = vmatpush2.msra.mxu0 0.0
    %618 = vmatprep.subr.mxu0 0.0
    %619 = vmatpush2.msra.mxu0 0.0
    %620 = vmatprep.subr.mxu0 0.0
    %621 = vmatpush2.msra.mxu0 0.0
    %622 = vmatprep.mubr.f32.mxu0 0.0
    %623 = vmatmul.mubr.f32.gmra.mxu0 %v484
    %v624 = vpop.f32.mrf.mxu0
    %v625 = vadd.f32 0.0, %v624
    %v626 = vpop.f32.mrf.mxu0
    %627 = vdwg.mxu0
    %v629 = vlaneseq
    %v630 = vshrl.u32 %v629, 7
    %v631 = vsub.s32 0, %v630
    %v632 = vrot.slane %v483, %v631
    %634 = vmatprep.subr.mxu0 0.0
    %635 = vmatpush1.msra.mxu0 %v482
    %636 = vmatprep.subr.mxu0 0.0
    %637 = vmatpush1.msra.mxu0 %v481
    %638 = vmatprep.subr.mxu0 0.0
    %639 = vmatpush1.msra.mxu0 %v480
    %640 = vmatprep.subr.mxu0 0.0
    %641 = vmatpush1.msra.mxu0 %v479
    %642 = vmatprep.subr.mxu0 0.0
    %643 = vmatpush1.msra.mxu0 %v478
    %644 = vmatprep.subr.mxu0 0.0
    %645 = vmatpush1.msra.mxu0 %v477
    %646 = vmatprep.subr.mxu0 0.0
    %647 = vmatpush1.msra.mxu0 %v476
    %648 = vmatprep.subr.mxu0 0.0
    %649 = vmatpush1.msra.mxu0 %v475
    %650 = vmatprep.subr.mxu0 0.0
    %651 = vmatpush1.msra.mxu0 %v474
    %652 = vmatprep.subr.mxu0 0.0
    %653 = vmatpush1.msra.mxu0 %v473
    %654 = vmatprep.subr.mxu0 0.0
    %655 = vmatpush1.msra.mxu0 %v472
    %656 = vmatprep.subr.mxu0 0.0
    %657 = vmatpush1.msra.mxu0 %v471
    %658 = vmatprep.subr.mxu0 0.0
    %659 = vmatpush1.msra.mxu0 %v470
    %660 = vmatprep.subr.mxu0 0.0
    %661 = vmatpush1.msra.mxu0 %v469
    %662 = vmatprep.subr.mxu0 0.0
    %663 = vmatpush1.msra.mxu0 %v468
    %664 = vmatprep.subr.mxu0 0.0
    %665 = vmatpush1.msra.mxu0 %v467
    %666 = vmatprep.subr.mxu0 0.0
    %667 = vmatpush2.msra.mxu0 0.0
    %668 = vmatprep.subr.mxu0 0.0
    %669 = vmatpush2.msra.mxu0 0.0
    %670 = vmatprep.subr.mxu0 0.0
    %671 = vmatpush2.msra.mxu0 0.0
    %672 = vmatprep.subr.mxu0 0.0
    %673 = vmatpush2.msra.mxu0 0.0
    %674 = vmatprep.subr.mxu0 0.0
    %675 = vmatpush2.msra.mxu0 0.0
    %676 = vmatprep.subr.mxu0 0.0
    %677 = vmatpush2.msra.mxu0 0.0
    %678 = vmatprep.subr.mxu0 0.0
    %679 = vmatpush2.msra.mxu0 0.0
    %680 = vmatprep.subr.mxu0 0.0
    %681 = vmatpush2.msra.mxu0 0.0
    %682 = vmatprep.subr.mxu0 0.0
    %683 = vmatpush2.msra.mxu0 0.0
    %684 = vmatprep.subr.mxu0 0.0
    %685 = vmatpush2.msra.mxu0 0.0
    %686 = vmatprep.subr.mxu0 0.0
    %687 = vmatpush2.msra.mxu0 0.0
    %688 = vmatprep.subr.mxu0 0.0
    %689 = vmatpush2.msra.mxu0 0.0
    %690 = vmatprep.subr.mxu0 0.0
    %691 = vmatpush2.msra.mxu0 0.0
    %692 = vmatprep.subr.mxu0 0.0
    %693 = vmatpush2.msra.mxu0 0.0
    %694 = vmatprep.subr.mxu0 0.0
    %695 = vmatpush2.msra.mxu0 0.0
    %696 = vmatprep.subr.mxu0 0.0
    %697 = vmatpush2.msra.mxu0 0.0
    %698 = vmatprep.mubr.f32.mxu0 0.0
    %699 = vmatmul.mubr.f32.gmra.mxu0 %v484
    %v700 = vpop.f32.mrf.mxu0
    %v701 = vadd.f32 %v632, %v700
    %v702 = vpop.f32.mrf.mxu0
    %703 = vdwg.mxu0
    %v704 = vadd.f32 %v485, %v555
    %v705 = vxor.u32 %v704, 2147483648
    %v706 = vmul.f32 %v705, 1.442695
    %v707 = vpow.pop %v706
    %v708 = vadd.f32 %v707, 1.0
    %v709 = vrcp.pop %v708
    %v710 = vmul.f32 1.0, %v709
    %v711 = vadd.f32 %v486, %v625
    %v712 = vxor.u32 %v711, 2147483648
    %v713 = vmul.f32 %v712, 1.442695
    %v714 = vpow.pop %v713
    %v715 = vadd.f32 %v714, 1.0
    %v716 = vrcp.pop %v715
    %v717 = vmul.f32 1.0, %v716
    %v718 = vmul.f32 %v710, %v701
    %v719 = vadd.f32 %v487, %v718
    %v720 = vtanh.pop %v719
    %v721 = vsub.f32 %v484, %v720
    %v722 = vmul.f32 %v717, %v721
    %v723 = vadd.f32 %v720, %v722
    %v724 = vld [vmem:[#allocation2 + $0x18] sm:$0xff]
    %v725 = vld [vmem:[#allocation2 + $0x20] sm:$0xff]
    %v726 = vld [vmem:[#allocation2 + $0x28] sm:$0xff]
    %727 = vmatprep.subr.mxu0 0.0
    %728 = vmatpush1.msra.mxu0 %v450
    %729 = vmatprep.subr.mxu0 0.0
    %730 = vmatpush1.msra.mxu0 %v449
    %731 = vmatprep.subr.mxu0 0.0
    %732 = vmatpush1.msra.mxu0 %v448
    %733 = vmatprep.subr.mxu0 0.0
    %734 = vmatpush1.msra.mxu0 %v447
    %735 = vmatprep.subr.mxu0 0.0
    %736 = vmatpush1.msra.mxu0 %v446
    %737 = vmatprep.subr.mxu0 0.0
    %738 = vmatpush1.msra.mxu0 %v445
    %739 = vmatprep.subr.mxu0 0.0
    %740 = vmatpush1.msra.mxu0 %v444
    %741 = vmatprep.subr.mxu0 0.0
    %742 = vmatpush1.msra.mxu0 %v443
    %743 = vmatprep.subr.mxu0 0.0
    %744 = vmatpush1.msra.mxu0 %v442
    %745 = vmatprep.subr.mxu0 0.0
    %746 = vmatpush1.msra.mxu0 %v441
    %747 = vmatprep.subr.mxu0 0.0
    %748 = vmatpush1.msra.mxu0 %v440
    %749 = vmatprep.subr.mxu0 0.0
    %750 = vmatpush1.msra.mxu0 %v439
    %751 = vmatprep.subr.mxu0 0.0
    %752 = vmatpush1.msra.mxu0 %v438
    %753 = vmatprep.subr.mxu0 0.0
    %754 = vmatpush1.msra.mxu0 %v437
    %755 = vmatprep.subr.mxu0 0.0
    %756 = vmatpush1.msra.mxu0 %v436
    %757 = vmatprep.subr.mxu0 0.0
    %758 = vmatpush1.msra.mxu0 %v435
    %759 = vmatprep.subr.mxu0 0.0
    %760 = vmatpush2.msra.mxu0 0.0
    %761 = vmatprep.subr.mxu0 0.0
    %762 = vmatpush2.msra.mxu0 0.0
    %763 = vmatprep.subr.mxu0 0.0
    %764 = vmatpush2.msra.mxu0 0.0
    %765 = vmatprep.subr.mxu0 0.0
    %766 = vmatpush2.msra.mxu0 0.0
    %767 = vmatprep.subr.mxu0 0.0
    %768 = vmatpush2.msra.mxu0 0.0
    %769 = vmatprep.subr.mxu0 0.0
    %770 = vmatpush2.msra.mxu0 0.0
    %771 = vmatprep.subr.mxu0 0.0
    %772 = vmatpush2.msra.mxu0 0.0
    %773 = vmatprep.subr.mxu0 0.0
    %774 = vmatpush2.msra.mxu0 0.0
    %775 = vmatprep.subr.mxu0 0.0
    %776 = vmatpush2.msra.mxu0 0.0
    %777 = vmatprep.subr.mxu0 0.0
    %778 = vmatpush2.msra.mxu0 0.0
    %779 = vmatprep.subr.mxu0 0.0
    %780 = vmatpush2.msra.mxu0 0.0
    %781 = vmatprep.subr.mxu0 0.0
    %782 = vmatpush2.msra.mxu0 0.0
    %783 = vmatprep.subr.mxu0 0.0
    %784 = vmatpush2.msra.mxu0 0.0
    %785 = vmatprep.subr.mxu0 0.0
    %786 = vmatpush2.msra.mxu0 0.0
    %787 = vmatprep.subr.mxu0 0.0
    %788 = vmatpush2.msra.mxu0 0.0
    %789 = vmatprep.subr.mxu0 0.0
    %790 = vmatpush2.msra.mxu0 0.0
    %791 = vmatprep.mubr.f32.mxu0 0.0
    %792 = vmatmul.mubr.f32.gmra.mxu0 %v723
    %v793 = vpop.f32.mrf.mxu0
    %v794 = vadd.f32 0.0, %v793
    %v795 = vpop.f32.mrf.mxu0
    %796 = vdwg.mxu0
    %797 = vmatprep.subr.mxu0 0.0
    %798 = vmatpush1.msra.mxu0 %v466
    %799 = vmatprep.subr.mxu0 0.0
    %800 = vmatpush1.msra.mxu0 %v465
    %801 = vmatprep.subr.mxu0 0.0
    %802 = vmatpush1.msra.mxu0 %v464
    %803 = vmatprep.subr.mxu0 0.0
    %804 = vmatpush1.msra.mxu0 %v463
    %805 = vmatprep.subr.mxu0 0.0
    %806 = vmatpush1.msra.mxu0 %v462
    %807 = vmatprep.subr.mxu0 0.0
    %808 = vmatpush1.msra.mxu0 %v461
    %809 = vmatprep.subr.mxu0 0.0
    %810 = vmatpush1.msra.mxu0 %v460
    %811 = vmatprep.subr.mxu0 0.0
    %812 = vmatpush1.msra.mxu0 %v459
    %813 = vmatprep.subr.mxu0 0.0
    %814 = vmatpush1.msra.mxu0 %v458
    %815 = vmatprep.subr.mxu0 0.0
    %816 = vmatpush1.msra.mxu0 %v457
    %817 = vmatprep.subr.mxu0 0.0
    %818 = vmatpush1.msra.mxu0 %v456
    %819 = vmatprep.subr.mxu0 0.0
    %820 = vmatpush1.msra.mxu0 %v455
    %821 = vmatprep.subr.mxu0 0.0
    %822 = vmatpush1.msra.mxu0 %v454
    %823 = vmatprep.subr.mxu0 0.0
    %824 = vmatpush1.msra.mxu0 %v453
    %825 = vmatprep.subr.mxu0 0.0
    %826 = vmatpush1.msra.mxu0 %v452
    %827 = vmatprep.subr.mxu0 0.0
    %828 = vmatpush1.msra.mxu0 %v451
    %829 = vmatprep.subr.mxu0 0.0
    %830 = vmatpush2.msra.mxu0 0.0
    %831 = vmatprep.subr.mxu0 0.0
    %832 = vmatpush2.msra.mxu0 0.0
    %833 = vmatprep.subr.mxu0 0.0
    %834 = vmatpush2.msra.mxu0 0.0
    %835 = vmatprep.subr.mxu0 0.0
    %836 = vmatpush2.msra.mxu0 0.0
    %837 = vmatprep.subr.mxu0 0.0
    %838 = vmatpush2.msra.mxu0 0.0
    %839 = vmatprep.subr.mxu0 0.0
    %840 = vmatpush2.msra.mxu0 0.0
    %841 = vmatprep.subr.mxu0 0.0
    %842 = vmatpush2.msra.mxu0 0.0
    %843 = vmatprep.subr.mxu0 0.0
    %844 = vmatpush2.msra.mxu0 0.0
    %845 = vmatprep.subr.mxu0 0.0
    %846 = vmatpush2.msra.mxu0 0.0
    %847 = vmatprep.subr.mxu0 0.0
    %848 = vmatpush2.msra.mxu0 0.0
    %849 = vmatprep.subr.mxu0 0.0
    %850 = vmatpush2.msra.mxu0 0.0
    %851 = vmatprep.subr.mxu0 0.0
    %852 = vmatpush2.msra.mxu0 0.0
    %853 = vmatprep.subr.mxu0 0.0
    %854 = vmatpush2.msra.mxu0 0.0
    %855 = vmatprep.subr.mxu0 0.0
    %856 = vmatpush2.msra.mxu0 0.0
    %857 = vmatprep.subr.mxu0 0.0
    %858 = vmatpush2.msra.mxu0 0.0
    %859 = vmatprep.subr.mxu0 0.0
    %860 = vmatpush2.msra.mxu0 0.0
    %861 = vmatprep.mubr.f32.mxu0 0.0
    %862 = vmatmul.mubr.f32.gmra.mxu0 %v723
    %v863 = vpop.f32.mrf.mxu0
    %v864 = vadd.f32 0.0, %v863
    %v865 = vpop.f32.mrf.mxu0
    %866 = vdwg.mxu0
    %867 = vmatprep.subr.mxu0 0.0
    %868 = vmatpush1.msra.mxu0 %v482
    %869 = vmatprep.subr.mxu0 0.0
    %870 = vmatpush1.msra.mxu0 %v481
    %871 = vmatprep.subr.mxu0 0.0
    %872 = vmatpush1.msra.mxu0 %v480
    %873 = vmatprep.subr.mxu0 0.0
    %874 = vmatpush1.msra.mxu0 %v479
    %875 = vmatprep.subr.mxu0 0.0
    %876 = vmatpush1.msra.mxu0 %v478
    %877 = vmatprep.subr.mxu0 0.0
    %878 = vmatpush1.msra.mxu0 %v477
    %879 = vmatprep.subr.mxu0 0.0
    %880 = vmatpush1.msra.mxu0 %v476
    %881 = vmatprep.subr.mxu0 0.0
    %882 = vmatpush1.msra.mxu0 %v475
    %883 = vmatprep.subr.mxu0 0.0
    %884 = vmatpush1.msra.mxu0 %v474
    %885 = vmatprep.subr.mxu0 0.0
    %886 = vmatpush1.msra.mxu0 %v473
    %887 = vmatprep.subr.mxu0 0.0
    %888 = vmatpush1.msra.mxu0 %v472
    %889 = vmatprep.subr.mxu0 0.0
    %890 = vmatpush1.msra.mxu0 %v471
    %891 = vmatprep.subr.mxu0 0.0
    %892 = vmatpush1.msra.mxu0 %v470
    %893 = vmatprep.subr.mxu0 0.0
    %894 = vmatpush1.msra.mxu0 %v469
    %895 = vmatprep.subr.mxu0 0.0
    %896 = vmatpush1.msra.mxu0 %v468
    %897 = vmatprep.subr.mxu0 0.0
    %898 = vmatpush1.msra.mxu0 %v467
    %899 = vmatprep.subr.mxu0 0.0
    %900 = vmatpush2.msra.mxu0 0.0
    %901 = vmatprep.subr.mxu0 0.0
    %902 = vmatpush2.msra.mxu0 0.0
    %903 = vmatprep.subr.mxu0 0.0
    %904 = vmatpush2.msra.mxu0 0.0
    %905 = vmatprep.subr.mxu0 0.0
    %906 = vmatpush2.msra.mxu0 0.0
    %907 = vmatprep.subr.mxu0 0.0
    %908 = vmatpush2.msra.mxu0 0.0
    %909 = vmatprep.subr.mxu0 0.0
    %910 = vmatpush2.msra.mxu0 0.0
    %911 = vmatprep.subr.mxu0 0.0
    %912 = vmatpush2.msra.mxu0 0.0
    %913 = vmatprep.subr.mxu0 0.0
    %914 = vmatpush2.msra.mxu0 0.0
    %915 = vmatprep.subr.mxu0 0.0
    %916 = vmatpush2.msra.mxu0 0.0
    %917 = vmatprep.subr.mxu0 0.0
    %918 = vmatpush2.msra.mxu0 0.0
    %919 = vmatprep.subr.mxu0 0.0
    %920 = vmatpush2.msra.mxu0 0.0
    %921 = vmatprep.subr.mxu0 0.0
    %922 = vmatpush2.msra.mxu0 0.0
    %923 = vmatprep.subr.mxu0 0.0
    %924 = vmatpush2.msra.mxu0 0.0
    %925 = vmatprep.subr.mxu0 0.0
    %926 = vmatpush2.msra.mxu0 0.0
    %927 = vmatprep.subr.mxu0 0.0
    %928 = vmatpush2.msra.mxu0 0.0
    %929 = vmatprep.subr.mxu0 0.0
    %930 = vmatpush2.msra.mxu0 0.0
    %931 = vmatprep.mubr.f32.mxu0 0.0
    %932 = vmatmul.mubr.f32.gmra.mxu0 %v723
    %v933 = vpop.f32.mrf.mxu0
    %v934 = vadd.f32 %v632, %v933
    %v935 = vpop.f32.mrf.mxu0
    %936 = vdwg.mxu0
    %v937 = vadd.f32 %v724, %v794
    %v938 = vxor.u32 %v937, 2147483648
    %v939 = vmul.f32 %v938, 1.442695
    %v940 = vpow.pop %v939
    %v941 = vadd.f32 %v940, 1.0
    %v942 = vrcp.pop %v941
    %v943 = vmul.f32 1.0, %v942
    %v944 = vadd.f32 %v725, %v864
    %v945 = vxor.u32 %v944, 2147483648
    %v946 = vmul.f32 %v945, 1.442695
    %v947 = vpow.pop %v946
    %v948 = vadd.f32 %v947, 1.0
    %v949 = vrcp.pop %v948
    %v950 = vmul.f32 1.0, %v949
    %v951 = vmul.f32 %v943, %v934
    %v952 = vadd.f32 %v726, %v951
    %v953 = vtanh.pop %v952
    %v954 = vsub.f32 %v723, %v953
    %v955 = vmul.f32 %v950, %v954
    %v956 = vadd.f32 %v953, %v955
    %v957 = vld [vmem:[#allocation2 + $0x30] sm:$0xff]
    %v958 = vld [vmem:[#allocation2 + $0x38] sm:$0xff]
    %v959 = vld [vmem:[#allocation2 + $0x40] sm:$0xff]
    %960 = vmatprep.subr.mxu0 0.0
    %961 = vmatpush1.msra.mxu0 %v450
    %962 = vmatprep.subr.mxu0 0.0
    %963 = vmatpush1.msra.mxu0 %v449
    %964 = vmatprep.subr.mxu0 0.0
    %965 = vmatpush1.msra.mxu0 %v448
    %966 = vmatprep.subr.mxu0 0.0
    %967 = vmatpush1.msra.mxu0 %v447
    %968 = vmatprep.subr.mxu0 0.0
    %969 = vmatpush1.msra.mxu0 %v446
    %970 = vmatprep.subr.mxu0 0.0
    %971 = vmatpush1.msra.mxu0 %v445
    %972 = vmatprep.subr.mxu0 0.0
    %973 = vmatpush1.msra.mxu0 %v444
    %974 = vmatprep.subr.mxu0 0.0
    %975 = vmatpush1.msra.mxu0 %v443
    %976 = vmatprep.subr.mxu0 0.0
    %977 = vmatpush1.msra.mxu0 %v442
    %978 = vmatprep.subr.mxu0 0.0
    %979 = vmatpush1.msra.mxu0 %v441
    %980 = vmatprep.subr.mxu0 0.0
    %981 = vmatpush1.msra.mxu0 %v440
    %982 = vmatprep.subr.mxu0 0.0
    %983 = vmatpush1.msra.mxu0 %v439
    %984 = vmatprep.subr.mxu0 0.0
    %985 = vmatpush1.msra.mxu0 %v438
    %986 = vmatprep.subr.mxu0 0.0
    %987 = vmatpush1.msra.mxu0 %v437
    %988 = vmatprep.subr.mxu0 0.0
    %989 = vmatpush1.msra.mxu0 %v436
    %990 = vmatprep.subr.mxu0 0.0
    %991 = vmatpush1.msra.mxu0 %v435
    %992 = vmatprep.subr.mxu0 0.0
    %993 = vmatpush2.msra.mxu0 0.0
    %994 = vmatprep.subr.mxu0 0.0
    %995 = vmatpush2.msra.mxu0 0.0
    %996 = vmatprep.subr.mxu0 0.0
    %997 = vmatpush2.msra.mxu0 0.0
    %998 = vmatprep.subr.mxu0 0.0
    %999 = vmatpush2.msra.mxu0 0.0
    %1000 = vmatprep.subr.mxu0 0.0
    %1001 = vmatpush2.msra.mxu0 0.0
    %1002 = vmatprep.subr.mxu0 0.0
    %1003 = vmatpush2.msra.mxu0 0.0
    %1004 = vmatprep.subr.mxu0 0.0
    %1005 = vmatpush2.msra.mxu0 0.0
    %1006 = vmatprep.subr.mxu0 0.0
    %1007 = vmatpush2.msra.mxu0 0.0
    %1008 = vmatprep.subr.mxu0 0.0
    %1009 = vmatpush2.msra.mxu0 0.0
    %1010 = vmatprep.subr.mxu0 0.0
    %1011 = vmatpush2.msra.mxu0 0.0
    %1012 = vmatprep.subr.mxu0 0.0
    %1013 = vmatpush2.msra.mxu0 0.0
    %1014 = vmatprep.subr.mxu0 0.0
    %1015 = vmatpush2.msra.mxu0 0.0
    %1016 = vmatprep.subr.mxu0 0.0
    %1017 = vmatpush2.msra.mxu0 0.0
    %1018 = vmatprep.subr.mxu0 0.0
    %1019 = vmatpush2.msra.mxu0 0.0
    %1020 = vmatprep.subr.mxu0 0.0
    %1021 = vmatpush2.msra.mxu0 0.0
    %1022 = vmatprep.subr.mxu0 0.0
    %1023 = vmatpush2.msra.mxu0 0.0
    %1024 = vmatprep.mubr.f32.mxu0 0.0
    %1025 = vmatmul.mubr.f32.gmra.mxu0 %v956
    %v1026 = vpop.f32.mrf.mxu0
    %v1027 = vadd.f32 0.0, %v1026
    %v1028 = vpop.f32.mrf.mxu0
    %1029 = vdwg.mxu0
    %1030 = vmatprep.subr.mxu0 0.0
    %1031 = vmatpush1.msra.mxu0 %v466
    %1032 = vmatprep.subr.mxu0 0.0
    %1033 = vmatpush1.msra.mxu0 %v465
    %1034 = vmatprep.subr.mxu0 0.0
    %1035 = vmatpush1.msra.mxu0 %v464
    %1036 = vmatprep.subr.mxu0 0.0
    %1037 = vmatpush1.msra.mxu0 %v463
    %1038 = vmatprep.subr.mxu0 0.0
    %1039 = vmatpush1.msra.mxu0 %v462
    %1040 = vmatprep.subr.mxu0 0.0
    %1041 = vmatpush1.msra.mxu0 %v461
    %1042 = vmatprep.subr.mxu0 0.0
    %1043 = vmatpush1.msra.mxu0 %v460
    %1044 = vmatprep.subr.mxu0 0.0
    %1045 = vmatpush1.msra.mxu0 %v459
    %1046 = vmatprep.subr.mxu0 0.0
    %1047 = vmatpush1.msra.mxu0 %v458
    %1048 = vmatprep.subr.mxu0 0.0
    %1049 = vmatpush1.msra.mxu0 %v457
    %1050 = vmatprep.subr.mxu0 0.0
    %1051 = vmatpush1.msra.mxu0 %v456
    %1052 = vmatprep.subr.mxu0 0.0
    %1053 = vmatpush1.msra.mxu0 %v455
    %1054 = vmatprep.subr.mxu0 0.0
    %1055 = vmatpush1.msra.mxu0 %v454
    %1056 = vmatprep.subr.mxu0 0.0
    %1057 = vmatpush1.msra.mxu0 %v453
    %1058 = vmatprep.subr.mxu0 0.0
    %1059 = vmatpush1.msra.mxu0 %v452
    %1060 = vmatprep.subr.mxu0 0.0
    %1061 = vmatpush1.msra.mxu0 %v451
    %1062 = vmatprep.subr.mxu0 0.0
    %1063 = vmatpush2.msra.mxu0 0.0
    %1064 = vmatprep.subr.mxu0 0.0
    %1065 = vmatpush2.msra.mxu0 0.0
    %1066 = vmatprep.subr.mxu0 0.0
    %1067 = vmatpush2.msra.mxu0 0.0
    %1068 = vmatprep.subr.mxu0 0.0
    %1069 = vmatpush2.msra.mxu0 0.0
    %1070 = vmatprep.subr.mxu0 0.0
    %1071 = vmatpush2.msra.mxu0 0.0
    %1072 = vmatprep.subr.mxu0 0.0
    %1073 = vmatpush2.msra.mxu0 0.0
    %1074 = vmatprep.subr.mxu0 0.0
    %1075 = vmatpush2.msra.mxu0 0.0
    %1076 = vmatprep.subr.mxu0 0.0
    %1077 = vmatpush2.msra.mxu0 0.0
    %1078 = vmatprep.subr.mxu0 0.0
    %1079 = vmatpush2.msra.mxu0 0.0
    %1080 = vmatprep.subr.mxu0 0.0
    %1081 = vmatpush2.msra.mxu0 0.0
    %1082 = vmatprep.subr.mxu0 0.0
    %1083 = vmatpush2.msra.mxu0 0.0
    %1084 = vmatprep.subr.mxu0 0.0
    %1085 = vmatpush2.msra.mxu0 0.0
    %1086 = vmatprep.subr.mxu0 0.0
    %1087 = vmatpush2.msra.mxu0 0.0
    %1088 = vmatprep.subr.mxu0 0.0
    %1089 = vmatpush2.msra.mxu0 0.0
    %1090 = vmatprep.subr.mxu0 0.0
    %1091 = vmatpush2.msra.mxu0 0.0
    %1092 = vmatprep.subr.mxu0 0.0
    %1093 = vmatpush2.msra.mxu0 0.0
    %1094 = vmatprep.mubr.f32.mxu0 0.0
    %1095 = vmatmul.mubr.f32.gmra.mxu0 %v956
    %v1096 = vpop.f32.mrf.mxu0
    %v1097 = vadd.f32 0.0, %v1096
    %v1098 = vpop.f32.mrf.mxu0
    %1099 = vdwg.mxu0
    %1100 = vmatprep.subr.mxu0 0.0
    %1101 = vmatpush1.msra.mxu0 %v482
    %1102 = vmatprep.subr.mxu0 0.0
    %1103 = vmatpush1.msra.mxu0 %v481
    %1104 = vmatprep.subr.mxu0 0.0
    %1105 = vmatpush1.msra.mxu0 %v480
    %1106 = vmatprep.subr.mxu0 0.0
    %1107 = vmatpush1.msra.mxu0 %v479
    %1108 = vmatprep.subr.mxu0 0.0
    %1109 = vmatpush1.msra.mxu0 %v478
    %1110 = vmatprep.subr.mxu0 0.0
    %1111 = vmatpush1.msra.mxu0 %v477
    %1112 = vmatprep.subr.mxu0 0.0
    %1113 = vmatpush1.msra.mxu0 %v476
    %1114 = vmatprep.subr.mxu0 0.0
    %1115 = vmatpush1.msra.mxu0 %v475
    %1116 = vmatprep.subr.mxu0 0.0
    %1117 = vmatpush1.msra.mxu0 %v474
    %1118 = vmatprep.subr.mxu0 0.0
    %1119 = vmatpush1.msra.mxu0 %v473
    %1120 = vmatprep.subr.mxu0 0.0
    %1121 = vmatpush1.msra.mxu0 %v472
    %1122 = vmatprep.subr.mxu0 0.0
    %1123 = vmatpush1.msra.mxu0 %v471
    %1124 = vmatprep.subr.mxu0 0.0
    %1125 = vmatpush1.msra.mxu0 %v470
    %1126 = vmatprep.subr.mxu0 0.0
    %1127 = vmatpush1.msra.mxu0 %v469
    %1128 = vmatprep.subr.mxu0 0.0
    %1129 = vmatpush1.msra.mxu0 %v468
    %1130 = vmatprep.subr.mxu0 0.0
    %1131 = vmatpush1.msra.mxu0 %v467
    %1132 = vmatprep.subr.mxu0 0.0
    %1133 = vmatpush2.msra.mxu0 0.0
    %1134 = vmatprep.subr.mxu0 0.0
    %1135 = vmatpush2.msra.mxu0 0.0
    %1136 = vmatprep.subr.mxu0 0.0
    %1137 = vmatpush2.msra.mxu0 0.0
    %1138 = vmatprep.subr.mxu0 0.0
    %1139 = vmatpush2.msra.mxu0 0.0
    %1140 = vmatprep.subr.mxu0 0.0
    %1141 = vmatpush2.msra.mxu0 0.0
    %1142 = vmatprep.subr.mxu0 0.0
    %1143 = vmatpush2.msra.mxu0 0.0
    %1144 = vmatprep.subr.mxu0 0.0
    %1145 = vmatpush2.msra.mxu0 0.0
    %1146 = vmatprep.subr.mxu0 0.0
    %1147 = vmatpush2.msra.mxu0 0.0
    %1148 = vmatprep.subr.mxu0 0.0
    %1149 = vmatpush2.msra.mxu0 0.0
    %1150 = vmatprep.subr.mxu0 0.0
    %1151 = vmatpush2.msra.mxu0 0.0
    %1152 = vmatprep.subr.mxu0 0.0
    %1153 = vmatpush2.msra.mxu0 0.0
    %1154 = vmatprep.subr.mxu0 0.0
    %1155 = vmatpush2.msra.mxu0 0.0
    %1156 = vmatprep.subr.mxu0 0.0
    %1157 = vmatpush2.msra.mxu0 0.0
    %1158 = vmatprep.subr.mxu0 0.0
    %1159 = vmatpush2.msra.mxu0 0.0
    %1160 = vmatprep.subr.mxu0 0.0
    %1161 = vmatpush2.msra.mxu0 0.0
    %1162 = vmatprep.subr.mxu0 0.0
    %1163 = vmatpush2.msra.mxu0 0.0
    %1164 = vmatprep.mubr.f32.mxu0 0.0
    %1165 = vmatmul.mubr.f32.gmra.mxu0 %v956
    %v1166 = vpop.f32.mrf.mxu0
    %v1167 = vadd.f32 %v632, %v1166
    %v1168 = vpop.f32.mrf.mxu0
    %1169 = vdwg.mxu0
    %v1170 = vadd.f32 %v957, %v1027
    %v1171 = vxor.u32 %v1170, 2147483648
    %v1172 = vmul.f32 %v1171, 1.442695
    %v1173 = vpow.pop %v1172
    %v1174 = vadd.f32 %v1173, 1.0
    %v1175 = vrcp.pop %v1174
    %v1176 = vmul.f32 1.0, %v1175
    %v1177 = vadd.f32 %v958, %v1097
    %v1178 = vxor.u32 %v1177, 2147483648
    %v1179 = vmul.f32 %v1178, 1.442695
    %v1180 = vpow.pop %v1179
    %v1181 = vadd.f32 %v1180, 1.0
    %v1182 = vrcp.pop %v1181
    %v1183 = vmul.f32 1.0, %v1182
    %v1184 = vmul.f32 %v1176, %v1167
    %v1185 = vadd.f32 %v959, %v1184
    %v1186 = vtanh.pop %v1185
    %v1187 = vsub.f32 %v956, %v1186
    %v1188 = vmul.f32 %v1183, %v1187
    %v1189 = vadd.f32 %v1186, %v1188
    %v1190 = vld [vmem:[#allocation2 + $0x48] sm:$0xff]
    %v1191 = vld [vmem:[#allocation2 + $0x50] sm:$0xff]
    %v1192 = vld [vmem:[#allocation2 + $0x58] sm:$0xff]
    %1193 = vmatprep.subr.mxu0 0.0
    %1194 = vmatpush1.msra.mxu0 %v450
    %1195 = vmatprep.subr.mxu0 0.0
    %1196 = vmatpush1.msra.mxu0 %v449
    %1197 = vmatprep.subr.mxu0 0.0
    %1198 = vmatpush1.msra.mxu0 %v448
    %1199 = vmatprep.subr.mxu0 0.0
    %1200 = vmatpush1.msra.mxu0 %v447
    %1201 = vmatprep.subr.mxu0 0.0
    %1202 = vmatpush1.msra.mxu0 %v446
    %1203 = vmatprep.subr.mxu0 0.0
    %1204 = vmatpush1.msra.mxu0 %v445
    %1205 = vmatprep.subr.mxu0 0.0
    %1206 = vmatpush1.msra.mxu0 %v444
    %1207 = vmatprep.subr.mxu0 0.0
    %1208 = vmatpush1.msra.mxu0 %v443
    %1209 = vmatprep.subr.mxu0 0.0
    %1210 = vmatpush1.msra.mxu0 %v442
    %1211 = vmatprep.subr.mxu0 0.0
    %1212 = vmatpush1.msra.mxu0 %v441
    %1213 = vmatprep.subr.mxu0 0.0
    %1214 = vmatpush1.msra.mxu0 %v440
    %1215 = vmatprep.subr.mxu0 0.0
    %1216 = vmatpush1.msra.mxu0 %v439
    %1217 = vmatprep.subr.mxu0 0.0
    %1218 = vmatpush1.msra.mxu0 %v438
    %1219 = vmatprep.subr.mxu0 0.0
    %1220 = vmatpush1.msra.mxu0 %v437
    %1221 = vmatprep.subr.mxu0 0.0
    %1222 = vmatpush1.msra.mxu0 %v436
    %1223 = vmatprep.subr.mxu0 0.0
    %1224 = vmatpush1.msra.mxu0 %v435
    %1225 = vmatprep.subr.mxu0 0.0
    %1226 = vmatpush2.msra.mxu0 0.0
    %1227 = vmatprep.subr.mxu0 0.0
    %1228 = vmatpush2.msra.mxu0 0.0
    %1229 = vmatprep.subr.mxu0 0.0
    %1230 = vmatpush2.msra.mxu0 0.0
    %1231 = vmatprep.subr.mxu0 0.0
    %1232 = vmatpush2.msra.mxu0 0.0
    %1233 = vmatprep.subr.mxu0 0.0
    %1234 = vmatpush2.msra.mxu0 0.0
    %1235 = vmatprep.subr.mxu0 0.0
    %1236 = vmatpush2.msra.mxu0 0.0
    %1237 = vmatprep.subr.mxu0 0.0
    %1238 = vmatpush2.msra.mxu0 0.0
    %1239 = vmatprep.subr.mxu0 0.0
    %1240 = vmatpush2.msra.mxu0 0.0
    %1241 = vmatprep.subr.mxu0 0.0
    %1242 = vmatpush2.msra.mxu0 0.0
    %1243 = vmatprep.subr.mxu0 0.0
    %1244 = vmatpush2.msra.mxu0 0.0
    %1245 = vmatprep.subr.mxu0 0.0
    %1246 = vmatpush2.msra.mxu0 0.0
    %1247 = vmatprep.subr.mxu0 0.0
    %1248 = vmatpush2.msra.mxu0 0.0
    %1249 = vmatprep.subr.mxu0 0.0
    %1250 = vmatpush2.msra.mxu0 0.0
    %1251 = vmatprep.subr.mxu0 0.0
    %1252 = vmatpush2.msra.mxu0 0.0
    %1253 = vmatprep.subr.mxu0 0.0
    %1254 = vmatpush2.msra.mxu0 0.0
    %1255 = vmatprep.subr.mxu0 0.0
    %1256 = vmatpush2.msra.mxu0 0.0
    %1257 = vmatprep.mubr.f32.mxu0 0.0
    %1258 = vmatmul.mubr.f32.gmra.mxu0 %v1189
    %v1259 = vpop.f32.mrf.mxu0
    %v1260 = vadd.f32 0.0, %v1259
    %v1261 = vpop.f32.mrf.mxu0
    %1262 = vdwg.mxu0
    %1263 = vmatprep.subr.mxu0 0.0
    %1264 = vmatpush1.msra.mxu0 %v466
    %1265 = vmatprep.subr.mxu0 0.0
    %1266 = vmatpush1.msra.mxu0 %v465
    %1267 = vmatprep.subr.mxu0 0.0
    %1268 = vmatpush1.msra.mxu0 %v464
    %1269 = vmatprep.subr.mxu0 0.0
    %1270 = vmatpush1.msra.mxu0 %v463
    %1271 = vmatprep.subr.mxu0 0.0
    %1272 = vmatpush1.msra.mxu0 %v462
    %1273 = vmatprep.subr.mxu0 0.0
    %1274 = vmatpush1.msra.mxu0 %v461
    %1275 = vmatprep.subr.mxu0 0.0
    %1276 = vmatpush1.msra.mxu0 %v460
    %1277 = vmatprep.subr.mxu0 0.0
    %1278 = vmatpush1.msra.mxu0 %v459
    %1279 = vmatprep.subr.mxu0 0.0
    %1280 = vmatpush1.msra.mxu0 %v458
    %1281 = vmatprep.subr.mxu0 0.0
    %1282 = vmatpush1.msra.mxu0 %v457
    %1283 = vmatprep.subr.mxu0 0.0
    %1284 = vmatpush1.msra.mxu0 %v456
    %1285 = vmatprep.subr.mxu0 0.0
    %1286 = vmatpush1.msra.mxu0 %v455
    %1287 = vmatprep.subr.mxu0 0.0
    %1288 = vmatpush1.msra.mxu0 %v454
    %1289 = vmatprep.subr.mxu0 0.0
    %1290 = vmatpush1.msra.mxu0 %v453
    %1291 = vmatprep.subr.mxu0 0.0
    %1292 = vmatpush1.msra.mxu0 %v452
    %1293 = vmatprep.subr.mxu0 0.0
    %1294 = vmatpush1.msra.mxu0 %v451
    %1295 = vmatprep.subr.mxu0 0.0
    %1296 = vmatpush2.msra.mxu0 0.0
    %1297 = vmatprep.subr.mxu0 0.0
    %1298 = vmatpush2.msra.mxu0 0.0
    %1299 = vmatprep.subr.mxu0 0.0
    %1300 = vmatpush2.msra.mxu0 0.0
    %1301 = vmatprep.subr.mxu0 0.0
    %1302 = vmatpush2.msra.mxu0 0.0
    %1303 = vmatprep.subr.mxu0 0.0
    %1304 = vmatpush2.msra.mxu0 0.0
    %1305 = vmatprep.subr.mxu0 0.0
    %1306 = vmatpush2.msra.mxu0 0.0
    %1307 = vmatprep.subr.mxu0 0.0
    %1308 = vmatpush2.msra.mxu0 0.0
    %1309 = vmatprep.subr.mxu0 0.0
    %1310 = vmatpush2.msra.mxu0 0.0
    %1311 = vmatprep.subr.mxu0 0.0
    %1312 = vmatpush2.msra.mxu0 0.0
    %1313 = vmatprep.subr.mxu0 0.0
    %1314 = vmatpush2.msra.mxu0 0.0
    %1315 = vmatprep.subr.mxu0 0.0
    %1316 = vmatpush2.msra.mxu0 0.0
    %1317 = vmatprep.subr.mxu0 0.0
    %1318 = vmatpush2.msra.mxu0 0.0
    %1319 = vmatprep.subr.mxu0 0.0
    %1320 = vmatpush2.msra.mxu0 0.0
    %1321 = vmatprep.subr.mxu0 0.0
    %1322 = vmatpush2.msra.mxu0 0.0
    %1323 = vmatprep.subr.mxu0 0.0
    %1324 = vmatpush2.msra.mxu0 0.0
    %1325 = vmatprep.subr.mxu0 0.0
    %1326 = vmatpush2.msra.mxu0 0.0
    %1327 = vmatprep.mubr.f32.mxu0 0.0
    %1328 = vmatmul.mubr.f32.gmra.mxu0 %v1189
    %v1329 = vpop.f32.mrf.mxu0
    %v1330 = vadd.f32 0.0, %v1329
    %v1331 = vpop.f32.mrf.mxu0
    %1332 = vdwg.mxu0
    %1333 = vmatprep.subr.mxu0 0.0
    %1334 = vmatpush1.msra.mxu0 %v482
    %1335 = vmatprep.subr.mxu0 0.0
    %1336 = vmatpush1.msra.mxu0 %v481
    %1337 = vmatprep.subr.mxu0 0.0
    %1338 = vmatpush1.msra.mxu0 %v480
    %1339 = vmatprep.subr.mxu0 0.0
    %1340 = vmatpush1.msra.mxu0 %v479
    %1341 = vmatprep.subr.mxu0 0.0
    %1342 = vmatpush1.msra.mxu0 %v478
    %1343 = vmatprep.subr.mxu0 0.0
    %1344 = vmatpush1.msra.mxu0 %v477
    %1345 = vmatprep.subr.mxu0 0.0
    %1346 = vmatpush1.msra.mxu0 %v476
    %1347 = vmatprep.subr.mxu0 0.0
    %1348 = vmatpush1.msra.mxu0 %v475
    %1349 = vmatprep.subr.mxu0 0.0
    %1350 = vmatpush1.msra.mxu0 %v474
    %1351 = vmatprep.subr.mxu0 0.0
    %1352 = vmatpush1.msra.mxu0 %v473
    %1353 = vmatprep.subr.mxu0 0.0
    %1354 = vmatpush1.msra.mxu0 %v472
    %1355 = vmatprep.subr.mxu0 0.0
    %1356 = vmatpush1.msra.mxu0 %v471
    %1357 = vmatprep.subr.mxu0 0.0
    %1358 = vmatpush1.msra.mxu0 %v470
    %1359 = vmatprep.subr.mxu0 0.0
    %1360 = vmatpush1.msra.mxu0 %v469
    %1361 = vmatprep.subr.mxu0 0.0
    %1362 = vmatpush1.msra.mxu0 %v468
    %1363 = vmatprep.subr.mxu0 0.0
    %1364 = vmatpush1.msra.mxu0 %v467
    %1365 = vmatprep.subr.mxu0 0.0
    %1366 = vmatpush2.msra.mxu0 0.0
    %1367 = vmatprep.subr.mxu0 0.0
    %1368 = vmatpush2.msra.mxu0 0.0
    %1369 = vmatprep.subr.mxu0 0.0
    %1370 = vmatpush2.msra.mxu0 0.0
    %1371 = vmatprep.subr.mxu0 0.0
    %1372 = vmatpush2.msra.mxu0 0.0
    %1373 = vmatprep.subr.mxu0 0.0
    %1374 = vmatpush2.msra.mxu0 0.0
    %1375 = vmatprep.subr.mxu0 0.0
    %1376 = vmatpush2.msra.mxu0 0.0
    %1377 = vmatprep.subr.mxu0 0.0
    %1378 = vmatpush2.msra.mxu0 0.0
    %1379 = vmatprep.subr.mxu0 0.0
    %1380 = vmatpush2.msra.mxu0 0.0
    %1381 = vmatprep.subr.mxu0 0.0
    %1382 = vmatpush2.msra.mxu0 0.0
    %1383 = vmatprep.subr.mxu0 0.0
    %1384 = vmatpush2.msra.mxu0 0.0
    %1385 = vmatprep.subr.mxu0 0.0
    %1386 = vmatpush2.msra.mxu0 0.0
    %1387 = vmatprep.subr.mxu0 0.0
    %1388 = vmatpush2.msra.mxu0 0.0
    %1389 = vmatprep.subr.mxu0 0.0
    %1390 = vmatpush2.msra.mxu0 0.0
    %1391 = vmatprep.subr.mxu0 0.0
    %1392 = vmatpush2.msra.mxu0 0.0
    %1393 = vmatprep.subr.mxu0 0.0
    %1394 = vmatpush2.msra.mxu0 0.0
    %1395 = vmatprep.subr.mxu0 0.0
    %1396 = vmatpush2.msra.mxu0 0.0
    %1397 = vmatprep.mubr.f32.mxu0 0.0
    %1398 = vmatmul.mubr.f32.gmra.mxu0 %v1189
    %v1399 = vpop.f32.mrf.mxu0
    %v1400 = vadd.f32 %v632, %v1399
    %v1401 = vpop.f32.mrf.mxu0
    %1402 = vdwg.mxu0
    %v1403 = vadd.f32 %v1190, %v1260
    %v1404 = vxor.u32 %v1403, 2147483648
    %v1405 = vmul.f32 %v1404, 1.442695
    %v1406 = vpow.pop %v1405
    %v1407 = vadd.f32 %v1406, 1.0
    %v1408 = vrcp.pop %v1407
    %v1409 = vmul.f32 1.0, %v1408
    %v1410 = vadd.f32 %v1191, %v1330
    %v1411 = vxor.u32 %v1410, 2147483648
    %v1412 = vmul.f32 %v1411, 1.442695
    %v1413 = vpow.pop %v1412
    %v1414 = vadd.f32 %v1413, 1.0
    %v1415 = vrcp.pop %v1414
    %v1416 = vmul.f32 1.0, %v1415
    %v1417 = vmul.f32 %v1409, %v1400
    %v1418 = vadd.f32 %v1192, %v1417
    %v1419 = vtanh.pop %v1418
    %v1420 = vsub.f32 %v1189, %v1419
    %v1421 = vmul.f32 %v1416, %v1420
    %v1422 = vadd.f32 %v1419, %v1421
    %v1423 = vld [vmem:[#allocation2 + $0x60] sm:$0xff]
    %v1424 = vld [vmem:[#allocation2 + $0x68] sm:$0xff]
    %v1425 = vld [vmem:[#allocation2 + $0x70] sm:$0xff]
    %1426 = vmatprep.subr.mxu0 0.0
    %1427 = vmatpush1.msra.mxu0 %v450
    %1428 = vmatprep.subr.mxu0 0.0
    %1429 = vmatpush1.msra.mxu0 %v449
    %1430 = vmatprep.subr.mxu0 0.0
    %1431 = vmatpush1.msra.mxu0 %v448
    %1432 = vmatprep.subr.mxu0 0.0
    %1433 = vmatpush1.msra.mxu0 %v447
    %1434 = vmatprep.subr.mxu0 0.0
    %1435 = vmatpush1.msra.mxu0 %v446
    %1436 = vmatprep.subr.mxu0 0.0
    %1437 = vmatpush1.msra.mxu0 %v445
    %1438 = vmatprep.subr.mxu0 0.0
    %1439 = vmatpush1.msra.mxu0 %v444
    %1440 = vmatprep.subr.mxu0 0.0
    %1441 = vmatpush1.msra.mxu0 %v443
    %1442 = vmatprep.subr.mxu0 0.0
    %1443 = vmatpush1.msra.mxu0 %v442
    %1444 = vmatprep.subr.mxu0 0.0
    %1445 = vmatpush1.msra.mxu0 %v441
    %1446 = vmatprep.subr.mxu0 0.0
    %1447 = vmatpush1.msra.mxu0 %v440
    %1448 = vmatprep.subr.mxu0 0.0
    %1449 = vmatpush1.msra.mxu0 %v439
    %1450 = vmatprep.subr.mxu0 0.0
    %1451 = vmatpush1.msra.mxu0 %v438
    %1452 = vmatprep.subr.mxu0 0.0
    %1453 = vmatpush1.msra.mxu0 %v437
    %1454 = vmatprep.subr.mxu0 0.0
    %1455 = vmatpush1.msra.mxu0 %v436
    %1456 = vmatprep.subr.mxu0 0.0
    %1457 = vmatpush1.msra.mxu0 %v435
    %1458 = vmatprep.subr.mxu0 0.0
    %1459 = vmatpush2.msra.mxu0 0.0
    %1460 = vmatprep.subr.mxu0 0.0
    %1461 = vmatpush2.msra.mxu0 0.0
    %1462 = vmatprep.subr.mxu0 0.0
    %1463 = vmatpush2.msra.mxu0 0.0
    %1464 = vmatprep.subr.mxu0 0.0
    %1465 = vmatpush2.msra.mxu0 0.0
    %1466 = vmatprep.subr.mxu0 0.0
    %1467 = vmatpush2.msra.mxu0 0.0
    %1468 = vmatprep.subr.mxu0 0.0
    %1469 = vmatpush2.msra.mxu0 0.0
    %1470 = vmatprep.subr.mxu0 0.0
    %1471 = vmatpush2.msra.mxu0 0.0
    %1472 = vmatprep.subr.mxu0 0.0
    %1473 = vmatpush2.msra.mxu0 0.0
    %1474 = vmatprep.subr.mxu0 0.0
    %1475 = vmatpush2.msra.mxu0 0.0
    %1476 = vmatprep.subr.mxu0 0.0
    %1477 = vmatpush2.msra.mxu0 0.0
    %1478 = vmatprep.subr.mxu0 0.0
    %1479 = vmatpush2.msra.mxu0 0.0
    %1480 = vmatprep.subr.mxu0 0.0
    %1481 = vmatpush2.msra.mxu0 0.0
    %1482 = vmatprep.subr.mxu0 0.0
    %1483 = vmatpush2.msra.mxu0 0.0
    %1484 = vmatprep.subr.mxu0 0.0
    %1485 = vmatpush2.msra.mxu0 0.0
    %1486 = vmatprep.subr.mxu0 0.0
    %1487 = vmatpush2.msra.mxu0 0.0
    %1488 = vmatprep.subr.mxu0 0.0
    %1489 = vmatpush2.msra.mxu0 0.0
    %1490 = vmatprep.mubr.f32.mxu0 0.0
    %1491 = vmatmul.mubr.f32.gmra.mxu0 %v1422
    %v1492 = vpop.f32.mrf.mxu0
    %v1493 = vadd.f32 0.0, %v1492
    %v1494 = vpop.f32.mrf.mxu0
    %1495 = vdwg.mxu0
    %1496 = vmatprep.subr.mxu0 0.0
    %1497 = vmatpush1.msra.mxu0 %v466
    %1498 = vmatprep.subr.mxu0 0.0
    %1499 = vmatpush1.msra.mxu0 %v465
    %1500 = vmatprep.subr.mxu0 0.0
    %1501 = vmatpush1.msra.mxu0 %v464
    %1502 = vmatprep.subr.mxu0 0.0
    %1503 = vmatpush1.msra.mxu0 %v463
    %1504 = vmatprep.subr.mxu0 0.0
    %1505 = vmatpush1.msra.mxu0 %v462
    %1506 = vmatprep.subr.mxu0 0.0
    %1507 = vmatpush1.msra.mxu0 %v461
    %1508 = vmatprep.subr.mxu0 0.0
    %1509 = vmatpush1.msra.mxu0 %v460
    %1510 = vmatprep.subr.mxu0 0.0
    %1511 = vmatpush1.msra.mxu0 %v459
    %1512 = vmatprep.subr.mxu0 0.0
    %1513 = vmatpush1.msra.mxu0 %v458
    %1514 = vmatprep.subr.mxu0 0.0
    %1515 = vmatpush1.msra.mxu0 %v457
    %1516 = vmatprep.subr.mxu0 0.0
    %1517 = vmatpush1.msra.mxu0 %v456
    %1518 = vmatprep.subr.mxu0 0.0
    %1519 = vmatpush1.msra.mxu0 %v455
    %1520 = vmatprep.subr.mxu0 0.0
    %1521 = vmatpush1.msra.mxu0 %v454
    %1522 = vmatprep.subr.mxu0 0.0
    %1523 = vmatpush1.msra.mxu0 %v453
    %1524 = vmatprep.subr.mxu0 0.0
    %1525 = vmatpush1.msra.mxu0 %v452
    %1526 = vmatprep.subr.mxu0 0.0
    %1527 = vmatpush1.msra.mxu0 %v451
    %1528 = vmatprep.subr.mxu0 0.0
    %1529 = vmatpush2.msra.mxu0 0.0
    %1530 = vmatprep.subr.mxu0 0.0
    %1531 = vmatpush2.msra.mxu0 0.0
    %1532 = vmatprep.subr.mxu0 0.0
    %1533 = vmatpush2.msra.mxu0 0.0
    %1534 = vmatprep.subr.mxu0 0.0
    %1535 = vmatpush2.msra.mxu0 0.0
    %1536 = vmatprep.subr.mxu0 0.0
    %1537 = vmatpush2.msra.mxu0 0.0
    %1538 = vmatprep.subr.mxu0 0.0
    %1539 = vmatpush2.msra.mxu0 0.0
    %1540 = vmatprep.subr.mxu0 0.0
    %1541 = vmatpush2.msra.mxu0 0.0
    %1542 = vmatprep.subr.mxu0 0.0
    %1543 = vmatpush2.msra.mxu0 0.0
    %1544 = vmatprep.subr.mxu0 0.0
    %1545 = vmatpush2.msra.mxu0 0.0
    %1546 = vmatprep.subr.mxu0 0.0
    %1547 = vmatpush2.msra.mxu0 0.0
    %1548 = vmatprep.subr.mxu0 0.0
    %1549 = vmatpush2.msra.mxu0 0.0
    %1550 = vmatprep.subr.mxu0 0.0
    %1551 = vmatpush2.msra.mxu0 0.0
    %1552 = vmatprep.subr.mxu0 0.0
    %1553 = vmatpush2.msra.mxu0 0.0
    %1554 = vmatprep.subr.mxu0 0.0
    %1555 = vmatpush2.msra.mxu0 0.0
    %1556 = vmatprep.subr.mxu0 0.0
    %1557 = vmatpush2.msra.mxu0 0.0
    %1558 = vmatprep.subr.mxu0 0.0
    %1559 = vmatpush2.msra.mxu0 0.0
    %1560 = vmatprep.mubr.f32.mxu0 0.0
    %1561 = vmatmul.mubr.f32.gmra.mxu0 %v1422
    %v1562 = vpop.f32.mrf.mxu0
    %v1563 = vadd.f32 0.0, %v1562
    %v1564 = vpop.f32.mrf.mxu0
    %1565 = vdwg.mxu0
    %1566 = vmatprep.subr.mxu0 0.0
    %1567 = vmatpush1.msra.mxu0 %v482
    %1568 = vmatprep.subr.mxu0 0.0
    %1569 = vmatpush1.msra.mxu0 %v481
    %1570 = vmatprep.subr.mxu0 0.0
    %1571 = vmatpush1.msra.mxu0 %v480
    %1572 = vmatprep.subr.mxu0 0.0
    %1573 = vmatpush1.msra.mxu0 %v479
    %1574 = vmatprep.subr.mxu0 0.0
    %1575 = vmatpush1.msra.mxu0 %v478
    %1576 = vmatprep.subr.mxu0 0.0
    %1577 = vmatpush1.msra.mxu0 %v477
    %1578 = vmatprep.subr.mxu0 0.0
    %1579 = vmatpush1.msra.mxu0 %v476
    %1580 = vmatprep.subr.mxu0 0.0
    %1581 = vmatpush1.msra.mxu0 %v475
    %1582 = vmatprep.subr.mxu0 0.0
    %1583 = vmatpush1.msra.mxu0 %v474
    %1584 = vmatprep.subr.mxu0 0.0
    %1585 = vmatpush1.msra.mxu0 %v473
    %1586 = vmatprep.subr.mxu0 0.0
    %1587 = vmatpush1.msra.mxu0 %v472
    %1588 = vmatprep.subr.mxu0 0.0
    %1589 = vmatpush1.msra.mxu0 %v471
    %1590 = vmatprep.subr.mxu0 0.0
    %1591 = vmatpush1.msra.mxu0 %v470
    %1592 = vmatprep.subr.mxu0 0.0
    %1593 = vmatpush1.msra.mxu0 %v469
    %1594 = vmatprep.subr.mxu0 0.0
    %1595 = vmatpush1.msra.mxu0 %v468
    %1596 = vmatprep.subr.mxu0 0.0
    %1597 = vmatpush1.msra.mxu0 %v467
    %1598 = vmatprep.subr.mxu0 0.0
    %1599 = vmatpush2.msra.mxu0 0.0
    %1600 = vmatprep.subr.mxu0 0.0
    %1601 = vmatpush2.msra.mxu0 0.0
    %1602 = vmatprep.subr.mxu0 0.0
    %1603 = vmatpush2.msra.mxu0 0.0
    %1604 = vmatprep.subr.mxu0 0.0
    %1605 = vmatpush2.msra.mxu0 0.0
    %1606 = vmatprep.subr.mxu0 0.0
    %1607 = vmatpush2.msra.mxu0 0.0
    %1608 = vmatprep.subr.mxu0 0.0
    %1609 = vmatpush2.msra.mxu0 0.0
    %1610 = vmatprep.subr.mxu0 0.0
    %1611 = vmatpush2.msra.mxu0 0.0
    %1612 = vmatprep.subr.mxu0 0.0
    %1613 = vmatpush2.msra.mxu0 0.0
    %1614 = vmatprep.subr.mxu0 0.0
    %1615 = vmatpush2.msra.mxu0 0.0
    %1616 = vmatprep.subr.mxu0 0.0
    %1617 = vmatpush2.msra.mxu0 0.0
    %1618 = vmatprep.subr.mxu0 0.0
    %1619 = vmatpush2.msra.mxu0 0.0
    %1620 = vmatprep.subr.mxu0 0.0
    %1621 = vmatpush2.msra.mxu0 0.0
    %1622 = vmatprep.subr.mxu0 0.0
    %1623 = vmatpush2.msra.mxu0 0.0
    %1624 = vmatprep.subr.mxu0 0.0
    %1625 = vmatpush2.msra.mxu0 0.0
    %1626 = vmatprep.subr.mxu0 0.0
    %1627 = vmatpush2.msra.mxu0 0.0
    %1628 = vmatprep.subr.mxu0 0.0
    %1629 = vmatpush2.msra.mxu0 0.0
    %1630 = vmatprep.mubr.f32.mxu0 0.0
    %1631 = vmatmul.mubr.f32.gmra.mxu0 %v1422
    %v1632 = vpop.f32.mrf.mxu0
    %v1633 = vadd.f32 %v632, %v1632
    %v1634 = vpop.f32.mrf.mxu0
    %1635 = vdwg.mxu0
    %v1636 = vadd.f32 %v1423, %v1493
    %v1637 = vxor.u32 %v1636, 2147483648
    %v1638 = vmul.f32 %v1637, 1.442695
    %v1639 = vpow.pop %v1638
    %v1640 = vadd.f32 %v1639, 1.0
    %v1641 = vrcp.pop %v1640
    %v1642 = vmul.f32 1.0, %v1641
    %v1643 = vadd.f32 %v1424, %v1563
    %v1644 = vxor.u32 %v1643, 2147483648
    %v1645 = vmul.f32 %v1644, 1.442695
    %v1646 = vpow.pop %v1645
    %v1647 = vadd.f32 %v1646, 1.0
    %v1648 = vrcp.pop %v1647
    %v1649 = vmul.f32 1.0, %v1648
    %v1650 = vmul.f32 %v1642, %v1633
    %v1651 = vadd.f32 %v1425, %v1650
    %v1652 = vtanh.pop %v1651
    %v1653 = vsub.f32 %v1422, %v1652
    %v1654 = vmul.f32 %v1649, %v1653
    %v1655 = vadd.f32 %v1652, %v1654
    %v1656 = vld [vmem:[#allocation2 + $0x78] sm:$0xff]
    %v1657 = vld [vmem:[#allocation2 + $0x80] sm:$0xff]
    %v1658 = vld [vmem:[#allocation2 + $0x88] sm:$0xff]
    %1659 = vmatprep.subr.mxu0 0.0
    %1660 = vmatpush1.msra.mxu0 %v450
    %1661 = vmatprep.subr.mxu0 0.0
    %1662 = vmatpush1.msra.mxu0 %v449
    %1663 = vmatprep.subr.mxu0 0.0
    %1664 = vmatpush1.msra.mxu0 %v448
    %1665 = vmatprep.subr.mxu0 0.0
    %1666 = vmatpush1.msra.mxu0 %v447
    %1667 = vmatprep.subr.mxu0 0.0
    %1668 = vmatpush1.msra.mxu0 %v446
    %1669 = vmatprep.subr.mxu0 0.0
    %1670 = vmatpush1.msra.mxu0 %v445
    %1671 = vmatprep.subr.mxu0 0.0
    %1672 = vmatpush1.msra.mxu0 %v444
    %1673 = vmatprep.subr.mxu0 0.0
    %1674 = vmatpush1.msra.mxu0 %v443
    %1675 = vmatprep.subr.mxu0 0.0
    %1676 = vmatpush1.msra.mxu0 %v442
    %1677 = vmatprep.subr.mxu0 0.0
    %1678 = vmatpush1.msra.mxu0 %v441
    %1679 = vmatprep.subr.mxu0 0.0
    %1680 = vmatpush1.msra.mxu0 %v440
    %1681 = vmatprep.subr.mxu0 0.0
    %1682 = vmatpush1.msra.mxu0 %v439
    %1683 = vmatprep.subr.mxu0 0.0
    %1684 = vmatpush1.msra.mxu0 %v438
    %1685 = vmatprep.subr.mxu0 0.0
    %1686 = vmatpush1.msra.mxu0 %v437
    %1687 = vmatprep.subr.mxu0 0.0
    %1688 = vmatpush1.msra.mxu0 %v436
    %1689 = vmatprep.subr.mxu0 0.0
    %1690 = vmatpush1.msra.mxu0 %v435
    %1691 = vmatprep.subr.mxu0 0.0
    %1692 = vmatpush2.msra.mxu0 0.0
    %1693 = vmatprep.subr.mxu0 0.0
    %1694 = vmatpush2.msra.mxu0 0.0
    %1695 = vmatprep.subr.mxu0 0.0
    %1696 = vmatpush2.msra.mxu0 0.0
    %1697 = vmatprep.subr.mxu0 0.0
    %1698 = vmatpush2.msra.mxu0 0.0
    %1699 = vmatprep.subr.mxu0 0.0
    %1700 = vmatpush2.msra.mxu0 0.0
    %1701 = vmatprep.subr.mxu0 0.0
    %1702 = vmatpush2.msra.mxu0 0.0
    %1703 = vmatprep.subr.mxu0 0.0
    %1704 = vmatpush2.msra.mxu0 0.0
    %1705 = vmatprep.subr.mxu0 0.0
    %1706 = vmatpush2.msra.mxu0 0.0
    %1707 = vmatprep.subr.mxu0 0.0
    %1708 = vmatpush2.msra.mxu0 0.0
    %1709 = vmatprep.subr.mxu0 0.0
    %1710 = vmatpush2.msra.mxu0 0.0
    %1711 = vmatprep.subr.mxu0 0.0
    %1712 = vmatpush2.msra.mxu0 0.0
    %1713 = vmatprep.subr.mxu0 0.0
    %1714 = vmatpush2.msra.mxu0 0.0
    %1715 = vmatprep.subr.mxu0 0.0
    %1716 = vmatpush2.msra.mxu0 0.0
    %1717 = vmatprep.subr.mxu0 0.0
    %1718 = vmatpush2.msra.mxu0 0.0
    %1719 = vmatprep.subr.mxu0 0.0
    %1720 = vmatpush2.msra.mxu0 0.0
    %1721 = vmatprep.subr.mxu0 0.0
    %1722 = vmatpush2.msra.mxu0 0.0
    %1723 = vmatprep.mubr.f32.mxu0 0.0
    %1724 = vmatmul.mubr.f32.gmra.mxu0 %v1655
    %v1725 = vpop.f32.mrf.mxu0
    %v1726 = vadd.f32 0.0, %v1725
    %v1727 = vpop.f32.mrf.mxu0
    %1728 = vdwg.mxu0
    %1729 = vmatprep.subr.mxu0 0.0
    %1730 = vmatpush1.msra.mxu0 %v466
    %1731 = vmatprep.subr.mxu0 0.0
    %1732 = vmatpush1.msra.mxu0 %v465
    %1733 = vmatprep.subr.mxu0 0.0
    %1734 = vmatpush1.msra.mxu0 %v464
    %1735 = vmatprep.subr.mxu0 0.0
    %1736 = vmatpush1.msra.mxu0 %v463
    %1737 = vmatprep.subr.mxu0 0.0
    %1738 = vmatpush1.msra.mxu0 %v462
    %1739 = vmatprep.subr.mxu0 0.0
    %1740 = vmatpush1.msra.mxu0 %v461
    %1741 = vmatprep.subr.mxu0 0.0
    %1742 = vmatpush1.msra.mxu0 %v460
    %1743 = vmatprep.subr.mxu0 0.0
    %1744 = vmatpush1.msra.mxu0 %v459
    %1745 = vmatprep.subr.mxu0 0.0
    %1746 = vmatpush1.msra.mxu0 %v458
    %1747 = vmatprep.subr.mxu0 0.0
    %1748 = vmatpush1.msra.mxu0 %v457
    %1749 = vmatprep.subr.mxu0 0.0
    %1750 = vmatpush1.msra.mxu0 %v456
    %1751 = vmatprep.subr.mxu0 0.0
    %1752 = vmatpush1.msra.mxu0 %v455
    %1753 = vmatprep.subr.mxu0 0.0
    %1754 = vmatpush1.msra.mxu0 %v454
    %1755 = vmatprep.subr.mxu0 0.0
    %1756 = vmatpush1.msra.mxu0 %v453
    %1757 = vmatprep.subr.mxu0 0.0
    %1758 = vmatpush1.msra.mxu0 %v452
    %1759 = vmatprep.subr.mxu0 0.0
    %1760 = vmatpush1.msra.mxu0 %v451
    %1761 = vmatprep.subr.mxu0 0.0
    %1762 = vmatpush2.msra.mxu0 0.0
    %1763 = vmatprep.subr.mxu0 0.0
    %1764 = vmatpush2.msra.mxu0 0.0
    %1765 = vmatprep.subr.mxu0 0.0
    %1766 = vmatpush2.msra.mxu0 0.0
    %1767 = vmatprep.subr.mxu0 0.0
    %1768 = vmatpush2.msra.mxu0 0.0
    %1769 = vmatprep.subr.mxu0 0.0
    %1770 = vmatpush2.msra.mxu0 0.0
    %1771 = vmatprep.subr.mxu0 0.0
    %1772 = vmatpush2.msra.mxu0 0.0
    %1773 = vmatprep.subr.mxu0 0.0
    %1774 = vmatpush2.msra.mxu0 0.0
    %1775 = vmatprep.subr.mxu0 0.0
    %1776 = vmatpush2.msra.mxu0 0.0
    %1777 = vmatprep.subr.mxu0 0.0
    %1778 = vmatpush2.msra.mxu0 0.0
    %1779 = vmatprep.subr.mxu0 0.0
    %1780 = vmatpush2.msra.mxu0 0.0
    %1781 = vmatprep.subr.mxu0 0.0
    %1782 = vmatpush2.msra.mxu0 0.0
    %1783 = vmatprep.subr.mxu0 0.0
    %1784 = vmatpush2.msra.mxu0 0.0
    %1785 = vmatprep.subr.mxu0 0.0
    %1786 = vmatpush2.msra.mxu0 0.0
    %1787 = vmatprep.subr.mxu0 0.0
    %1788 = vmatpush2.msra.mxu0 0.0
    %1789 = vmatprep.subr.mxu0 0.0
    %1790 = vmatpush2.msra.mxu0 0.0
    %1791 = vmatprep.subr.mxu0 0.0
    %1792 = vmatpush2.msra.mxu0 0.0
    %1793 = vmatprep.mubr.f32.mxu0 0.0
    %1794 = vmatmul.mubr.f32.gmra.mxu0 %v1655
    %v1795 = vpop.f32.mrf.mxu0
    %v1796 = vadd.f32 0.0, %v1795
    %v1797 = vpop.f32.mrf.mxu0
    %1798 = vdwg.mxu0
    %1799 = vmatprep.subr.mxu0 0.0
    %1800 = vmatpush1.msra.mxu0 %v482
    %1801 = vmatprep.subr.mxu0 0.0
    %1802 = vmatpush1.msra.mxu0 %v481
    %1803 = vmatprep.subr.mxu0 0.0
    %1804 = vmatpush1.msra.mxu0 %v480
    %1805 = vmatprep.subr.mxu0 0.0
    %1806 = vmatpush1.msra.mxu0 %v479
    %1807 = vmatprep.subr.mxu0 0.0
    %1808 = vmatpush1.msra.mxu0 %v478
    %1809 = vmatprep.subr.mxu0 0.0
    %1810 = vmatpush1.msra.mxu0 %v477
    %1811 = vmatprep.subr.mxu0 0.0
    %1812 = vmatpush1.msra.mxu0 %v476
    %1813 = vmatprep.subr.mxu0 0.0
    %1814 = vmatpush1.msra.mxu0 %v475
    %1815 = vmatprep.subr.mxu0 0.0
    %1816 = vmatpush1.msra.mxu0 %v474
    %1817 = vmatprep.subr.mxu0 0.0
    %1818 = vmatpush1.msra.mxu0 %v473
    %1819 = vmatprep.subr.mxu0 0.0
    %1820 = vmatpush1.msra.mxu0 %v472
    %1821 = vmatprep.subr.mxu0 0.0
    %1822 = vmatpush1.msra.mxu0 %v471
    %1823 = vmatprep.subr.mxu0 0.0
    %1824 = vmatpush1.msra.mxu0 %v470
    %1825 = vmatprep.subr.mxu0 0.0
    %1826 = vmatpush1.msra.mxu0 %v469
    %1827 = vmatprep.subr.mxu0 0.0
    %1828 = vmatpush1.msra.mxu0 %v468
    %1829 = vmatprep.subr.mxu0 0.0
    %1830 = vmatpush1.msra.mxu0 %v467
    %1831 = vmatprep.subr.mxu0 0.0
    %1832 = vmatpush2.msra.mxu0 0.0
    %1833 = vmatprep.subr.mxu0 0.0
    %1834 = vmatpush2.msra.mxu0 0.0
    %1835 = vmatprep.subr.mxu0 0.0
    %1836 = vmatpush2.msra.mxu0 0.0
    %1837 = vmatprep.subr.mxu0 0.0
    %1838 = vmatpush2.msra.mxu0 0.0
    %1839 = vmatprep.subr.mxu0 0.0
    %1840 = vmatpush2.msra.mxu0 0.0
    %1841 = vmatprep.subr.mxu0 0.0
    %1842 = vmatpush2.msra.mxu0 0.0
    %1843 = vmatprep.subr.mxu0 0.0
    %1844 = vmatpush2.msra.mxu0 0.0
    %1845 = vmatprep.subr.mxu0 0.0
    %1846 = vmatpush2.msra.mxu0 0.0
    %1847 = vmatprep.subr.mxu0 0.0
    %1848 = vmatpush2.msra.mxu0 0.0
    %1849 = vmatprep.subr.mxu0 0.0
    %1850 = vmatpush2.msra.mxu0 0.0
    %1851 = vmatprep.subr.mxu0 0.0
    %1852 = vmatpush2.msra.mxu0 0.0
    %1853 = vmatprep.subr.mxu0 0.0
    %1854 = vmatpush2.msra.mxu0 0.0
    %1855 = vmatprep.subr.mxu0 0.0
    %1856 = vmatpush2.msra.mxu0 0.0
    %1857 = vmatprep.subr.mxu0 0.0
    %1858 = vmatpush2.msra.mxu0 0.0
    %1859 = vmatprep.subr.mxu0 0.0
    %1860 = vmatpush2.msra.mxu0 0.0
    %1861 = vmatprep.subr.mxu0 0.0
    %1862 = vmatpush2.msra.mxu0 0.0
    %1863 = vmatprep.mubr.f32.mxu0 0.0
    %1864 = vmatmul.mubr.f32.gmra.mxu0 %v1655
    %v1865 = vpop.f32.mrf.mxu0
    %v1866 = vadd.f32 %v632, %v1865
    %v1867 = vpop.f32.mrf.mxu0
    %1868 = vdwg.mxu0
    %v1869 = vadd.f32 %v1656, %v1726
    %v1870 = vxor.u32 %v1869, 2147483648
    %v1871 = vmul.f32 %v1870, 1.442695
    %v1872 = vpow.pop %v1871
    %v1873 = vadd.f32 %v1872, 1.0
    %v1874 = vrcp.pop %v1873
    %v1875 = vmul.f32 1.0, %v1874
    %v1876 = vadd.f32 %v1657, %v1796
    %v1877 = vxor.u32 %v1876, 2147483648
    %v1878 = vmul.f32 %v1877, 1.442695
    %v1879 = vpow.pop %v1878
    %v1880 = vadd.f32 %v1879, 1.0
    %v1881 = vrcp.pop %v1880
    %v1882 = vmul.f32 1.0, %v1881
    %v1883 = vmul.f32 %v1875, %v1866
    %v1884 = vadd.f32 %v1658, %v1883
    %v1885 = vtanh.pop %v1884
    %v1886 = vsub.f32 %v1655, %v1885
    %v1887 = vmul.f32 %v1882, %v1886
    %v1888 = vadd.f32 %v1885, %v1887
    %v1889 = vld [vmem:[#allocation2 + $0x90] sm:$0xff]
    %v1890 = vld [vmem:[#allocation2 + $0x98] sm:$0xff]
    %v1891 = vld [vmem:[#allocation2 + $0xa0] sm:$0xff]
    %1892 = vmatprep.subr.mxu0 0.0
    %1893 = vmatpush1.msra.mxu0 %v450
    %1894 = vmatprep.subr.mxu0 0.0
    %1895 = vmatpush1.msra.mxu0 %v449
    %1896 = vmatprep.subr.mxu0 0.0
    %1897 = vmatpush1.msra.mxu0 %v448
    %1898 = vmatprep.subr.mxu0 0.0
    %1899 = vmatpush1.msra.mxu0 %v447
    %1900 = vmatprep.subr.mxu0 0.0
    %1901 = vmatpush1.msra.mxu0 %v446
    %1902 = vmatprep.subr.mxu0 0.0
    %1903 = vmatpush1.msra.mxu0 %v445
    %1904 = vmatprep.subr.mxu0 0.0
    %1905 = vmatpush1.msra.mxu0 %v444
    %1906 = vmatprep.subr.mxu0 0.0
    %1907 = vmatpush1.msra.mxu0 %v443
    %1908 = vmatprep.subr.mxu0 0.0
    %1909 = vmatpush1.msra.mxu0 %v442
    %1910 = vmatprep.subr.mxu0 0.0
    %1911 = vmatpush1.msra.mxu0 %v441
    %1912 = vmatprep.subr.mxu0 0.0
    %1913 = vmatpush1.msra.mxu0 %v440
    %1914 = vmatprep.subr.mxu0 0.0
    %1915 = vmatpush1.msra.mxu0 %v439
    %1916 = vmatprep.subr.mxu0 0.0
    %1917 = vmatpush1.msra.mxu0 %v438
    %1918 = vmatprep.subr.mxu0 0.0
    %1919 = vmatpush1.msra.mxu0 %v437
    %1920 = vmatprep.subr.mxu0 0.0
    %1921 = vmatpush1.msra.mxu0 %v436
    %1922 = vmatprep.subr.mxu0 0.0
    %1923 = vmatpush1.msra.mxu0 %v435
    %1924 = vmatprep.subr.mxu0 0.0
    %1925 = vmatpush2.msra.mxu0 0.0
    %1926 = vmatprep.subr.mxu0 0.0
    %1927 = vmatpush2.msra.mxu0 0.0
    %1928 = vmatprep.subr.mxu0 0.0
    %1929 = vmatpush2.msra.mxu0 0.0
    %1930 = vmatprep.subr.mxu0 0.0
    %1931 = vmatpush2.msra.mxu0 0.0
    %1932 = vmatprep.subr.mxu0 0.0
    %1933 = vmatpush2.msra.mxu0 0.0
    %1934 = vmatprep.subr.mxu0 0.0
    %1935 = vmatpush2.msra.mxu0 0.0
    %1936 = vmatprep.subr.mxu0 0.0
    %1937 = vmatpush2.msra.mxu0 0.0
    %1938 = vmatprep.subr.mxu0 0.0
    %1939 = vmatpush2.msra.mxu0 0.0
    %1940 = vmatprep.subr.mxu0 0.0
    %1941 = vmatpush2.msra.mxu0 0.0
    %1942 = vmatprep.subr.mxu0 0.0
    %1943 = vmatpush2.msra.mxu0 0.0
    %1944 = vmatprep.subr.mxu0 0.0
    %1945 = vmatpush2.msra.mxu0 0.0
    %1946 = vmatprep.subr.mxu0 0.0
    %1947 = vmatpush2.msra.mxu0 0.0
    %1948 = vmatprep.subr.mxu0 0.0
    %1949 = vmatpush2.msra.mxu0 0.0
    %1950 = vmatprep.subr.mxu0 0.0
    %1951 = vmatpush2.msra.mxu0 0.0
    %1952 = vmatprep.subr.mxu0 0.0
    %1953 = vmatpush2.msra.mxu0 0.0
    %1954 = vmatprep.subr.mxu0 0.0
    %1955 = vmatpush2.msra.mxu0 0.0
    %1956 = vmatprep.mubr.f32.mxu0 0.0
    %1957 = vmatmul.mubr.f32.gmra.mxu0 %v1888
    %v1958 = vpop.f32.mrf.mxu0
    %v1959 = vadd.f32 0.0, %v1958
    %v1960 = vpop.f32.mrf.mxu0
    %1961 = vdwg.mxu0
    %1962 = vmatprep.subr.mxu0 0.0
    %1963 = vmatpush1.msra.mxu0 %v466
    %1964 = vmatprep.subr.mxu0 0.0
    %1965 = vmatpush1.msra.mxu0 %v465
    %1966 = vmatprep.subr.mxu0 0.0
    %1967 = vmatpush1.msra.mxu0 %v464
    %1968 = vmatprep.subr.mxu0 0.0
    %1969 = vmatpush1.msra.mxu0 %v463
    %1970 = vmatprep.subr.mxu0 0.0
    %1971 = vmatpush1.msra.mxu0 %v462
    %1972 = vmatprep.subr.mxu0 0.0
    %1973 = vmatpush1.msra.mxu0 %v461
    %1974 = vmatprep.subr.mxu0 0.0
    %1975 = vmatpush1.msra.mxu0 %v460
    %1976 = vmatprep.subr.mxu0 0.0
    %1977 = vmatpush1.msra.mxu0 %v459
    %1978 = vmatprep.subr.mxu0 0.0
    %1979 = vmatpush1.msra.mxu0 %v458
    %1980 = vmatprep.subr.mxu0 0.0
    %1981 = vmatpush1.msra.mxu0 %v457
    %1982 = vmatprep.subr.mxu0 0.0
    %1983 = vmatpush1.msra.mxu0 %v456
    %1984 = vmatprep.subr.mxu0 0.0
    %1985 = vmatpush1.msra.mxu0 %v455
    %1986 = vmatprep.subr.mxu0 0.0
    %1987 = vmatpush1.msra.mxu0 %v454
    %1988 = vmatprep.subr.mxu0 0.0
    %1989 = vmatpush1.msra.mxu0 %v453
    %1990 = vmatprep.subr.mxu0 0.0
    %1991 = vmatpush1.msra.mxu0 %v452
    %1992 = vmatprep.subr.mxu0 0.0
    %1993 = vmatpush1.msra.mxu0 %v451
    %1994 = vmatprep.subr.mxu0 0.0
    %1995 = vmatpush2.msra.mxu0 0.0
    %1996 = vmatprep.subr.mxu0 0.0
    %1997 = vmatpush2.msra.mxu0 0.0
    %1998 = vmatprep.subr.mxu0 0.0
    %1999 = vmatpush2.msra.mxu0 0.0
    %2000 = vmatprep.subr.mxu0 0.0
    %2001 = vmatpush2.msra.mxu0 0.0
    %2002 = vmatprep.subr.mxu0 0.0
    %2003 = vmatpush2.msra.mxu0 0.0
    %2004 = vmatprep.subr.mxu0 0.0
    %2005 = vmatpush2.msra.mxu0 0.0
    %2006 = vmatprep.subr.mxu0 0.0
    %2007 = vmatpush2.msra.mxu0 0.0
    %2008 = vmatprep.subr.mxu0 0.0
    %2009 = vmatpush2.msra.mxu0 0.0
    %2010 = vmatprep.subr.mxu0 0.0
    %2011 = vmatpush2.msra.mxu0 0.0
    %2012 = vmatprep.subr.mxu0 0.0
    %2013 = vmatpush2.msra.mxu0 0.0
    %2014 = vmatprep.subr.mxu0 0.0
    %2015 = vmatpush2.msra.mxu0 0.0
    %2016 = vmatprep.subr.mxu0 0.0
    %2017 = vmatpush2.msra.mxu0 0.0
    %2018 = vmatprep.subr.mxu0 0.0
    %2019 = vmatpush2.msra.mxu0 0.0
    %2020 = vmatprep.subr.mxu0 0.0
    %2021 = vmatpush2.msra.mxu0 0.0
    %2022 = vmatprep.subr.mxu0 0.0
    %2023 = vmatpush2.msra.mxu0 0.0
    %2024 = vmatprep.subr.mxu0 0.0
    %2025 = vmatpush2.msra.mxu0 0.0
    %2026 = vmatprep.mubr.f32.mxu0 0.0
    %2027 = vmatmul.mubr.f32.gmra.mxu0 %v1888
    %v2028 = vpop.f32.mrf.mxu0
    %v2029 = vadd.f32 0.0, %v2028
    %v2030 = vpop.f32.mrf.mxu0
    %2031 = vdwg.mxu0
    %2032 = vmatprep.subr.mxu0 0.0
    %2033 = vmatpush1.msra.mxu0 %v482
    %2034 = vmatprep.subr.mxu0 0.0
    %2035 = vmatpush1.msra.mxu0 %v481
    %2036 = vmatprep.subr.mxu0 0.0
    %2037 = vmatpush1.msra.mxu0 %v480
    %2038 = vmatprep.subr.mxu0 0.0
    %2039 = vmatpush1.msra.mxu0 %v479
    %2040 = vmatprep.subr.mxu0 0.0
    %2041 = vmatpush1.msra.mxu0 %v478
    %2042 = vmatprep.subr.mxu0 0.0
    %2043 = vmatpush1.msra.mxu0 %v477
    %2044 = vmatprep.subr.mxu0 0.0
    %2045 = vmatpush1.msra.mxu0 %v476
    %2046 = vmatprep.subr.mxu0 0.0
    %2047 = vmatpush1.msra.mxu0 %v475
    %2048 = vmatprep.subr.mxu0 0.0
    %2049 = vmatpush1.msra.mxu0 %v474
    %2050 = vmatprep.subr.mxu0 0.0
    %2051 = vmatpush1.msra.mxu0 %v473
    %2052 = vmatprep.subr.mxu0 0.0
    %2053 = vmatpush1.msra.mxu0 %v472
    %2054 = vmatprep.subr.mxu0 0.0
    %2055 = vmatpush1.msra.mxu0 %v471
    %2056 = vmatprep.subr.mxu0 0.0
    %2057 = vmatpush1.msra.mxu0 %v470
    %2058 = vmatprep.subr.mxu0 0.0
    %2059 = vmatpush1.msra.mxu0 %v469
    %2060 = vmatprep.subr.mxu0 0.0
    %2061 = vmatpush1.msra.mxu0 %v468
    %2062 = vmatprep.subr.mxu0 0.0
    %2063 = vmatpush1.msra.mxu0 %v467
    %2064 = vmatprep.subr.mxu0 0.0
    %2065 = vmatpush2.msra.mxu0 0.0
    %2066 = vmatprep.subr.mxu0 0.0
    %2067 = vmatpush2.msra.mxu0 0.0
    %2068 = vmatprep.subr.mxu0 0.0
    %2069 = vmatpush2.msra.mxu0 0.0
    %2070 = vmatprep.subr.mxu0 0.0
    %2071 = vmatpush2.msra.mxu0 0.0
    %2072 = vmatprep.subr.mxu0 0.0
    %2073 = vmatpush2.msra.mxu0 0.0
    %2074 = vmatprep.subr.mxu0 0.0
    %2075 = vmatpush2.msra.mxu0 0.0
    %2076 = vmatprep.subr.mxu0 0.0
    %2077 = vmatpush2.msra.mxu0 0.0
    %2078 = vmatprep.subr.mxu0 0.0
    %2079 = vmatpush2.msra.mxu0 0.0
    %2080 = vmatprep.subr.mxu0 0.0
    %2081 = vmatpush2.msra.mxu0 0.0
    %2082 = vmatprep.subr.mxu0 0.0
    %2083 = vmatpush2.msra.mxu0 0.0
    %2084 = vmatprep.subr.mxu0 0.0
    %2085 = vmatpush2.msra.mxu0 0.0
    %2086 = vmatprep.subr.mxu0 0.0
    %2087 = vmatpush2.msra.mxu0 0.0
    %2088 = vmatprep.subr.mxu0 0.0
    %2089 = vmatpush2.msra.mxu0 0.0
    %2090 = vmatprep.subr.mxu0 0.0
    %2091 = vmatpush2.msra.mxu0 0.0
    %2092 = vmatprep.subr.mxu0 0.0
    %2093 = vmatpush2.msra.mxu0 0.0
    %2094 = vmatprep.subr.mxu0 0.0
    %2095 = vmatpush2.msra.mxu0 0.0
    %2096 = vmatprep.mubr.f32.mxu0 0.0
    %2097 = vmatmul.mubr.f32.gmra.mxu0 %v1888
    %v2098 = vpop.f32.mrf.mxu0
    %v2099 = vadd.f32 %v632, %v2098
    %v2100 = vpop.f32.mrf.mxu0
    %2101 = vdwg.mxu0
    %v2102 = vadd.f32 %v1889, %v1959
    %v2103 = vxor.u32 %v2102, 2147483648
    %v2104 = vmul.f32 %v2103, 1.442695
    %v2105 = vpow.pop %v2104
    %v2106 = vadd.f32 %v2105, 1.0
    %v2107 = vrcp.pop %v2106
    %v2108 = vmul.f32 1.0, %v2107
    %v2109 = vadd.f32 %v1890, %v2029
    %v2110 = vxor.u32 %v2109, 2147483648
    %v2111 = vmul.f32 %v2110, 1.442695
    %v2112 = vpow.pop %v2111
    %v2113 = vadd.f32 %v2112, 1.0
    %v2114 = vrcp.pop %v2113
    %v2115 = vmul.f32 1.0, %v2114
    %v2116 = vmul.f32 %v2108, %v2099
    %v2117 = vadd.f32 %v1891, %v2116
    %v2118 = vtanh.pop %v2117
    %v2119 = vsub.f32 %v1888, %v2118
    %v2120 = vmul.f32 %v2115, %v2119
    %v2121 = vadd.f32 %v2118, %v2120
    %v2122 = vld [vmem:[#allocation2 + $0xa8] sm:$0xff]
    %v2123 = vld [vmem:[#allocation2 + $0xb0] sm:$0xff]
    %v2124 = vld [vmem:[#allocation2 + $0xb8] sm:$0xff]
    %2125 = vmatprep.subr.mxu0 0.0
    %2126 = vmatpush1.msra.mxu0 %v450
    %2127 = vmatprep.subr.mxu0 0.0
    %2128 = vmatpush1.msra.mxu0 %v449
    %2129 = vmatprep.subr.mxu0 0.0
    %2130 = vmatpush1.msra.mxu0 %v448
    %2131 = vmatprep.subr.mxu0 0.0
    %2132 = vmatpush1.msra.mxu0 %v447
    %2133 = vmatprep.subr.mxu0 0.0
    %2134 = vmatpush1.msra.mxu0 %v446
    %2135 = vmatprep.subr.mxu0 0.0
    %2136 = vmatpush1.msra.mxu0 %v445
    %2137 = vmatprep.subr.mxu0 0.0
    %2138 = vmatpush1.msra.mxu0 %v444
    %2139 = vmatprep.subr.mxu0 0.0
    %2140 = vmatpush1.msra.mxu0 %v443
    %2141 = vmatprep.subr.mxu0 0.0
    %2142 = vmatpush1.msra.mxu0 %v442
    %2143 = vmatprep.subr.mxu0 0.0
    %2144 = vmatpush1.msra.mxu0 %v441
    %2145 = vmatprep.subr.mxu0 0.0
    %2146 = vmatpush1.msra.mxu0 %v440
    %2147 = vmatprep.subr.mxu0 0.0
    %2148 = vmatpush1.msra.mxu0 %v439
    %2149 = vmatprep.subr.mxu0 0.0
    %2150 = vmatpush1.msra.mxu0 %v438
    %2151 = vmatprep.subr.mxu0 0.0
    %2152 = vmatpush1.msra.mxu0 %v437
    %2153 = vmatprep.subr.mxu0 0.0
    %2154 = vmatpush1.msra.mxu0 %v436
    %2155 = vmatprep.subr.mxu0 0.0
    %2156 = vmatpush1.msra.mxu0 %v435
    %2157 = vmatprep.subr.mxu0 0.0
    %2158 = vmatpush2.msra.mxu0 0.0
    %2159 = vmatprep.subr.mxu0 0.0
    %2160 = vmatpush2.msra.mxu0 0.0
    %2161 = vmatprep.subr.mxu0 0.0
    %2162 = vmatpush2.msra.mxu0 0.0
    %2163 = vmatprep.subr.mxu0 0.0
    %2164 = vmatpush2.msra.mxu0 0.0
    %2165 = vmatprep.subr.mxu0 0.0
    %2166 = vmatpush2.msra.mxu0 0.0
    %2167 = vmatprep.subr.mxu0 0.0
    %2168 = vmatpush2.msra.mxu0 0.0
    %2169 = vmatprep.subr.mxu0 0.0
    %2170 = vmatpush2.msra.mxu0 0.0
    %2171 = vmatprep.subr.mxu0 0.0
    %2172 = vmatpush2.msra.mxu0 0.0
    %2173 = vmatprep.subr.mxu0 0.0
    %2174 = vmatpush2.msra.mxu0 0.0
    %2175 = vmatprep.subr.mxu0 0.0
    %2176 = vmatpush2.msra.mxu0 0.0
    %2177 = vmatprep.subr.mxu0 0.0
    %2178 = vmatpush2.msra.mxu0 0.0
    %2179 = vmatprep.subr.mxu0 0.0
    %2180 = vmatpush2.msra.mxu0 0.0
    %2181 = vmatprep.subr.mxu0 0.0
    %2182 = vmatpush2.msra.mxu0 0.0
    %2183 = vmatprep.subr.mxu0 0.0
    %2184 = vmatpush2.msra.mxu0 0.0
    %2185 = vmatprep.subr.mxu0 0.0
    %2186 = vmatpush2.msra.mxu0 0.0
    %2187 = vmatprep.subr.mxu0 0.0
    %2188 = vmatpush2.msra.mxu0 0.0
    %2189 = vmatprep.mubr.f32.mxu0 0.0
    %2190 = vmatmul.mubr.f32.gmra.mxu0 %v2121
    %v2191 = vpop.f32.mrf.mxu0
    %v2192 = vadd.f32 0.0, %v2191
    %v2193 = vpop.f32.mrf.mxu0
    %2194 = vdwg.mxu0
    %2195 = vmatprep.subr.mxu0 0.0
    %2196 = vmatpush1.msra.mxu0 %v466
    %2197 = vmatprep.subr.mxu0 0.0
    %2198 = vmatpush1.msra.mxu0 %v465
    %2199 = vmatprep.subr.mxu0 0.0
    %2200 = vmatpush1.msra.mxu0 %v464
    %2201 = vmatprep.subr.mxu0 0.0
    %2202 = vmatpush1.msra.mxu0 %v463
    %2203 = vmatprep.subr.mxu0 0.0
    %2204 = vmatpush1.msra.mxu0 %v462
    %2205 = vmatprep.subr.mxu0 0.0
    %2206 = vmatpush1.msra.mxu0 %v461
    %2207 = vmatprep.subr.mxu0 0.0
    %2208 = vmatpush1.msra.mxu0 %v460
    %2209 = vmatprep.subr.mxu0 0.0
    %2210 = vmatpush1.msra.mxu0 %v459
    %2211 = vmatprep.subr.mxu0 0.0
    %2212 = vmatpush1.msra.mxu0 %v458
    %2213 = vmatprep.subr.mxu0 0.0
    %2214 = vmatpush1.msra.mxu0 %v457
    %2215 = vmatprep.subr.mxu0 0.0
    %2216 = vmatpush1.msra.mxu0 %v456
    %2217 = vmatprep.subr.mxu0 0.0
    %2218 = vmatpush1.msra.mxu0 %v455
    %2219 = vmatprep.subr.mxu0 0.0
    %2220 = vmatpush1.msra.mxu0 %v454
    %2221 = vmatprep.subr.mxu0 0.0
    %2222 = vmatpush1.msra.mxu0 %v453
    %2223 = vmatprep.subr.mxu0 0.0
    %2224 = vmatpush1.msra.mxu0 %v452
    %2225 = vmatprep.subr.mxu0 0.0
    %2226 = vmatpush1.msra.mxu0 %v451
    %2227 = vmatprep.subr.mxu0 0.0
    %2228 = vmatpush2.msra.mxu0 0.0
    %2229 = vmatprep.subr.mxu0 0.0
    %2230 = vmatpush2.msra.mxu0 0.0
    %2231 = vmatprep.subr.mxu0 0.0
    %2232 = vmatpush2.msra.mxu0 0.0
    %2233 = vmatprep.subr.mxu0 0.0
    %2234 = vmatpush2.msra.mxu0 0.0
    %2235 = vmatprep.subr.mxu0 0.0
    %2236 = vmatpush2.msra.mxu0 0.0
    %2237 = vmatprep.subr.mxu0 0.0
    %2238 = vmatpush2.msra.mxu0 0.0
    %2239 = vmatprep.subr.mxu0 0.0
    %2240 = vmatpush2.msra.mxu0 0.0
    %2241 = vmatprep.subr.mxu0 0.0
    %2242 = vmatpush2.msra.mxu0 0.0
    %2243 = vmatprep.subr.mxu0 0.0
    %2244 = vmatpush2.msra.mxu0 0.0
    %2245 = vmatprep.subr.mxu0 0.0
    %2246 = vmatpush2.msra.mxu0 0.0
    %2247 = vmatprep.subr.mxu0 0.0
    %2248 = vmatpush2.msra.mxu0 0.0
    %2249 = vmatprep.subr.mxu0 0.0
    %2250 = vmatpush2.msra.mxu0 0.0
    %2251 = vmatprep.subr.mxu0 0.0
    %2252 = vmatpush2.msra.mxu0 0.0
    %2253 = vmatprep.subr.mxu0 0.0
    %2254 = vmatpush2.msra.mxu0 0.0
    %2255 = vmatprep.subr.mxu0 0.0
    %2256 = vmatpush2.msra.mxu0 0.0
    %2257 = vmatprep.subr.mxu0 0.0
    %2258 = vmatpush2.msra.mxu0 0.0
    %2259 = vmatprep.mubr.f32.mxu0 0.0
    %2260 = vmatmul.mubr.f32.gmra.mxu0 %v2121
    %v2261 = vpop.f32.mrf.mxu0
    %v2262 = vadd.f32 0.0, %v2261
    %v2263 = vpop.f32.mrf.mxu0
    %2264 = vdwg.mxu0
    %2265 = vmatprep.subr.mxu0 0.0
    %2266 = vmatpush1.msra.mxu0 %v482
    %2267 = vmatprep.subr.mxu0 0.0
    %2268 = vmatpush1.msra.mxu0 %v481
    %2269 = vmatprep.subr.mxu0 0.0
    %2270 = vmatpush1.msra.mxu0 %v480
    %2271 = vmatprep.subr.mxu0 0.0
    %2272 = vmatpush1.msra.mxu0 %v479
    %2273 = vmatprep.subr.mxu0 0.0
    %2274 = vmatpush1.msra.mxu0 %v478
    %2275 = vmatprep.subr.mxu0 0.0
    %2276 = vmatpush1.msra.mxu0 %v477
    %2277 = vmatprep.subr.mxu0 0.0
    %2278 = vmatpush1.msra.mxu0 %v476
    %2279 = vmatprep.subr.mxu0 0.0
    %2280 = vmatpush1.msra.mxu0 %v475
    %2281 = vmatprep.subr.mxu0 0.0
    %2282 = vmatpush1.msra.mxu0 %v474
    %2283 = vmatprep.subr.mxu0 0.0
    %2284 = vmatpush1.msra.mxu0 %v473
    %2285 = vmatprep.subr.mxu0 0.0
    %2286 = vmatpush1.msra.mxu0 %v472
    %2287 = vmatprep.subr.mxu0 0.0
    %2288 = vmatpush1.msra.mxu0 %v471
    %2289 = vmatprep.subr.mxu0 0.0
    %2290 = vmatpush1.msra.mxu0 %v470
    %2291 = vmatprep.subr.mxu0 0.0
    %2292 = vmatpush1.msra.mxu0 %v469
    %2293 = vmatprep.subr.mxu0 0.0
    %2294 = vmatpush1.msra.mxu0 %v468
    %2295 = vmatprep.subr.mxu0 0.0
    %2296 = vmatpush1.msra.mxu0 %v467
    %2297 = vmatprep.subr.mxu0 0.0
    %2298 = vmatpush2.msra.mxu0 0.0
    %2299 = vmatprep.subr.mxu0 0.0
    %2300 = vmatpush2.msra.mxu0 0.0
    %2301 = vmatprep.subr.mxu0 0.0
    %2302 = vmatpush2.msra.mxu0 0.0
    %2303 = vmatprep.subr.mxu0 0.0
    %2304 = vmatpush2.msra.mxu0 0.0
    %2305 = vmatprep.subr.mxu0 0.0
    %2306 = vmatpush2.msra.mxu0 0.0
    %2307 = vmatprep.subr.mxu0 0.0
    %2308 = vmatpush2.msra.mxu0 0.0
    %2309 = vmatprep.subr.mxu0 0.0
    %2310 = vmatpush2.msra.mxu0 0.0
    %2311 = vmatprep.subr.mxu0 0.0
    %2312 = vmatpush2.msra.mxu0 0.0
    %2313 = vmatprep.subr.mxu0 0.0
    %2314 = vmatpush2.msra.mxu0 0.0
    %2315 = vmatprep.subr.mxu0 0.0
    %2316 = vmatpush2.msra.mxu0 0.0
    %2317 = vmatprep.subr.mxu0 0.0
    %2318 = vmatpush2.msra.mxu0 0.0
    %2319 = vmatprep.subr.mxu0 0.0
    %2320 = vmatpush2.msra.mxu0 0.0
    %2321 = vmatprep.subr.mxu0 0.0
    %2322 = vmatpush2.msra.mxu0 0.0
    %2323 = vmatprep.subr.mxu0 0.0
    %2324 = vmatpush2.msra.mxu0 0.0
    %2325 = vmatprep.subr.mxu0 0.0
    %2326 = vmatpush2.msra.mxu0 0.0
    %2327 = vmatprep.subr.mxu0 0.0
    %2328 = vmatpush2.msra.mxu0 0.0
    %2329 = vmatprep.mubr.f32.mxu0 0.0
    %2330 = vmatmul.mubr.f32.gmra.mxu0 %v2121
    %v2331 = vpop.f32.mrf.mxu0
    %v2332 = vadd.f32 %v632, %v2331
    %v2333 = vpop.f32.mrf.mxu0
    %2334 = vdwg.mxu0
    %v2335 = vadd.f32 %v2122, %v2192
    %v2336 = vxor.u32 %v2335, 2147483648
    %v2337 = vmul.f32 %v2336, 1.442695
    %v2338 = vpow.pop %v2337
    %v2339 = vadd.f32 %v2338, 1.0
    %v2340 = vrcp.pop %v2339
    %v2341 = vmul.f32 1.0, %v2340
    %v2342 = vadd.f32 %v2123, %v2262
    %v2343 = vxor.u32 %v2342, 2147483648
    %v2344 = vmul.f32 %v2343, 1.442695
    %v2345 = vpow.pop %v2344
    %v2346 = vadd.f32 %v2345, 1.0
    %v2347 = vrcp.pop %v2346
    %v2348 = vmul.f32 1.0, %v2347
    %v2349 = vmul.f32 %v2341, %v2332
    %v2350 = vadd.f32 %v2124, %v2349
    %v2351 = vtanh.pop %v2350
    %v2352 = vsub.f32 %v2121, %v2351
    %v2353 = vmul.f32 %v2348, %v2352
    %v2354 = vadd.f32 %v2351, %v2353
    %2355 = vst [vmem:[%s15] sm:$0xff] %v2354
    %v2356 = vld [vmem:[#allocation8] sm:$0xff]
    %v2357 = vld [vmem:[#allocation8 + $0x8] sm:$0xff]
    %v2358 = vld [vmem:[#allocation8 + $0x10] sm:$0xff]
    %v2359 = vld [vmem:[#allocation8 + $0x18] sm:$0xff]
    %v2360 = vld [vmem:[#allocation8 + $0x20] sm:$0xff]
    %v2361 = vld [vmem:[#allocation8 + $0x28] sm:$0xff]
    %v2362 = vld [vmem:[#allocation8 + $0x30] sm:$0xff]
    %v2363 = vld [vmem:[#allocation8 + $0x38] sm:$0xff]
    %v2364 = vld [vmem:[#allocation8 + $0x40] sm:$0xff]
    %v2365 = vld [vmem:[#allocation8 + $0x48] sm:$0xff]
    %v2366 = vld [vmem:[#allocation8 + $0x50] sm:$0xff]
    %v2367 = vld [vmem:[#allocation8 + $0x58] sm:$0xff]
    %v2368 = vld [vmem:[#allocation8 + $0x60] sm:$0xff]
    %v2369 = vld [vmem:[#allocation8 + $0x68] sm:$0xff]
    %v2370 = vld [vmem:[#allocation8 + $0x70] sm:$0xff]
    %v2371 = vld [vmem:[#allocation8 + $0x78] sm:$0xff]
    %v2372 = vld [vmem:[%s9] sm:$0x1]
    %v2374 = vlaneseq
    %v2375 = vshrl.u32 %v2374, 7
    %v2376 = vsub.s32 0, %v2375
    %v2377 = vrot.slane %v2372, %v2376
    %2379 = vmatprep.subr.mxu0 0.0
    %2380 = vmatpush1.msra.mxu0 %v2371
    %2381 = vmatprep.subr.mxu0 0.0
    %2382 = vmatpush1.msra.mxu0 %v2370
    %2383 = vmatprep.subr.mxu0 0.0
    %2384 = vmatpush1.msra.mxu0 %v2369
    %2385 = vmatprep.subr.mxu0 0.0
    %2386 = vmatpush1.msra.mxu0 %v2368
    %2387 = vmatprep.subr.mxu0 0.0
    %2388 = vmatpush1.msra.mxu0 %v2367
    %2389 = vmatprep.subr.mxu0 0.0
    %2390 = vmatpush1.msra.mxu0 %v2366
    %2391 = vmatprep.subr.mxu0 0.0
    %2392 = vmatpush1.msra.mxu0 %v2365
    %2393 = vmatprep.subr.mxu0 0.0
    %2394 = vmatpush1.msra.mxu0 %v2364
    %2395 = vmatprep.subr.mxu0 0.0
    %2396 = vmatpush1.msra.mxu0 %v2363
    %2397 = vmatprep.subr.mxu0 0.0
    %2398 = vmatpush1.msra.mxu0 %v2362
    %2399 = vmatprep.subr.mxu0 0.0
    %2400 = vmatpush1.msra.mxu0 %v2361
    %2401 = vmatprep.subr.mxu0 0.0
    %2402 = vmatpush1.msra.mxu0 %v2360
    %2403 = vmatprep.subr.mxu0 0.0
    %2404 = vmatpush1.msra.mxu0 %v2359
    %2405 = vmatprep.subr.mxu0 0.0
    %2406 = vmatpush1.msra.mxu0 %v2358
    %2407 = vmatprep.subr.mxu0 0.0
    %2408 = vmatpush1.msra.mxu0 %v2357
    %2409 = vmatprep.subr.mxu0 0.0
    %2410 = vmatpush1.msra.mxu0 %v2356
    %2411 = vmatprep.subr.mxu0 0.0
    %2412 = vmatpush2.msra.mxu0 0.0
    %2413 = vmatprep.subr.mxu0 0.0
    %2414 = vmatpush2.msra.mxu0 0.0
    %2415 = vmatprep.subr.mxu0 0.0
    %2416 = vmatpush2.msra.mxu0 0.0
    %2417 = vmatprep.subr.mxu0 0.0
    %2418 = vmatpush2.msra.mxu0 0.0
    %2419 = vmatprep.subr.mxu0 0.0
    %2420 = vmatpush2.msra.mxu0 0.0
    %2421 = vmatprep.subr.mxu0 0.0
    %2422 = vmatpush2.msra.mxu0 0.0
    %2423 = vmatprep.subr.mxu0 0.0
    %2424 = vmatpush2.msra.mxu0 0.0
    %2425 = vmatprep.subr.mxu0 0.0
    %2426 = vmatpush2.msra.mxu0 0.0
    %2427 = vmatprep.subr.mxu0 0.0
    %2428 = vmatpush2.msra.mxu0 0.0
    %2429 = vmatprep.subr.mxu0 0.0
    %2430 = vmatpush2.msra.mxu0 0.0
    %2431 = vmatprep.subr.mxu0 0.0
    %2432 = vmatpush2.msra.mxu0 0.0
    %2433 = vmatprep.subr.mxu0 0.0
    %2434 = vmatpush2.msra.mxu0 0.0
    %2435 = vmatprep.subr.mxu0 0.0
    %2436 = vmatpush2.msra.mxu0 0.0
    %2437 = vmatprep.subr.mxu0 0.0
    %2438 = vmatpush2.msra.mxu0 0.0
    %2439 = vmatprep.subr.mxu0 0.0
    %2440 = vmatpush2.msra.mxu0 0.0
    %2441 = vmatprep.subr.mxu0 0.0
    %2442 = vmatpush2.msra.mxu0 0.0
    %2443 = vmatprep.mubr.f32.mxu0 0.0
    %2444 = vmatmul.mubr.f32.gmra.mxu0 %v2354
    %v2445 = vpop.f32.mrf.mxu0
    %v2446 = vadd.f32 %v2377, %v2445
    %v2447 = vpop.f32.mrf.mxu0
    %2448 = vdwg.mxu0
    %v2449 = vmax.f32 %v2446, 0.0
    %v2450 = vld [vmem:[#allocation10] sm:$0xff]
    %v2451 = vld [vmem:[#allocation10 + $0x8] sm:$0xff]
    %v2452 = vld [vmem:[#allocation10 + $0x10] sm:$0xff]
    %v2453 = vld [vmem:[#allocation10 + $0x18] sm:$0xff]
    %v2454 = vld [vmem:[#allocation10 + $0x20] sm:$0xff]
    %v2455 = vld [vmem:[#allocation10 + $0x28] sm:$0xff]
    %v2456 = vld [vmem:[#allocation10 + $0x30] sm:$0xff]
    %v2457 = vld [vmem:[#allocation10 + $0x38] sm:$0xff]
    %v2458 = vld [vmem:[#allocation10 + $0x40] sm:$0xff]
    %v2459 = vld [vmem:[#allocation10 + $0x48] sm:$0xff]
    %v2460 = vld [vmem:[#allocation10 + $0x50] sm:$0xff]
    %v2461 = vld [vmem:[#allocation10 + $0x58] sm:$0xff]
    %v2462 = vld [vmem:[#allocation10 + $0x60] sm:$0xff]
    %v2463 = vld [vmem:[#allocation10 + $0x68] sm:$0xff]
    %v2464 = vld [vmem:[#allocation10 + $0x70] sm:$0xff]
    %v2465 = vld [vmem:[#allocation10 + $0x78] sm:$0xff]
    %v2466 = vld [vmem:[%s11] sm:$0x1]
    %v2468 = vlaneseq
    %v2469 = vshrl.u32 %v2468, 7
    %v2470 = vsub.s32 0, %v2469
    %v2471 = vrot.slane %v2466, %v2470
    %2473 = vmatprep.subr.mxu0 0.0
    %2474 = vmatpush1.msra.mxu0 %v2465
    %2475 = vmatprep.subr.mxu0 0.0
    %2476 = vmatpush1.msra.mxu0 %v2464
    %2477 = vmatprep.subr.mxu0 0.0
    %2478 = vmatpush1.msra.mxu0 %v2463
    %2479 = vmatprep.subr.mxu0 0.0
    %2480 = vmatpush1.msra.mxu0 %v2462
    %2481 = vmatprep.subr.mxu0 0.0
    %2482 = vmatpush1.msra.mxu0 %v2461
    %2483 = vmatprep.subr.mxu0 0.0
    %2484 = vmatpush1.msra.mxu0 %v2460
    %2485 = vmatprep.subr.mxu0 0.0
    %2486 = vmatpush1.msra.mxu0 %v2459
    %2487 = vmatprep.subr.mxu0 0.0
    %2488 = vmatpush1.msra.mxu0 %v2458
    %2489 = vmatprep.subr.mxu0 0.0
    %2490 = vmatpush1.msra.mxu0 %v2457
    %2491 = vmatprep.subr.mxu0 0.0
    %2492 = vmatpush1.msra.mxu0 %v2456
    %2493 = vmatprep.subr.mxu0 0.0
    %2494 = vmatpush1.msra.mxu0 %v2455
    %2495 = vmatprep.subr.mxu0 0.0
    %2496 = vmatpush1.msra.mxu0 %v2454
    %2497 = vmatprep.subr.mxu0 0.0
    %2498 = vmatpush1.msra.mxu0 %v2453
    %2499 = vmatprep.subr.mxu0 0.0
    %2500 = vmatpush1.msra.mxu0 %v2452
    %2501 = vmatprep.subr.mxu0 0.0
    %2502 = vmatpush1.msra.mxu0 %v2451
    %2503 = vmatprep.subr.mxu0 0.0
    %2504 = vmatpush1.msra.mxu0 %v2450
    %2505 = vmatprep.subr.mxu0 0.0
    %2506 = vmatpush2.msra.mxu0 0.0
    %2507 = vmatprep.subr.mxu0 0.0
    %2508 = vmatpush2.msra.mxu0 0.0
    %2509 = vmatprep.subr.mxu0 0.0
    %2510 = vmatpush2.msra.mxu0 0.0
    %2511 = vmatprep.subr.mxu0 0.0
    %2512 = vmatpush2.msra.mxu0 0.0
    %2513 = vmatprep.subr.mxu0 0.0
    %2514 = vmatpush2.msra.mxu0 0.0
    %2515 = vmatprep.subr.mxu0 0.0
    %2516 = vmatpush2.msra.mxu0 0.0
    %2517 = vmatprep.subr.mxu0 0.0
    %2518 = vmatpush2.msra.mxu0 0.0
    %2519 = vmatprep.subr.mxu0 0.0
    %2520 = vmatpush2.msra.mxu0 0.0
    %2521 = vmatprep.subr.mxu0 0.0
    %2522 = vmatpush2.msra.mxu0 0.0
    %2523 = vmatprep.subr.mxu0 0.0
    %2524 = vmatpush2.msra.mxu0 0.0
    %2525 = vmatprep.subr.mxu0 0.0
    %2526 = vmatpush2.msra.mxu0 0.0
    %2527 = vmatprep.subr.mxu0 0.0
    %2528 = vmatpush2.msra.mxu0 0.0
    %2529 = vmatprep.subr.mxu0 0.0
    %2530 = vmatpush2.msra.mxu0 0.0
    %2531 = vmatprep.subr.mxu0 0.0
    %2532 = vmatpush2.msra.mxu0 0.0
    %2533 = vmatprep.subr.mxu0 0.0
    %2534 = vmatpush2.msra.mxu0 0.0
    %2535 = vmatprep.subr.mxu0 0.0
    %2536 = vmatpush2.msra.mxu0 0.0
    %2537 = vmatprep.mubr.f32.mxu0 0.0
    %2538 = vmatmul.mubr.f32.gmra.mxu0 %v2449
    %v2539 = vpop.f32.mrf.mxu0
    %v2540 = vadd.f32 %v2471, %v2539
    %v2541 = vpop.f32.mrf.mxu0
    %2542 = vdwg.mxu0
    %v2543 = vmax.f32 %v2540, 0.0
    %v2544 = vld [vmem:[#allocation11] sm:$0xff]
    %v2545 = vld [vmem:[#allocation11 + $0x8] sm:$0xff]
    %v2546 = vld [vmem:[#allocation11 + $0x10] sm:$0xff]
    %v2547 = vld [vmem:[#allocation11 + $0x18] sm:$0xff]
    %v2548 = vld [vmem:[#allocation11 + $0x20] sm:$0xff]
    %v2549 = vld [vmem:[#allocation11 + $0x28] sm:$0xff]
    %v2550 = vld [vmem:[#allocation11 + $0x30] sm:$0xff]
    %v2551 = vld [vmem:[#allocation11 + $0x38] sm:$0xff]
    %v2552 = vld [vmem:[#allocation11 + $0x40] sm:$0xff]
    %v2553 = vld [vmem:[#allocation11 + $0x48] sm:$0xff]
    %v2554 = vld [vmem:[#allocation11 + $0x50] sm:$0xff]
    %v2555 = vld [vmem:[#allocation11 + $0x58] sm:$0xff]
    %v2556 = vld [vmem:[#allocation11 + $0x60] sm:$0xff]
    %v2557 = vld [vmem:[#allocation11 + $0x68] sm:$0xff]
    %v2558 = vld [vmem:[#allocation11 + $0x70] sm:$0xff]
    %v2559 = vld [vmem:[#allocation11 + $0x78] sm:$0xff]
    %v2560 = vld [vmem:[#allocation13] sm:$0x1]
    %v2562 = vlaneseq
    %v2563 = vshrl.u32 %v2562, 7
    %v2564 = vsub.s32 0, %v2563
    %v2565 = vrot.slane %v2560, %v2564
    %2567 = vmatprep.subr.mxu0 0.0
    %2568 = vmatpush1.msra.mxu0 %v2559
    %2569 = vmatprep.subr.mxu0 0.0
    %2570 = vmatpush1.msra.mxu0 %v2558
    %2571 = vmatprep.subr.mxu0 0.0
    %2572 = vmatpush1.msra.mxu0 %v2557
    %2573 = vmatprep.subr.mxu0 0.0
    %2574 = vmatpush1.msra.mxu0 %v2556
    %2575 = vmatprep.subr.mxu0 0.0
    %2576 = vmatpush1.msra.mxu0 %v2555
    %2577 = vmatprep.subr.mxu0 0.0
    %2578 = vmatpush1.msra.mxu0 %v2554
    %2579 = vmatprep.subr.mxu0 0.0
    %2580 = vmatpush1.msra.mxu0 %v2553
    %2581 = vmatprep.subr.mxu0 0.0
    %2582 = vmatpush1.msra.mxu0 %v2552
    %2583 = vmatprep.subr.mxu0 0.0
    %2584 = vmatpush1.msra.mxu0 %v2551
    %2585 = vmatprep.subr.mxu0 0.0
    %2586 = vmatpush1.msra.mxu0 %v2550
    %2587 = vmatprep.subr.mxu0 0.0
    %2588 = vmatpush1.msra.mxu0 %v2549
    %2589 = vmatprep.subr.mxu0 0.0
    %2590 = vmatpush1.msra.mxu0 %v2548
    %2591 = vmatprep.subr.mxu0 0.0
    %2592 = vmatpush1.msra.mxu0 %v2547
    %2593 = vmatprep.subr.mxu0 0.0
    %2594 = vmatpush1.msra.mxu0 %v2546
    %2595 = vmatprep.subr.mxu0 0.0
    %2596 = vmatpush1.msra.mxu0 %v2545
    %2597 = vmatprep.subr.mxu0 0.0
    %2598 = vmatpush1.msra.mxu0 %v2544
    %2599 = vmatprep.subr.mxu0 0.0
    %2600 = vmatpush2.msra.mxu0 0.0
    %2601 = vmatprep.subr.mxu0 0.0
    %2602 = vmatpush2.msra.mxu0 0.0
    %2603 = vmatprep.subr.mxu0 0.0
    %2604 = vmatpush2.msra.mxu0 0.0
    %2605 = vmatprep.subr.mxu0 0.0
    %2606 = vmatpush2.msra.mxu0 0.0
    %2607 = vmatprep.subr.mxu0 0.0
    %2608 = vmatpush2.msra.mxu0 0.0
    %2609 = vmatprep.subr.mxu0 0.0
    %2610 = vmatpush2.msra.mxu0 0.0
    %2611 = vmatprep.subr.mxu0 0.0
    %2612 = vmatpush2.msra.mxu0 0.0
    %2613 = vmatprep.subr.mxu0 0.0
    %2614 = vmatpush2.msra.mxu0 0.0
    %2615 = vmatprep.subr.mxu0 0.0
    %2616 = vmatpush2.msra.mxu0 0.0
    %2617 = vmatprep.subr.mxu0 0.0
    %2618 = vmatpush2.msra.mxu0 0.0
    %2619 = vmatprep.subr.mxu0 0.0
    %2620 = vmatpush2.msra.mxu0 0.0
    %2621 = vmatprep.subr.mxu0 0.0
    %2622 = vmatpush2.msra.mxu0 0.0
    %2623 = vmatprep.subr.mxu0 0.0
    %2624 = vmatpush2.msra.mxu0 0.0
    %2625 = vmatprep.subr.mxu0 0.0
    %2626 = vmatpush2.msra.mxu0 0.0
    %2627 = vmatprep.subr.mxu0 0.0
    %2628 = vmatpush2.msra.mxu0 0.0
    %2629 = vmatprep.subr.mxu0 0.0
    %2630 = vmatpush2.msra.mxu0 0.0
    %2631 = vmatprep.mubr.f32.mxu0 0.0
    %2632 = vmatmul.mubr.f32.gmra.mxu0 %v2543
    %v2633 = vpop.f32.mrf.mxu0
    %v2634 = vadd.f32 %v2565, %v2633
    %v2635 = vpop.f32.mrf.mxu0
    %2636 = vdwg.mxu0
    %2637 = vst [vmem:[%s14] sm:$0xff] %v2634
    // Predicated region
    $region86: #{actor_critic_forward.1} parent=1 // pred_check
      _
    $region87: #{actor_critic_forward.1} parent=1 // pred_check_branch
      %2639 = sbr.rel (0) target = $region89
    $region88: #{actor_critic_forward.1} parent=1 // pred_region
      _
    $region89: #{actor_critic_forward.1} parent=1 // pred_fallthru
      _
    // Predicated region
    $region90: #{actor_critic_forward.1} parent=1 // pred_check
      _
    $region91: #{actor_critic_forward.1} parent=1 // pred_check_branch
      %2641 = sbr.rel (0) target = $region93
    $region92: #{actor_critic_forward.1} parent=1 // pred_region
      _
    $region93: #{actor_critic_forward.1} parent=1 // pred_fallthru
      _
    // Predicated region
    $region94: #{actor_critic_forward.1} parent=1 // pred_check
      _
    $region95: #{actor_critic_forward.1} parent=1 // pred_check_branch
      %2643 = sbr.rel (0) target = $region97
    $region96: #{actor_critic_forward.1} parent=1 // pred_region
      _
    $region97: #{actor_critic_forward.1} parent=1 // pred_fallthru
      _
    // Predicated region
    $region98: #{actor_critic_forward.1} parent=1 // pred_check
      _
    $region99: #{actor_critic_forward.1} parent=1 // pred_check_branch
      %2645 = sbr.rel (0) target = $region101
    $region100: #{actor_critic_forward.1} parent=1 // pred_region
      _
    $region101: #{actor_critic_forward.1} parent=1 // pred_fallthru
      _
    %2646 = vsyncpa [#allocation4], 1
    %2647 = vsyncpa [#allocation6], 1
    %2648 = vsyncpa [#allocation9], 1
    %2649 = vsyncpa [#allocation12], 1

</llo_original>
